<compile_context>
chip_gen: v7x
topology: tpu7x:2x2x1
jax: 0.10.0
libtpu: 0.0.40
codegen_flags: <defaults>
</compile_context>

<pallas_src>
import jax
import jax.numpy as jnp
from jax import lax
from jax.experimental import pallas as pl
from jax.experimental.pallas import tpu as pltpu

NUM_GROUPS = 5          # nn.GroupNorm(5, hidden_size)
GN_EPS = 1e-5           # torch GroupNorm default eps
GAMMA = 1.0 - 2.0 ** (-5)


def _round_up(x, m):
    return (x + m - 1) // m * m


def _auto_kmol(n_mol, b_size, target_rows=512):
    """Largest divisor of n_mol with kmol*b_size <= ~512 rows per block.

    512-1024 rows amortizes per-grid-step overhead; VMEM is nowhere near a
    constraint at these sizes (keep blocks well under ~40 MiB for v7x's
    64 MiB VMEM if this is ever raised)."""
    cap = max(target_rows // b_size, 1)
    best = 1
    for c in range(1, min(n_mol, cap) + 1):
        if n_mol % c == 0:
            best = c
    return best


def _make_kernel(kmol, b_size, hidden, gamma):
    n = b_size                       # bonds per molecule (== hidden, see header)
    d = hidden                       # ret_size (num_heads == 1)
    R = kmol * n                     # rows per grid block
    gs = n // NUM_GROUPS             # rows per GroupNorm group
    scale = d ** (-0.5)
    g_n = gamma ** n                 # per-molecule decay of the retention state
    P = _round_up(hidden, 128)       # lane-padded segment width of fused W_qkv
    inv_cnt = 1.0 / float(gs * hidden)

    def kernel(gamma_ref, msg_ref, wqkv_ref, wr_ref, wo_ref, wob_ref,
               alpha_ref, beta_ref, gnw_ref, gnb_ref, sel_ref, selT_ref,
               gm_ref, out_ref, r_ref, kv_ref, q_ref, v_ref):
        blk = pl.program_id(0)

        # r starts as scalar 0 in torch; zero the carried state on block 0.
        @pl.when(blk == 0)
        def _():
            r_ref[...] = jnp.zeros_like(r_ref)

        # ---- one fused, lane-padded QKV projection: (R,H) @ (H,3P) ----------
        cur = msg_ref[...]                                        # (R, H)
        qkv = jnp.dot(cur, wqkv_ref[...], preferred_element_type=jnp.float32)
        q = qkv[:, 0:d]                 # tile-aligned segment starts -> cheap
        k = qkv[:, P:P + d]
        v = qkv[:, 2 * P:2 * P + d]

        # ---- batched per-molecule statistics (off the serial scan path) -----
        aw = q * (alpha_ref[...] * scale)
        aw = jnp.exp(aw - jnp.max(aw, axis=-1, keepdims=True))
        aw = aw * pl.reciprocal(jnp.sum(aw, axis=-1, keepdims=True), approx=True)

        sel = sel_ref[...]                                        # (kmol, R)
        gq = jnp.dot(sel, aw * q, preferred_element_type=jnp.float32)   # (kmol,d)
        ksum = jnp.dot(sel, k, preferred_element_type=jnp.float32)
        ksqsum = jnp.dot(sel, k * k, preferred_element_type=jnp.float32)
        beta_s = beta_ref[...] * scale                            # (1, d)
        s1 = gq * ksum                 # Sum_rows p      (p = gq_bcast * k)
        s2 = gq * gq * ksqsum          # Sum_rows p*p

        # per-molecule K_i @ V_i, batched (kmol tiny matmuls, not on the scan)
        k3 = k.reshape(kmol, n, d)
        v3 = v.reshape(kmol, n, d)
        kv_ref[...] = jnp.einsum('mac,mcb->mab', k3, v3,
                                 preferred_element_type=jnp.float32)

        # stage q / v so they are not live (spilled) across the scan loop
        q_ref[...] = q
        v_ref[...] = v

        # gq in column layout so gq_i @ r is a broadcast-mul + sublane reduce
        gqT = gq.T                                                # (d, kmol)
        lane_ids = lax.broadcasted_iota(jnp.int32, (d, kmol), 1)
        row_ids = lax.broadcasted_iota(jnp.int32, (kmol, 1), 0)

        # ---- the only serial part: retention scan over this block's molecules
        def scan_body(j, carry):
            r, c_all = carry
            r = kv_ref[j] + g_n * r                               # (d, d)
            gq_col = jnp.sum(jnp.where(lane_ids == j, gqT, 0.0),
                             axis=1, keepdims=True)               # (d, 1)
            corr = jnp.sum(gq_col * r, axis=0, keepdims=True)     # == gq_j @ r
            gi = gamma_ref[blk * kmol + j]                        # gamma**(i+1)
            c_all = c_all + (row_ids == j).astype(jnp.float32) * (corr * gi)
            return r, c_all

        r_fin, c_all = lax.fori_loop(
            0, kmol, scan_body,
            (r_ref[...], jnp.zeros((kmol, d), jnp.float32)),
            unroll=True)
        r_ref[...] = r_fin

        # ---- batched epilogue ------------------------------------------------
        gk = s2 * beta_s + c_all * s1                             # (kmol, d)
        gk_rows = jnp.dot(selT_ref[...], gk,
                          preferred_element_type=jnp.float32)     # (R, d)
        kvi = v_ref[...] * gk_rows                                # 'hd,hnd->hnd'
        kvi_out = jnp.dot(kvi, wr_ref[...], preferred_element_type=jnp.float32)
        ret = jnp.maximum(kvi_out + q_ref[...], 0.0)     # ReLU; dropout = id
        ret = jnp.dot(ret, wo_ref[...], preferred_element_type=jnp.float32) \
            + wob_ref[...]                                        # (R, H)

        # GroupNorm(5, hidden): each group = gs consecutive bond rows x hidden.
        # Single pass: 2 lane reductions + indicator matmul + 1 block store.
        rowsum = jnp.sum(ret, axis=-1, keepdims=True)             # (R, 1)
        rowsq = jnp.sum(ret * ret, axis=-1, keepdims=True)        # (R, 1)
        gm = gm_ref[...]                                          # (R, R)
        mean = jnp.dot(gm, rowsum, preferred_element_type=jnp.float32) * inv_cnt
        ex2 = jnp.dot(gm, rowsq, preferred_element_type=jnp.float32) * inv_cnt
        rstd = lax.rsqrt(ex2 - mean * mean + GN_EPS)
        out_ref[...] = (ret - mean) * rstd * gnw_ref[...] + gnb_ref[...]

    return kernel


def multi_bond_fast_retention(message, params, b_size, num_heads=1,
                              gamma=GAMMA, kmol=None, vmem_limit_bytes=None):
    """Returns the (total_bonds, hidden) retention output.

    The cached_zero_vector row is NOT prepended here (it would cost a full
    extra HBM pass); use prepend_cached_zero_vector() if the exact torch
    output layout is required."""
    total, hidden = message.shape
    assert total % b_size == 0
    n_mol = total // b_size
    d = hidden // num_heads
    # constraints imposed by the torch forward itself (see header note)
    assert num_heads == 1 and d == b_size == hidden and hidden % NUM_GROUPS == 0

    if kmol is None:
        kmol = _auto_kmol(n_mol, b_size)
    assert n_mol % kmol == 0, (n_mol, kmol)
    n_blocks = n_mol // kmol
    R = kmol * b_size

    kernel = _make_kernel(kmol, b_size, hidden, gamma)
    P = _round_up(hidden, 128)
    f32 = jnp.float32

    # gamma**(i+1) per (global) molecule, read from SMEM inside the kernel
    gamma_pows = jnp.asarray([gamma ** (i + 1) for i in range(n_mol)], dtype=f32)

    # fused, lane-padded [W_q^T | W_k^T | W_v^T]
    wqkv = jnp.zeros((hidden, 3 * P), f32)
    wqkv = wqkv.at[:, 0:hidden].set(params['W_q'].T.astype(f32))
    wqkv = wqkv.at[:, P:P + hidden].set(params['W_k'].T.astype(f32))
    wqkv = wqkv.at[:, 2 * P:2 * P + hidden].set(params['W_v'].T.astype(f32))

    wr_t = params['W_r'].T.astype(f32)
    wo_t = params['W_o'].T.astype(f32)
    wo_b = params['b_o'].reshape(1, hidden).astype(f32)
    alpha = params['alpha'].reshape(1, d).astype(f32)
    beta = params['beta'].reshape(1, d).astype(f32)
    # GroupNorm affine acts along the bond-row (channel) axis; tile per block
    gn_w = jnp.tile(params['gn_w'].reshape(b_size, 1).astype(f32), (kmol, 1))
    gn_b = jnp.tile(params['gn_b'].reshape(b_size, 1).astype(f32), (kmol, 1))

    # indicator matrices (constant across grid steps -> fetched once)
    rows = jnp.arange(R, dtype=jnp.int32)
    mol_of_row = rows // b_size
    sel = (jnp.arange(kmol, dtype=jnp.int32)[:, None] == mol_of_row[None, :]
           ).astype(f32)                                          # (kmol, R)
    selT = sel.T                                                  # (R, kmol)
    grp_of_row = rows // (b_size // NUM_GROUPS)
    gm = (grp_of_row[:, None] == grp_of_row[None, :]).astype(f32)  # (R, R)

    def const(shape):
        return pl.BlockSpec(shape, lambda i: (0, 0))

    out = pl.pallas_call(
        kernel,
        out_shape=jax.ShapeDtypeStruct((total, hidden), f32),
        grid=(n_blocks,),
        in_specs=[
            pl.BlockSpec(memory_space=pltpu.MemorySpace.SMEM),    # gamma powers
            pl.BlockSpec((R, hidden), lambda i: (i, 0)),          # message block
            const((hidden, 3 * P)),                               # fused W_qkv^T
            const((d, d)),                                        # W_r^T
            const((hidden, hidden)),                              # W_o^T
            const((1, hidden)),                                   # b_o
            const((1, d)),                                        # weight_alpha
            const((1, d)),                                        # weight_beta
            const((R, 1)),                                        # GroupNorm w
            const((R, 1)),                                        # GroupNorm b
            const((kmol, R)),                                     # molecule mask
            const((R, kmol)),                                     # its transpose
            const((R, R)),                                        # group mask
        ],
        out_specs=pl.BlockSpec((R, hidden), lambda i: (i, 0)),
        scratch_shapes=[
            pltpu.VMEM((d, d), f32),          # carried retention state r
            pltpu.VMEM((kmol, d, d), f32),    # per-molecule K_i @ V_i
            pltpu.VMEM((R, d), f32),          # staged q (not live across scan)
            pltpu.VMEM((R, d), f32),          # staged v
        ],
        compiler_params=pltpu.CompilerParams(
            dimension_semantics=("arbitrary",),   # r is carried block -> block
            vmem_limit_bytes=vmem_limit_bytes),
    )(gamma_pows, message.astype(f32), wqkv, wr_t, wo_t, wo_b,
      alpha, beta, gn_w, gn_b, sel, selT, gm)
    return out


def prepend_cached_zero_vector(bond_vecs):
    """Torch output layout (cached_zero_vector row first).  Costs one extra
    HBM pass; performance-critical callers should keep the zero row implicit."""
    zero = jnp.zeros((1, bond_vecs.shape[1]), bond_vecs.dtype)
    return jnp.concatenate([zero, bond_vecs], axis=0)


def reference_forward(message, params, b_scope, num_heads, gamma):
    """Line-by-line JAX port of the torch forward (eval mode, ReLU)."""
    hidden = message.shape[1]
    d = hidden // num_heads
    scale = d ** (-0.5)
    outs = [jnp.zeros((1, hidden), jnp.float32)]
    r = jnp.zeros((num_heads, d, d), jnp.float32)
    for i, (b_start, b_size) in enumerate(b_scope):
        cur = message[b_start:b_start + b_size]
        n = b_size
        bq = (cur @ params['W_q'].T).reshape(n, num_heads, d).transpose(1, 0, 2)
        bk = (cur @ params['W_k'].T).reshape(n, num_heads, d).transpose(1, 0, 2)
        bv = (cur @ params['W_v'].T).reshape(n, num_heads, d).transpose(1, 0, 2)
        aw = jax.nn.softmax(bq * params['alpha'] * scale, axis=-1)
        gq = jnp.sum(aw * bq, axis=1)                              # (h, d)
        rep = jnp.broadcast_to(gq[:, None, :], (num_heads, n, d))
        p = rep * bk
        bw = p * params['beta'] * scale
        r = jnp.matmul(bk, bv) + gamma ** b_size * r
        bw = bw + jnp.matmul(rep, r) * gamma ** (i + 1)
        gk = jnp.sum(bw * p, axis=1)
        kvi = gk[:, None, :] * bv
        kvi_out = kvi @ params['W_r'].T
        ret = jax.nn.relu(kvi_out + bq)
        ret = ret.transpose(1, 0, 2).reshape(n, num_heads * d)
        ret = ret @ params['W_o'].T + params['b_o']
        gs = n // NUM_GROUPS
        xg = ret.reshape(NUM_GROUPS, gs * hidden)
        mean = xg.mean(axis=1, keepdims=True)
        var = ((xg - mean) ** 2).mean(axis=1, keepdims=True)
        xhat = ((xg - mean) / jnp.sqrt(var + GN_EPS)).reshape(n, hidden)
        outs.append(xhat * params['gn_w'][:, None] + params['gn_b'][:, None])
    return jnp.concatenate(outs, axis=0)


if __name__ == "__main__":
    H = 40            # hidden_size (divisible by 5 for GroupNorm)
    NUM_HEADS = 1     # forced by torch forward's shape constraints
    N_BONDS = H       # bonds per molecule == ret_size == hidden_size

    key = jax.random.PRNGKey(0)
    ks = jax.random.split(key, 11)
    params = {
        'W_q': 0.2 * jax.random.normal(ks[0], (H, H), jnp.float32),
        'W_k': 0.2 * jax.random.normal(ks[1], (H, H), jnp.float32),
        'W_v': 0.2 * jax.random.normal(ks[2], (H, H), jnp.float32),
        'W_r': 0.2 * jax.random.normal(ks[3], (H, H), jnp.float32),
        'W_o': 0.2 * jax.random.normal(ks[4], (H, H), jnp.float32),
        'b_o': 0.1 * jax.random.normal(ks[5], (H,), jnp.float32),
        'alpha': jax.random.normal(ks[6], (H,), jnp.float32),
        'beta': jax.random.normal(ks[7], (H,), jnp.float32),
        'gn_w': 1.0 + 0.1 * jax.random.normal(ks[9], (H,), jnp.float32),
        'gn_b': 0.1 * jax.random.normal(ks[10], (H,), jnp.float32),
    }

    # config A: 6 molecules, 2 per block -> 3 grid steps (exercises the carry)
    # config B: 5 molecules, auto KMOL (=5) -> a single batched block
    for n_mol, kmol in ((6, 2), (5, None)):
        msg_key = jax.random.fold_in(ks[8], n_mol)
        message = 0.5 * jax.random.normal(msg_key, (n_mol * N_BONDS, H),
                                          jnp.float32)
        b_scope = [(i * N_BONDS, N_BONDS) for i in range(n_mol)]

        out = multi_bond_fast_retention(message, params, b_size=N_BONDS,
                                        num_heads=NUM_HEADS, kmol=kmol)
        out = jax.block_until_ready(out)
        full = prepend_cached_zero_vector(out)    # torch output layout

        ref = reference_forward(message, params, b_scope, NUM_HEADS, GAMMA)
        assert full.shape == (1 + n_mol * N_BONDS, H)
        assert bool(jnp.all(jnp.isfinite(full)))
        err = float(jnp.max(jnp.abs(full - ref)))
        assert jnp.allclose(full, ref, atol=1e-2, rtol=1e-2), err

    print("KERNEL_OK")
</pallas_src>

<mosaic_0001>
module attributes {stable_mosaic.version = 11 : i64} {
  func.func @kernel(%arg0: i32, %arg1: memref<6xf32, #tpu.memory_space<smem>>, %arg2: memref<80x40xf32, #tpu.memory_space<vmem>>, %arg3: memref<40x384xf32, #tpu.memory_space<vmem>>, %arg4: memref<40x40xf32, #tpu.memory_space<vmem>>, %arg5: memref<40x40xf32, #tpu.memory_space<vmem>>, %arg6: memref<1x40xf32, #tpu.memory_space<vmem>>, %arg7: memref<1x40xf32, #tpu.memory_space<vmem>>, %arg8: memref<1x40xf32, #tpu.memory_space<vmem>>, %arg9: memref<80x1xf32, #tpu.memory_space<vmem>>, %arg10: memref<80x1xf32, #tpu.memory_space<vmem>>, %arg11: memref<2x80xf32, #tpu.memory_space<vmem>>, %arg12: memref<80x2xf32, #tpu.memory_space<vmem>>, %arg13: memref<80x80xf32, #tpu.memory_space<vmem>>, %arg14: memref<80x40xf32, #tpu.memory_space<vmem>>, %arg15: memref<40x40xf32, #tpu.memory_space<vmem>>, %arg16: memref<2x40x40xf32, #tpu.memory_space<vmem>>, %arg17: memref<80x40xf32, #tpu.memory_space<vmem>>, %arg18: memref<80x40xf32, #tpu.memory_space<vmem>>) attributes {dimension_semantics = [#tpu.dimension_semantics<arbitrary>], iteration_bounds = array<i64: 3>, scalar_prefetch = 0 : i64, scratch_operands = 4 : i64, tpu.core_type = #tpu.core_type<tc>, window_params = [{transform_indices = @transform_0, window_bounds = array<i64: 6>}, {transform_indices = @transform_1, window_bounds = array<i64: 80, 40>}, {pipeline_mode = #tpu.pipeline_mode<synchronous>, transform_indices = @transform_2, window_bounds = array<i64: 40, 384>}, {pipeline_mode = #tpu.pipeline_mode<synchronous>, transform_indices = @transform_3, window_bounds = array<i64: 40, 40>}, {pipeline_mode = #tpu.pipeline_mode<synchronous>, transform_indices = @transform_4, window_bounds = array<i64: 40, 40>}, {pipeline_mode = #tpu.pipeline_mode<synchronous>, transform_indices = @transform_5, window_bounds = array<i64: 1, 40>}, {pipeline_mode = #tpu.pipeline_mode<synchronous>, transform_indices = @transform_6, window_bounds = array<i64: 1, 40>}, {pipeline_mode = #tpu.pipeline_mode<synchronous>, transform_indices = @transform_7, window_bounds = array<i64: 1, 40>}, {pipeline_mode = #tpu.pipeline_mode<synchronous>, transform_indices = @transform_8, window_bounds = array<i64: 80, 1>}, {pipeline_mode = #tpu.pipeline_mode<synchronous>, transform_indices = @transform_9, window_bounds = array<i64: 80, 1>}, {pipeline_mode = #tpu.pipeline_mode<synchronous>, transform_indices = @transform_10, window_bounds = array<i64: 2, 80>}, {pipeline_mode = #tpu.pipeline_mode<synchronous>, transform_indices = @transform_11, window_bounds = array<i64: 80, 2>}, {pipeline_mode = #tpu.pipeline_mode<synchronous>, transform_indices = @transform_12, window_bounds = array<i64: 80, 80>}, {transform_indices = @transform_13, window_bounds = array<i64: 80, 40>}]} {
    %c0_i32 = arith.constant 0 : i32
    %0 = arith.cmpi eq, %arg0, %c0_i32 : i32
    %1 = arith.extui %0 : i1 to i32
    %c0_i32_0 = arith.constant 0 : i32
    %2 = arith.cmpi ne, %1, %c0_i32_0 : i32
    scf.if %2 {
      %cst_76 = arith.constant 0.000000e+00 : f32
      %155 = vector.broadcast %cst_76 : f32 to vector<40x40xf32>
      %c0_77 = arith.constant 0 : index
      %c0_78 = arith.constant 0 : index
      %156 = vector.load %arg15[%c0_77, %c0_78] : memref<40x40xf32, #tpu.memory_space<vmem>>, vector<40x40xf32>
      tpu.vector_store %arg15[%c0_77, %c0_78], %155 {strides = array<i32>} : memref<40x40xf32, #tpu.memory_space<vmem>>, vector<40x40xf32>,
    } else {
    }
    %c0 = arith.constant 0 : index
    %c0_1 = arith.constant 0 : index
    %3 = vector.load %arg2[%c0, %c0_1] : memref<80x40xf32, #tpu.memory_space<vmem>>, vector<80x40xf32>
    %c0_2 = arith.constant 0 : index
    %c0_3 = arith.constant 0 : index
    %4 = vector.load %arg3[%c0_2, %c0_3] : memref<40x384xf32, #tpu.memory_space<vmem>>, vector<40x384xf32>
    %cst = arith.constant dense<0.000000e+00> : vector<80x384xf32>
    %5 = tpu.matmul %3, %4, %cst {dimension_numbers = #tpu.dot_dimension_numbers<[1], [0], [0], [1], [0, 0, 1, 1], [], []>} : vector<80x40xf32>, vector<40x384xf32>, vector<80x384xf32> -> vector<80x384xf32>
    %6 = vector.extract_strided_slice %5 {offsets = [0, 0], sizes = [80, 40], strides = [1, 1]} : vector<80x384xf32> to vector<80x40xf32>
    %7 = vector.extract_strided_slice %5 {offsets = [0, 128], sizes = [80, 40], strides = [1, 1]} : vector<80x384xf32> to vector<80x40xf32>
    %8 = vector.extract_strided_slice %5 {offsets = [0, 256], sizes = [80, 40], strides = [1, 1]} : vector<80x384xf32> to vector<80x40xf32>
    %c0_4 = arith.constant 0 : index
    %c0_5 = arith.constant 0 : index
    %9 = vector.load %arg7[%c0_4, %c0_5] : memref<1x40xf32, #tpu.memory_space<vmem>>, vector<1x40xf32>
    %cst_6 = arith.constant 0.158113882 : f32
    %10 = vector.broadcast %cst_6 : f32 to vector<1x40xf32>
    %11 = arith.mulf %9, %10 : vector<1x40xf32>
    %12 = vector.broadcast %11 : vector<1x40xf32> to vector<80x40xf32>
    %13 = arith.mulf %6, %12 : vector<80x40xf32>
    %cst_7 = arith.constant dense<0xFF800000> : vector<80xf32>
    %14 = vector.multi_reduction <maximumf>, %13, %cst_7 [1] : vector<80x40xf32> to vector<80xf32>
    %15 = vector.shape_cast %14 : vector<80xf32> to vector<80x1xf32>
    %16 = vector.broadcast %15 : vector<80x1xf32> to vector<80x40xf32>
    %17 = arith.subf %13, %16 : vector<80x40xf32>
    %18 = math.exp %17 : vector<80x40xf32>
    %cst_8 = arith.constant dense<0.000000e+00> : vector<80xf32>
    %19 = vector.multi_reduction <add>, %18, %cst_8 [1] : vector<80x40xf32> to vector<80xf32>
    %20 = vector.shape_cast %19 : vector<80xf32> to vector<80x1xf32>
    %21 = tpu.reciprocal %20 {approx = true} : vector<80x1xf32> -> vector<80x1xf32>
    %22 = vector.broadcast %21 : vector<80x1xf32> to vector<80x40xf32>
    %23 = arith.mulf %18, %22 : vector<80x40xf32>
    %c0_9 = arith.constant 0 : index
    %c0_10 = arith.constant 0 : index
    %24 = vector.load %arg11[%c0_9, %c0_10] : memref<2x80xf32, #tpu.memory_space<vmem>>, vector<2x80xf32>
    %25 = arith.mulf %23, %6 : vector<80x40xf32>
    %cst_11 = arith.constant dense<0.000000e+00> : vector<2x40xf32>
    %26 = tpu.matmul %24, %25, %cst_11 {dimension_numbers = #tpu.dot_dimension_numbers<[1], [0], [0], [1], [0, 0, 1, 1], [], []>} : vector<2x80xf32>, vector<80x40xf32>, vector<2x40xf32> -> vector<2x40xf32>
    %cst_12 = arith.constant dense<0.000000e+00> : vector<2x40xf32>
    %27 = tpu.matmul %24, %7, %cst_12 {dimension_numbers = #tpu.dot_dimension_numbers<[1], [0], [0], [1], [0, 0, 1, 1], [], []>} : vector<2x80xf32>, vector<80x40xf32>, vector<2x40xf32> -> vector<2x40xf32>
    %28 = arith.mulf %7, %7 : vector<80x40xf32>
    %cst_13 = arith.constant dense<0.000000e+00> : vector<2x40xf32>
    %29 = tpu.matmul %24, %28, %cst_13 {dimension_numbers = #tpu.dot_dimension_numbers<[1], [0], [0], [1], [0, 0, 1, 1], [], []>} : vector<2x80xf32>, vector<80x40xf32>, vector<2x40xf32> -> vector<2x40xf32>
    %c0_14 = arith.constant 0 : index
    %c0_15 = arith.constant 0 : index
    %30 = vector.load %arg8[%c0_14, %c0_15] : memref<1x40xf32, #tpu.memory_space<vmem>>, vector<1x40xf32>
    %cst_16 = arith.constant 0.158113882 : f32
    %31 = vector.broadcast %cst_16 : f32 to vector<1x40xf32>
    %32 = arith.mulf %30, %31 : vector<1x40xf32>
    %33 = arith.mulf %26, %27 : vector<2x40xf32>
    %34 = arith.mulf %26, %26 : vector<2x40xf32>
    %35 = arith.mulf %34, %29 : vector<2x40xf32>
    %36 = vector.shape_cast %7 : vector<80x40xf32> to vector<2x40x40xf32>
    %37 = vector.shape_cast %8 : vector<80x40xf32> to vector<2x40x40xf32>
    "tpu.trace_start"() <{level = 10 : i32, message = "mac,mcb->mab"}> : () -> ()
    %cst_17 = arith.constant dense<0.000000e+00> : vector<2x40x40xf32>
    %38 = tpu.matmul %36, %37, %cst_17 {dimension_numbers = #tpu.dot_dimension_numbers<[2], [1], [1], [2], [0, 0, 0, 1, 1, 2], [0], [0]>} : vector<2x40x40xf32>, vector<2x40x40xf32>, vector<2x40x40xf32> -> vector<2x40x40xf32>
    "tpu.trace_stop"() : () -> ()
    %c0_18 = arith.constant 0 : index
    %c0_19 = arith.constant 0 : index
    %c0_20 = arith.constant 0 : index
    %39 = vector.load %arg16[%c0_18, %c0_19, %c0_20] : memref<2x40x40xf32, #tpu.memory_space<vmem>>, vector<2x40x40xf32>
    tpu.vector_store %arg16[%c0_18, %c0_19, %c0_20], %38 {strides = array<i32>} : memref<2x40x40xf32, #tpu.memory_space<vmem>>, vector<2x40x40xf32>,
    %c0_21 = arith.constant 0 : index
    %c0_22 = arith.constant 0 : index
    %40 = vector.load %arg17[%c0_21, %c0_22] : memref<80x40xf32, #tpu.memory_space<vmem>>, vector<80x40xf32>
    tpu.vector_store %arg17[%c0_21, %c0_22], %6 {strides = array<i32>} : memref<80x40xf32, #tpu.memory_space<vmem>>, vector<80x40xf32>,
    %c0_23 = arith.constant 0 : index
    %c0_24 = arith.constant 0 : index
    %41 = vector.load %arg18[%c0_23, %c0_24] : memref<80x40xf32, #tpu.memory_space<vmem>>, vector<80x40xf32>
    tpu.vector_store %arg18[%c0_23, %c0_24], %8 {strides = array<i32>} : memref<80x40xf32, #tpu.memory_space<vmem>>, vector<80x40xf32>,
    %42 = tpu.transpose %26, [1, 0] : vector<2x40xf32> -> vector<40x2xf32>
    %43 = tpu.iota {dimensions = array<i32: 1>} : vector<40x2xi32>
    %44 = tpu.iota {dimensions = array<i32: 0>} : vector<2x1xi32>
    %c0_25 = arith.constant 0 : index
    %c0_26 = arith.constant 0 : index
    %45 = vector.load %arg15[%c0_25, %c0_26] : memref<40x40xf32, #tpu.memory_space<vmem>>, vector<40x40xf32>
    %cst_27 = arith.constant 0.000000e+00 : f32
    %46 = vector.broadcast %cst_27 : f32 to vector<2x40xf32>
    %c0_i32_28 = arith.constant 0 : i32
    %47 = arith.index_cast %c0_i32_28 : i32 to index
    %c0_29 = arith.constant 0 : index
    %c0_30 = arith.constant 0 : index
    %48 = vector.load %arg16[%47, %c0_29, %c0_30] : memref<2x40x40xf32, #tpu.memory_space<vmem>>, vector<1x40x40xf32>
    %49 = vector.shape_cast %48 : vector<1x40x40xf32> to vector<40x40xf32>
    %cst_31 = arith.constant 0.280846238 : f32
    %50 = vector.broadcast %cst_31 : f32 to vector<40x40xf32>
    %51 = arith.mulf %50, %45 : vector<40x40xf32>
    %52 = arith.addf %49, %51 : vector<40x40xf32>
    %53 = vector.broadcast %c0_i32_28 : i32 to vector<40x2xi32>
    %54 = arith.cmpi eq, %43, %53 : vector<40x2xi32>
    %cst_32 = arith.constant 0.000000e+00 : f32
    %55 = vector.broadcast %cst_32 : f32 to vector<40x2xf32>
    %56 = arith.select %54, %42, %55 : vector<40x2xi1>, vector<40x2xf32>
    %cst_33 = arith.constant dense<0.000000e+00> : vector<40xf32>
    %57 = vector.multi_reduction <add>, %56, %cst_33 [1] : vector<40x2xf32> to vector<40xf32>
    %58 = vector.shape_cast %57 : vector<40xf32> to vector<40x1xf32>
    %59 = vector.broadcast %58 : vector<40x1xf32> to vector<40x40xf32>
    %60 = arith.mulf %59, %52 : vector<40x40xf32>
    %cst_34 = arith.constant dense<0.000000e+00> : vector<40xf32>
    %61 = vector.multi_reduction <add>, %60, %cst_34 [0] : vector<40x40xf32> to vector<40xf32>
    %62 = vector.shape_cast %61 : vector<40xf32> to vector<1x40xf32>
    %c2_i32 = arith.constant 2 : i32
    %63 = arith.muli %arg0, %c2_i32 : i32
    %64 = arith.addi %63, %c0_i32_28 : i32
    %65 = arith.index_cast %64 : i32 to index
    %66 = memref.load %arg1[%65] : memref<6xf32, #tpu.memory_space<smem>>
    %67 = vector.broadcast %c0_i32_28 : i32 to vector<2x1xi32>
    %68 = arith.cmpi eq, %44, %67 : vector<2x1xi32>
    %69 = arith.extui %68 : vector<2x1xi1> to vector<2x1xi32>
    %70 = arith.sitofp %69 : vector<2x1xi32> to vector<2x1xf32>
    %71 = vector.broadcast %66 : f32 to vector<1x40xf32>
    %72 = arith.mulf %62, %71 : vector<1x40xf32>
    %73 = vector.broadcast %70 : vector<2x1xf32> to vector<2x40xf32>
    %74 = vector.broadcast %72 : vector<1x40xf32> to vector<2x40xf32>
    %75 = arith.mulf %73, %74 : vector<2x40xf32>
    %76 = arith.addf %46, %75 : vector<2x40xf32>
    %c1_i32 = arith.constant 1 : i32
    %77 = arith.index_cast %c1_i32 : i32 to index
    %c0_35 = arith.constant 0 : index
    %c0_36 = arith.constant 0 : index
    %78 = vector.load %arg16[%77, %c0_35, %c0_36] : memref<2x40x40xf32, #tpu.memory_space<vmem>>, vector<1x40x40xf32>
    %79 = vector.shape_cast %78 : vector<1x40x40xf32> to vector<40x40xf32>
    %cst_37 = arith.constant 0.280846238 : f32
    %80 = vector.broadcast %cst_37 : f32 to vector<40x40xf32>
    %81 = arith.mulf %80, %52 : vector<40x40xf32>
    %82 = arith.addf %79, %81 : vector<40x40xf32>
    %83 = vector.broadcast %c1_i32 : i32 to vector<40x2xi32>
    %84 = arith.cmpi eq, %43, %83 : vector<40x2xi32>
    %cst_38 = arith.constant 0.000000e+00 : f32
    %85 = vector.broadcast %cst_38 : f32 to vector<40x2xf32>
    %86 = arith.select %84, %42, %85 : vector<40x2xi1>, vector<40x2xf32>
    %cst_39 = arith.constant dense<0.000000e+00> : vector<40xf32>
    %87 = vector.multi_reduction <add>, %86, %cst_39 [1] : vector<40x2xf32> to vector<40xf32>
    %88 = vector.shape_cast %87 : vector<40xf32> to vector<40x1xf32>
    %89 = vector.broadcast %88 : vector<40x1xf32> to vector<40x40xf32>
    %90 = arith.mulf %89, %82 : vector<40x40xf32>
    %cst_40 = arith.constant dense<0.000000e+00> : vector<40xf32>
    %91 = vector.multi_reduction <add>, %90, %cst_40 [0] : vector<40x40xf32> to vector<40xf32>
    %92 = vector.shape_cast %91 : vector<40xf32> to vector<1x40xf32>
    %c2_i32_41 = arith.constant 2 : i32
    %93 = arith.muli %arg0, %c2_i32_41 : i32
    %94 = arith.addi %93, %c1_i32 : i32
    %95 = arith.index_cast %94 : i32 to index
    %96 = memref.load %arg1[%95] : memref<6xf32, #tpu.memory_space<smem>>
    %97 = vector.broadcast %c1_i32 : i32 to vector<2x1xi32>
    %98 = arith.cmpi eq, %44, %97 : vector<2x1xi32>
    %99 = arith.extui %98 : vector<2x1xi1> to vector<2x1xi32>
    %100 = arith.sitofp %99 : vector<2x1xi32> to vector<2x1xf32>
    %101 = vector.broadcast %96 : f32 to vector<1x40xf32>
    %102 = arith.mulf %92, %101 : vector<1x40xf32>
    %103 = vector.broadcast %100 : vector<2x1xf32> to vector<2x40xf32>
    %104 = vector.broadcast %102 : vector<1x40xf32> to vector<2x40xf32>
    %105 = arith.mulf %103, %104 : vector<2x40xf32>
    %106 = arith.addf %76, %105 : vector<2x40xf32>
    %c2_i32_42 = arith.constant 2 : i32
    %c0_43 = arith.constant 0 : index
    %c0_44 = arith.constant 0 : index
    %107 = vector.load %arg15[%c0_43, %c0_44] : memref<40x40xf32, #tpu.memory_space<vmem>>, vector<40x40xf32>
    tpu.vector_store %arg15[%c0_43, %c0_44], %82 {strides = array<i32>} : memref<40x40xf32, #tpu.memory_space<vmem>>, vector<40x40xf32>,
    %108 = vector.broadcast %32 : vector<1x40xf32> to vector<2x40xf32>
    %109 = arith.mulf %35, %108 : vector<2x40xf32>
    %110 = arith.mulf %106, %33 : vector<2x40xf32>
    %111 = arith.addf %109, %110 : vector<2x40xf32>
    %c0_45 = arith.constant 0 : index
    %c0_46 = arith.constant 0 : index
    %112 = vector.load %arg12[%c0_45, %c0_46] : memref<80x2xf32, #tpu.memory_space<vmem>>, vector<80x2xf32>
    %cst_47 = arith.constant dense<0.000000e+00> : vector<80x40xf32>
    %113 = tpu.matmul %112, %111, %cst_47 {dimension_numbers = #tpu.dot_dimension_numbers<[1], [0], [0], [1], [0, 0, 1, 1], [], []>} : vector<80x2xf32>, vector<2x40xf32>, vector<80x40xf32> -> vector<80x40xf32>
    %c0_48 = arith.constant 0 : index
    %c0_49 = arith.constant 0 : index
    %114 = vector.load %arg18[%c0_48, %c0_49] : memref<80x40xf32, #tpu.memory_space<vmem>>, vector<80x40xf32>
    %115 = arith.mulf %114, %113 : vector<80x40xf32>
    %c0_50 = arith.constant 0 : index
    %c0_51 = arith.constant 0 : index
    %116 = vector.load %arg4[%c0_50, %c0_51] : memref<40x40xf32, #tpu.memory_space<vmem>>, vector<40x40xf32>
    %cst_52 = arith.constant dense<0.000000e+00> : vector<80x40xf32>
    %117 = tpu.matmul %115, %116, %cst_52 {dimension_numbers = #tpu.dot_dimension_numbers<[1], [0], [0], [1], [0, 0, 1, 1], [], []>} : vector<80x40xf32>, vector<40x40xf32>, vector<80x40xf32> -> vector<80x40xf32>
    %c0_53 = arith.constant 0 : index
    %c0_54 = arith.constant 0 : index
    %118 = vector.load %arg17[%c0_53, %c0_54] : memref<80x40xf32, #tpu.memory_space<vmem>>, vector<80x40xf32>
    %119 = arith.addf %117, %118 : vector<80x40xf32>
    %cst_55 = arith.constant 0.000000e+00 : f32
    %120 = vector.broadcast %cst_55 : f32 to vector<80x40xf32>
    %121 = arith.maximumf %119, %120 : vector<80x40xf32>
    %c0_56 = arith.constant 0 : index
    %c0_57 = arith.constant 0 : index
    %122 = vector.load %arg5[%c0_56, %c0_57] : memref<40x40xf32, #tpu.memory_space<vmem>>, vector<40x40xf32>
    %cst_58 = arith.constant dense<0.000000e+00> : vector<80x40xf32>
    %123 = tpu.matmul %121, %122, %cst_58 {dimension_numbers = #tpu.dot_dimension_numbers<[1], [0], [0], [1], [0, 0, 1, 1], [], []>} : vector<80x40xf32>, vector<40x40xf32>, vector<80x40xf32> -> vector<80x40xf32>
    %c0_59 = arith.constant 0 : index
    %c0_60 = arith.constant 0 : index
    %124 = vector.load %arg6[%c0_59, %c0_60] : memref<1x40xf32, #tpu.memory_space<vmem>>, vector<1x40xf32>
    %125 = vector.broadcast %124 : vector<1x40xf32> to vector<80x40xf32>
    %126 = arith.addf %123, %125 : vector<80x40xf32>
    %cst_61 = arith.constant dense<0.000000e+00> : vector<80xf32>
    %127 = vector.multi_reduction <add>, %126, %cst_61 [1] : vector<80x40xf32> to vector<80xf32>
    %128 = vector.shape_cast %127 : vector<80xf32> to vector<80x1xf32>
    %129 = arith.mulf %126, %126 : vector<80x40xf32>
    %cst_62 = arith.constant dense<0.000000e+00> : vector<80xf32>
    %130 = vector.multi_reduction <add>, %129, %cst_62 [1] : vector<80x40xf32> to vector<80xf32>
    %131 = vector.shape_cast %130 : vector<80xf32> to vector<80x1xf32>
    %c0_63 = arith.constant 0 : index
    %c0_64 = arith.constant 0 : index
    %132 = vector.load %arg13[%c0_63, %c0_64] : memref<80x80xf32, #tpu.memory_space<vmem>>, vector<80x80xf32>
    %cst_65 = arith.constant dense<0.000000e+00> : vector<80x1xf32>
    %133 = tpu.matmul %132, %128, %cst_65 {dimension_numbers = #tpu.dot_dimension_numbers<[1], [0], [0], [1], [0, 0, 1, 1], [], []>} : vector<80x80xf32>, vector<80x1xf32>, vector<80x1xf32> -> vector<80x1xf32>
    %cst_66 = arith.constant 3.125000e-03 : f32
    %134 = vector.broadcast %cst_66 : f32 to vector<80x1xf32>
    %135 = arith.mulf %133, %134 : vector<80x1xf32>
    %cst_67 = arith.constant dense<0.000000e+00> : vector<80x1xf32>
    %136 = tpu.matmul %132, %131, %cst_67 {dimension_numbers = #tpu.dot_dimension_numbers<[1], [0], [0], [1], [0, 0, 1, 1], [], []>} : vector<80x80xf32>, vector<80x1xf32>, vector<80x1xf32> -> vector<80x1xf32>
    %cst_68 = arith.constant 3.125000e-03 : f32
    %137 = vector.broadcast %cst_68 : f32 to vector<80x1xf32>
    %138 = arith.mulf %136, %137 : vector<80x1xf32>
    %139 = arith.mulf %135, %135 : vector<80x1xf32>
    %140 = arith.subf %138, %139 : vector<80x1xf32>
    %cst_69 = arith.constant 9.99999974E-6 : f32
    %141 = vector.broadcast %cst_69 : f32 to vector<80x1xf32>
    %142 = arith.addf %140, %141 : vector<80x1xf32>
    %143 = math.rsqrt %142 : vector<80x1xf32>
    %144 = vector.broadcast %135 : vector<80x1xf32> to vector<80x40xf32>
    %145 = arith.subf %126, %144 : vector<80x40xf32>
    %146 = vector.broadcast %143 : vector<80x1xf32> to vector<80x40xf32>
    %147 = arith.mulf %145, %146 : vector<80x40xf32>
    %c0_70 = arith.constant 0 : index
    %c0_71 = arith.constant 0 : index
    %148 = vector.load %arg9[%c0_70, %c0_71] : memref<80x1xf32, #tpu.memory_space<vmem>>, vector<80x1xf32>
    %149 = vector.broadcast %148 : vector<80x1xf32> to vector<80x40xf32>
    %150 = arith.mulf %147, %149 : vector<80x40xf32>
    %c0_72 = arith.constant 0 : index
    %c0_73 = arith.constant 0 : index
    %151 = vector.load %arg10[%c0_72, %c0_73] : memref<80x1xf32, #tpu.memory_space<vmem>>, vector<80x1xf32>
    %152 = vector.broadcast %151 : vector<80x1xf32> to vector<80x40xf32>
    %153 = arith.addf %150, %152 : vector<80x40xf32>
    %c0_74 = arith.constant 0 : index
    %c0_75 = arith.constant 0 : index
    %154 = vector.load %arg14[%c0_74, %c0_75] : memref<80x40xf32, #tpu.memory_space<vmem>>, vector<80x40xf32>
    tpu.vector_store %arg14[%c0_74, %c0_75], %153 {strides = array<i32>} : memref<80x40xf32, #tpu.memory_space<vmem>>, vector<80x40xf32>,
    return
  }
  func.func @transform_0(%arg0: i32) -> i32 {
    %c0_i32 = arith.constant 0 : i32
    %c0_i32_0 = arith.constant 0 : i32
    return %c0_i32 : i32
  }
  func.func @transform_1(%arg0: i32) -> (i32, i32) {
    %c0_i32 = arith.constant 0 : i32
    %c0_i32_0 = arith.constant 0 : i32
    return %arg0, %c0_i32 : i32, i32
  }
  func.func @transform_2(%arg0: i32) -> (i32, i32) {
    %c0_i32 = arith.constant 0 : i32
    %c0_i32_0 = arith.constant 0 : i32
    %c0_i32_1 = arith.constant 0 : i32
    return %c0_i32, %c0_i32_0 : i32, i32
  }
  func.func @transform_3(%arg0: i32) -> (i32, i32) {
    %c0_i32 = arith.constant 0 : i32
    %c0_i32_0 = arith.constant 0 : i32
    %c0_i32_1 = arith.constant 0 : i32
    return %c0_i32, %c0_i32_0 : i32, i32
  }
  func.func @transform_4(%arg0: i32) -> (i32, i32) {
    %c0_i32 = arith.constant 0 : i32
    %c0_i32_0 = arith.constant 0 : i32
    %c0_i32_1 = arith.constant 0 : i32
    return %c0_i32, %c0_i32_0 : i32, i32
  }
  func.func @transform_5(%arg0: i32) -> (i32, i32) {
    %c0_i32 = arith.constant 0 : i32
    %c0_i32_0 = arith.constant 0 : i32
    %c0_i32_1 = arith.constant 0 : i32
    return %c0_i32, %c0_i32_0 : i32, i32
  }
  func.func @transform_6(%arg0: i32) -> (i32, i32) {
    %c0_i32 = arith.constant 0 : i32
    %c0_i32_0 = arith.constant 0 : i32
    %c0_i32_1 = arith.constant 0 : i32
    return %c0_i32, %c0_i32_0 : i32, i32
  }
  func.func @transform_7(%arg0: i32) -> (i32, i32) {
    %c0_i32 = arith.constant 0 : i32
    %c0_i32_0 = arith.constant 0 : i32
    %c0_i32_1 = arith.constant 0 : i32
    return %c0_i32, %c0_i32_0 : i32, i32
  }
  func.func @transform_8(%arg0: i32) -> (i32, i32) {
    %c0_i32 = arith.constant 0 : i32
    %c0_i32_0 = arith.constant 0 : i32
    %c0_i32_1 = arith.constant 0 : i32
    return %c0_i32, %c0_i32_0 : i32, i32
  }
  func.func @transform_9(%arg0: i32) -> (i32, i32) {
    %c0_i32 = arith.constant 0 : i32
    %c0_i32_0 = arith.constant 0 : i32
    %c0_i32_1 = arith.constant 0 : i32
    return %c0_i32, %c0_i32_0 : i32, i32
  }
  func.func @transform_10(%arg0: i32) -> (i32, i32) {
    %c0_i32 = arith.constant 0 : i32
    %c0_i32_0 = arith.constant 0 : i32
    %c0_i32_1 = arith.constant 0 : i32
    return %c0_i32, %c0_i32_0 : i32, i32
  }
  func.func @transform_11(%arg0: i32) -> (i32, i32) {
    %c0_i32 = arith.constant 0 : i32
    %c0_i32_0 = arith.constant 0 : i32
    %c0_i32_1 = arith.constant 0 : i32
    return %c0_i32, %c0_i32_0 : i32, i32
  }
  func.func @transform_12(%arg0: i32) -> (i32, i32) {
    %c0_i32 = arith.constant 0 : i32
    %c0_i32_0 = arith.constant 0 : i32
    %c0_i32_1 = arith.constant 0 : i32
    return %c0_i32, %c0_i32_0 : i32, i32
  }
  func.func @transform_13(%arg0: i32) -> (i32, i32) {
    %c0_i32 = arith.constant 0 : i32
    %c0_i32_0 = arith.constant 0 : i32
    return %arg0, %c0_i32 : i32, i32
  }
}

</mosaic_0001>

<llo_original>
// kernel: tpu_custom_call.1
$region0: #{tpu_custom_call.1}
  #allocation0 [shape = 'u32[]', space=smem, size = 0x4, offset = 0x4, fixed_abs, tag = 'smem constant byte address 0x4 - core index']
  #allocation1 [shape = 'u32[144,128]{1,0:T(1,128)}', space=vmem, size = 0x12000, scoped, tag = 'internal scratch']
  #allocation2 [shape = 'f32[40,40]{1,0:T(8,128)}', space=vmem, size = 0x5000, scoped, tag = 'scratch operand']
  #allocation3 [shape = 'f32[2,40,40]{2,1,0:T(8,128)}', space=vmem, size = 0xa000, scoped, tag = 'scratch operand']
  #allocation4 [shape = 'f32[80,40]{1,0:T(8,128)}', space=vmem, size = 0xa000, scoped, tag = 'scratch operand']
  #allocation5 [shape = 'f32[80,40]{1,0:T(8,128)}', space=vmem, size = 0xa000, scoped, tag = 'scratch operand']
  %s0 = inlined_call_operand.vmem [shape: f32[6], index: 0, kind: input, shape index: {}]
  %s1 = inlined_call_operand.vmem [shape: f32[240,40], index: 1, kind: input, shape index: {}]
  %s2 = inlined_call_operand.vmem [shape: f32[40,384], index: 2, kind: input, shape index: {}]
  %s3 = inlined_call_operand.vmem [shape: f32[40,40], index: 3, kind: input, shape index: {}]
  %s4 = inlined_call_operand.vmem [shape: f32[40,40], index: 4, kind: input, shape index: {}]
  %s5 = inlined_call_operand.vmem [shape: f32[1,40], index: 5, kind: input, shape index: {}]
  %s6 = inlined_call_operand.vmem [shape: f32[1,40], index: 6, kind: input, shape index: {}]
  %s7 = inlined_call_operand.vmem [shape: f32[1,40], index: 7, kind: input, shape index: {}]
  %s8 = inlined_call_operand.vmem [shape: f32[80,1], index: 8, kind: input, shape index: {}]
  %s9 = inlined_call_operand.vmem [shape: f32[80,1], index: 9, kind: input, shape index: {}]
  %s10 = inlined_call_operand.vmem [shape: f32[2,80], index: 10, kind: input, shape index: {}]
  %s11 = inlined_call_operand.vmem [shape: f32[80,2], index: 11, kind: input, shape index: {}]
  %s12 = inlined_call_operand.vmem [shape: f32[80,80], index: 12, kind: input, shape index: {}]
  %s13 = inlined_call_operand.vmem [shape: f32[240,40], index: 13, kind: output, shape index: {}]
  %s14 = sld [smem:[#allocation0]]
  $region93: #{tpu_custom_call.1} parent=0
    _
  %s16 = ssub.s32 1, %s14
  %s17 = scalar_select 0, %s16, %s14
  $region1: #{tpu_custom_call.1} parent=0
    #allocation6 [shape = 'u8[512]{0}', space=smem, size = 0x200, scoped, tag = 'input window, operand 0, single buffered']
    #allocation7 [shape = 's32[2]{0}', space=sflag, size = 0x8, scoped, tag = 'scoped memory for tpu_custom_call.1']
    %18 = vsyncpa [#allocation7], 0
    loop: start=0, step=1, limit=5
    $region2: #{tpu_custom_call.1} parent=1 // loop_pre_header
      _
    $region3: #{tpu_custom_call.1} parent=1 // loop_header
      %s20 = sphi 0, %s24
      %p21 = scmp.ge.s32.totalorder %s20, 5
      %s28 = sphi 0, %s28
      %s30 = sphi 0, %s28
      %s31 = sphi 0, %s30
      %s45 = sphi 0, %s31
      %s51 = sphi 0, %s53
      %s54 = sphi 0, %s51
      %s55 = sphi 0, %s54
      %s71 = sphi 0, %s55
      %s75 = sphi 0, %s75
      %s77 = sphi 0, %s75
      %s78 = sphi 0, %s77
      %s92 = sphi 0, %s78
      %s96 = sphi 0, %s96
      %s98 = sphi 0, %s96
      %s99 = sphi 0, %s98
      %s113 = sphi 0, %s99
      %s117 = sphi 0, %s117
      %s119 = sphi 0, %s117
      %s120 = sphi 0, %s119
      %s134 = sphi 0, %s120
      %s138 = sphi 0, %s138
      %s140 = sphi 0, %s138
      %s141 = sphi 0, %s140
      %s155 = sphi 0, %s141
      %s159 = sphi 0, %s159
      %s161 = sphi 0, %s159
      %s162 = sphi 0, %s161
      %s176 = sphi 0, %s162
      %s180 = sphi 0, %s180
      %s182 = sphi 0, %s180
      %s183 = sphi 0, %s182
      %s197 = sphi 0, %s183
      %s201 = sphi 0, %s201
      %s203 = sphi 0, %s201
      %s204 = sphi 0, %s203
      %s218 = sphi 0, %s204
      %s222 = sphi 0, %s222
      %s224 = sphi 0, %s222
      %s225 = sphi 0, %s224
      %s239 = sphi 0, %s225
      %s243 = sphi 0, %s243
      %s245 = sphi 0, %s243
      %s246 = sphi 0, %s245
      %s260 = sphi 0, %s246
      %s264 = sphi 0, %s264
      %s266 = sphi 0, %s264
      %s267 = sphi 0, %s266
      %s281 = sphi 0, %s267
      %s285 = sphi 0, %s285
      %s287 = sphi 0, %s285
      %s288 = sphi 0, %s287
      %s302 = sphi 0, %s288
      %s308 = sphi 0, %s310
      %s311 = sphi 0, %s308
      %s312 = sphi 0, %s311
      %s328 = sphi 0, %s312
    $region4: #{tpu_custom_call.1} parent=1 // loop_header_branch
      %23 = sbr.rel (%p21) target = $region8
    $region5: #{tpu_custom_call.1} parent=1 // loop_body
      %s25 = ssub.s32 %s20, 1
      %s26 = ssub.s32 %s20, 2
      %s27 = sadd.s32 %s20, 1
      %s29 = sadd.s32 %s28, 1
      %p32 = scmp.eq.s32.totalorder %s20, 2
      %p33 = scmp.ne.s32.totalorder %s28, %s30
      %p34 = scmp.eq.s32.totalorder %s20, 0
      %p35 = por %p33, %p34
      %p36 = scmp.ne.s32.totalorder %s28, %s30
      %p37 = scmp.eq.s32.totalorder %s25, 2
      %p38 = por %p36, %p37
      %p39 = scmp.ne.s32.totalorder %s30, %s31
      %p40 = scmp.eq.s32.totalorder %s25, 0
      %p41 = por %p39, %p40
      %p42 = scmp.ne.s32.totalorder %s30, %s31
      %p43 = scmp.eq.s32.totalorder %s26, 2
      %p44 = por %p42, %p43
      %p46 = scmp.ne.s32.totalorder %s31, %s45
      %p47 = scmp.eq.s32.totalorder %s26, 0
      %p48 = por %p46, %p47
      %s49 = ssub.s32 %s20, %s27
      %p50 = scmp.eq.s32.totalorder %s49, 0
      %s52 = sadd.s32 %s51, 1
      %s53 = scalar_select %p50, %s51, %s52
      %p56 = pneg %p50
      %p57 = scmp.eq.s32.totalorder %s20, 2
      %p58 = por %p56, %p57
      %p59 = scmp.ne.s32.totalorder %s51, %s54
      %p60 = scmp.eq.s32.totalorder %s20, 0
      %p61 = por %p59, %p60
      %p62 = scmp.ne.s32.totalorder %s51, %s54
      %p63 = scmp.eq.s32.totalorder %s25, 2
      %p64 = por %p62, %p63
      %p65 = scmp.ne.s32.totalorder %s54, %s55
      %p66 = scmp.eq.s32.totalorder %s25, 0
      %p67 = por %p65, %p66
      %p68 = scmp.ne.s32.totalorder %s54, %s55
      %p69 = scmp.eq.s32.totalorder %s26, 2
      %p70 = por %p68, %p69
      %p72 = scmp.ne.s32.totalorder %s55, %s71
      %p73 = scmp.eq.s32.totalorder %s26, 0
      %p74 = por %p72, %p73
      %s76 = sadd.s32 %s75, 1
      %p79 = scmp.eq.s32.totalorder %s20, 2
      %p80 = scmp.ne.s32.totalorder %s75, %s77
      %p81 = scmp.eq.s32.totalorder %s20, 0
      %p82 = por %p80, %p81
      %p83 = scmp.ne.s32.totalorder %s75, %s77
      %p84 = scmp.eq.s32.totalorder %s25, 2
      %p85 = por %p83, %p84
      %p86 = scmp.ne.s32.totalorder %s77, %s78
      %p87 = scmp.eq.s32.totalorder %s25, 0
      %p88 = por %p86, %p87
      %p89 = scmp.ne.s32.totalorder %s77, %s78
      %p90 = scmp.eq.s32.totalorder %s26, 2
      %p91 = por %p89, %p90
      %p93 = scmp.ne.s32.totalorder %s78, %s92
      %p94 = scmp.eq.s32.totalorder %s26, 0
      %p95 = por %p93, %p94
      %s97 = sadd.s32 %s96, 1
      %p100 = scmp.eq.s32.totalorder %s20, 2
      %p101 = scmp.ne.s32.totalorder %s96, %s98
      %p102 = scmp.eq.s32.totalorder %s20, 0
      %p103 = por %p101, %p102
      %p104 = scmp.ne.s32.totalorder %s96, %s98
      %p105 = scmp.eq.s32.totalorder %s25, 2
      %p106 = por %p104, %p105
      %p107 = scmp.ne.s32.totalorder %s98, %s99
      %p108 = scmp.eq.s32.totalorder %s25, 0
      %p109 = por %p107, %p108
      %p110 = scmp.ne.s32.totalorder %s98, %s99
      %p111 = scmp.eq.s32.totalorder %s26, 2
      %p112 = por %p110, %p111
      %p114 = scmp.ne.s32.totalorder %s99, %s113
      %p115 = scmp.eq.s32.totalorder %s26, 0
      %p116 = por %p114, %p115
      %s118 = sadd.s32 %s117, 1
      %p121 = scmp.eq.s32.totalorder %s20, 2
      %p122 = scmp.ne.s32.totalorder %s117, %s119
      %p123 = scmp.eq.s32.totalorder %s20, 0
      %p124 = por %p122, %p123
      %p125 = scmp.ne.s32.totalorder %s117, %s119
      %p126 = scmp.eq.s32.totalorder %s25, 2
      %p127 = por %p125, %p126
      %p128 = scmp.ne.s32.totalorder %s119, %s120
      %p129 = scmp.eq.s32.totalorder %s25, 0
      %p130 = por %p128, %p129
      %p131 = scmp.ne.s32.totalorder %s119, %s120
      %p132 = scmp.eq.s32.totalorder %s26, 2
      %p133 = por %p131, %p132
      %p135 = scmp.ne.s32.totalorder %s120, %s134
      %p136 = scmp.eq.s32.totalorder %s26, 0
      %p137 = por %p135, %p136
      %s139 = sadd.s32 %s138, 1
      %p142 = scmp.eq.s32.totalorder %s20, 2
      %p143 = scmp.ne.s32.totalorder %s138, %s140
      %p144 = scmp.eq.s32.totalorder %s20, 0
      %p145 = por %p143, %p144
      %p146 = scmp.ne.s32.totalorder %s138, %s140
      %p147 = scmp.eq.s32.totalorder %s25, 2
      %p148 = por %p146, %p147
      %p149 = scmp.ne.s32.totalorder %s140, %s141
      %p150 = scmp.eq.s32.totalorder %s25, 0
      %p151 = por %p149, %p150
      %p152 = scmp.ne.s32.totalorder %s140, %s141
      %p153 = scmp.eq.s32.totalorder %s26, 2
      %p154 = por %p152, %p153
      %p156 = scmp.ne.s32.totalorder %s141, %s155
      %p157 = scmp.eq.s32.totalorder %s26, 0
      %p158 = por %p156, %p157
      %s160 = sadd.s32 %s159, 1
      %p163 = scmp.eq.s32.totalorder %s20, 2
      %p164 = scmp.ne.s32.totalorder %s159, %s161
      %p165 = scmp.eq.s32.totalorder %s20, 0
      %p166 = por %p164, %p165
      %p167 = scmp.ne.s32.totalorder %s159, %s161
      %p168 = scmp.eq.s32.totalorder %s25, 2
      %p169 = por %p167, %p168
      %p170 = scmp.ne.s32.totalorder %s161, %s162
      %p171 = scmp.eq.s32.totalorder %s25, 0
      %p172 = por %p170, %p171
      %p173 = scmp.ne.s32.totalorder %s161, %s162
      %p174 = scmp.eq.s32.totalorder %s26, 2
      %p175 = por %p173, %p174
      %p177 = scmp.ne.s32.totalorder %s162, %s176
      %p178 = scmp.eq.s32.totalorder %s26, 0
      %p179 = por %p177, %p178
      %s181 = sadd.s32 %s180, 1
      %p184 = scmp.eq.s32.totalorder %s20, 2
      %p185 = scmp.ne.s32.totalorder %s180, %s182
      %p186 = scmp.eq.s32.totalorder %s20, 0
      %p187 = por %p185, %p186
      %p188 = scmp.ne.s32.totalorder %s180, %s182
      %p189 = scmp.eq.s32.totalorder %s25, 2
      %p190 = por %p188, %p189
      %p191 = scmp.ne.s32.totalorder %s182, %s183
      %p192 = scmp.eq.s32.totalorder %s25, 0
      %p193 = por %p191, %p192
      %p194 = scmp.ne.s32.totalorder %s182, %s183
      %p195 = scmp.eq.s32.totalorder %s26, 2
      %p196 = por %p194, %p195
      %p198 = scmp.ne.s32.totalorder %s183, %s197
      %p199 = scmp.eq.s32.totalorder %s26, 0
      %p200 = por %p198, %p199
      %s202 = sadd.s32 %s201, 1
      %p205 = scmp.eq.s32.totalorder %s20, 2
      %p206 = scmp.ne.s32.totalorder %s201, %s203
      %p207 = scmp.eq.s32.totalorder %s20, 0
      %p208 = por %p206, %p207
      %p209 = scmp.ne.s32.totalorder %s201, %s203
      %p210 = scmp.eq.s32.totalorder %s25, 2
      %p211 = por %p209, %p210
      %p212 = scmp.ne.s32.totalorder %s203, %s204
      %p213 = scmp.eq.s32.totalorder %s25, 0
      %p214 = por %p212, %p213
      %p215 = scmp.ne.s32.totalorder %s203, %s204
      %p216 = scmp.eq.s32.totalorder %s26, 2
      %p217 = por %p215, %p216
      %p219 = scmp.ne.s32.totalorder %s204, %s218
      %p220 = scmp.eq.s32.totalorder %s26, 0
      %p221 = por %p219, %p220
      %s223 = sadd.s32 %s222, 1
      %p226 = scmp.eq.s32.totalorder %s20, 2
      %p227 = scmp.ne.s32.totalorder %s222, %s224
      %p228 = scmp.eq.s32.totalorder %s20, 0
      %p229 = por %p227, %p228
      %p230 = scmp.ne.s32.totalorder %s222, %s224
      %p231 = scmp.eq.s32.totalorder %s25, 2
      %p232 = por %p230, %p231
      %p233 = scmp.ne.s32.totalorder %s224, %s225
      %p234 = scmp.eq.s32.totalorder %s25, 0
      %p235 = por %p233, %p234
      %p236 = scmp.ne.s32.totalorder %s224, %s225
      %p237 = scmp.eq.s32.totalorder %s26, 2
      %p238 = por %p236, %p237
      %p240 = scmp.ne.s32.totalorder %s225, %s239
      %p241 = scmp.eq.s32.totalorder %s26, 0
      %p242 = por %p240, %p241
      %s244 = sadd.s32 %s243, 1
      %p247 = scmp.eq.s32.totalorder %s20, 2
      %p248 = scmp.ne.s32.totalorder %s243, %s245
      %p249 = scmp.eq.s32.totalorder %s20, 0
      %p250 = por %p248, %p249
      %p251 = scmp.ne.s32.totalorder %s243, %s245
      %p252 = scmp.eq.s32.totalorder %s25, 2
      %p253 = por %p251, %p252
      %p254 = scmp.ne.s32.totalorder %s245, %s246
      %p255 = scmp.eq.s32.totalorder %s25, 0
      %p256 = por %p254, %p255
      %p257 = scmp.ne.s32.totalorder %s245, %s246
      %p258 = scmp.eq.s32.totalorder %s26, 2
      %p259 = por %p257, %p258
      %p261 = scmp.ne.s32.totalorder %s246, %s260
      %p262 = scmp.eq.s32.totalorder %s26, 0
      %p263 = por %p261, %p262
      %s265 = sadd.s32 %s264, 1
      %p268 = scmp.eq.s32.totalorder %s20, 2
      %p269 = scmp.ne.s32.totalorder %s264, %s266
      %p270 = scmp.eq.s32.totalorder %s20, 0
      %p271 = por %p269, %p270
      %p272 = scmp.ne.s32.totalorder %s264, %s266
      %p273 = scmp.eq.s32.totalorder %s25, 2
      %p274 = por %p272, %p273
      %p275 = scmp.ne.s32.totalorder %s266, %s267
      %p276 = scmp.eq.s32.totalorder %s25, 0
      %p277 = por %p275, %p276
      %p278 = scmp.ne.s32.totalorder %s266, %s267
      %p279 = scmp.eq.s32.totalorder %s26, 2
      %p280 = por %p278, %p279
      %p282 = scmp.ne.s32.totalorder %s267, %s281
      %p283 = scmp.eq.s32.totalorder %s26, 0
      %p284 = por %p282, %p283
      %s286 = sadd.s32 %s285, 1
      %p289 = scmp.eq.s32.totalorder %s20, 2
      %p290 = scmp.ne.s32.totalorder %s285, %s287
      %p291 = scmp.eq.s32.totalorder %s20, 0
      %p292 = por %p290, %p291
      %p293 = scmp.ne.s32.totalorder %s285, %s287
      %p294 = scmp.eq.s32.totalorder %s25, 2
      %p295 = por %p293, %p294
      %p296 = scmp.ne.s32.totalorder %s287, %s288
      %p297 = scmp.eq.s32.totalorder %s25, 0
      %p298 = por %p296, %p297
      %p299 = scmp.ne.s32.totalorder %s287, %s288
      %p300 = scmp.eq.s32.totalorder %s26, 2
      %p301 = por %p299, %p300
      %p303 = scmp.ne.s32.totalorder %s288, %s302
      %p304 = scmp.eq.s32.totalorder %s26, 0
      %p305 = por %p303, %p304
      %s306 = ssub.s32 %s20, %s27
      %p307 = scmp.eq.s32.totalorder %s306, 0
      %s309 = sadd.s32 %s308, 1
      %s310 = scalar_select %p307, %s308, %s309
      %p313 = pneg %p307
      %p314 = scmp.eq.s32.totalorder %s20, 2
      %p315 = por %p313, %p314
      %p316 = scmp.ne.s32.totalorder %s308, %s311
      %p317 = scmp.eq.s32.totalorder %s20, 0
      %p318 = por %p316, %p317
      %p319 = scmp.ne.s32.totalorder %s308, %s311
      %p320 = scmp.eq.s32.totalorder %s25, 2
      %p321 = por %p319, %p320
      %p322 = scmp.ne.s32.totalorder %s311, %s312
      %p323 = scmp.eq.s32.totalorder %s25, 0
      %p324 = por %p322, %p323
      %p325 = scmp.ne.s32.totalorder %s311, %s312
      %p326 = scmp.eq.s32.totalorder %s26, 2
      %p327 = por %p325, %p326
      %p329 = scmp.ne.s32.totalorder %s312, %s328
      %p330 = scmp.eq.s32.totalorder %s26, 0
      %p331 = por %p329, %p330
      %p332 = scmp.le.s32.totalorder 1, %s20
      %p333 = scmp.lt.s32.totalorder %s20, 4
      %p334 = pnand %p332, %p333
      %p335 = pneg %p334
      // Predicated region
      $region9: #{tpu_custom_call.1} parent=5 // pred_check
        _
      $region10: #{tpu_custom_call.1} parent=5 // pred_check_branch
        %337 = sbr.rel (%p334) target = $region12
      $region11: #{tpu_custom_call.1} parent=5 // pred_region
        %s338 = ssub.s32 %s20, 1
        // Predicated region
        $region13: #{tpu_custom_call.1} parent=11 // pred_check
          %p339 = pneg %p41
        $region14: #{tpu_custom_call.1} parent=11 // pred_check_branch
          %341 = sbr.rel (%p339) target = $region16
        $region15: #{tpu_custom_call.1} parent=11 // pred_region
          %s343 = ssub.s32 16, 16
          %344 = vsyncadd [#allocation7], %s343
          %s346 = sshll.u32 %s0, 4
          %s347 = int_to_ptr.vmem [resolvable:$true] %s346
          %349 = dma.vmem_to_smem %s347, 16, [#allocation6], [#allocation7]
        $region16: #{tpu_custom_call.1} parent=11 // pred_fallthru
          _
        // Predicated region
        $region17: #{tpu_custom_call.1} parent=11 // pred_check
          %p350 = pneg %p88
        $region18: #{tpu_custom_call.1} parent=11 // pred_check_branch
          %352 = sbr.rel (%p350) target = $region20
        $region19: #{tpu_custom_call.1} parent=11 // pred_region
          _
        $region20: #{tpu_custom_call.1} parent=11 // pred_fallthru
          _
        // Predicated region
        $region21: #{tpu_custom_call.1} parent=11 // pred_check
          %p353 = pneg %p109
        $region22: #{tpu_custom_call.1} parent=11 // pred_check_branch
          %355 = sbr.rel (%p353) target = $region24
        $region23: #{tpu_custom_call.1} parent=11 // pred_region
          _
        $region24: #{tpu_custom_call.1} parent=11 // pred_fallthru
          _
        // Predicated region
        $region25: #{tpu_custom_call.1} parent=11 // pred_check
          %p356 = pneg %p130
        $region26: #{tpu_custom_call.1} parent=11 // pred_check_branch
          %358 = sbr.rel (%p356) target = $region28
        $region27: #{tpu_custom_call.1} parent=11 // pred_region
          _
        $region28: #{tpu_custom_call.1} parent=11 // pred_fallthru
          _
        // Predicated region
        $region29: #{tpu_custom_call.1} parent=11 // pred_check
          %p359 = pneg %p151
        $region30: #{tpu_custom_call.1} parent=11 // pred_check_branch
          %361 = sbr.rel (%p359) target = $region32
        $region31: #{tpu_custom_call.1} parent=11 // pred_region
          _
        $region32: #{tpu_custom_call.1} parent=11 // pred_fallthru
          _
        // Predicated region
        $region33: #{tpu_custom_call.1} parent=11 // pred_check
          %p362 = pneg %p172
        $region34: #{tpu_custom_call.1} parent=11 // pred_check_branch
          %364 = sbr.rel (%p362) target = $region36
        $region35: #{tpu_custom_call.1} parent=11 // pred_region
          _
        $region36: #{tpu_custom_call.1} parent=11 // pred_fallthru
          _
        // Predicated region
        $region37: #{tpu_custom_call.1} parent=11 // pred_check
          %p365 = pneg %p193
        $region38: #{tpu_custom_call.1} parent=11 // pred_check_branch
          %367 = sbr.rel (%p365) target = $region40
        $region39: #{tpu_custom_call.1} parent=11 // pred_region
          _
        $region40: #{tpu_custom_call.1} parent=11 // pred_fallthru
          _
        // Predicated region
        $region41: #{tpu_custom_call.1} parent=11 // pred_check
          %p368 = pneg %p214
        $region42: #{tpu_custom_call.1} parent=11 // pred_check_branch
          %370 = sbr.rel (%p368) target = $region44
        $region43: #{tpu_custom_call.1} parent=11 // pred_region
          _
        $region44: #{tpu_custom_call.1} parent=11 // pred_fallthru
          _
        // Predicated region
        $region45: #{tpu_custom_call.1} parent=11 // pred_check
          %p371 = pneg %p235
        $region46: #{tpu_custom_call.1} parent=11 // pred_check_branch
          %373 = sbr.rel (%p371) target = $region48
        $region47: #{tpu_custom_call.1} parent=11 // pred_region
          _
        $region48: #{tpu_custom_call.1} parent=11 // pred_fallthru
          _
        // Predicated region
        $region49: #{tpu_custom_call.1} parent=11 // pred_check
          %p374 = pneg %p256
        $region50: #{tpu_custom_call.1} parent=11 // pred_check_branch
          %376 = sbr.rel (%p374) target = $region52
        $region51: #{tpu_custom_call.1} parent=11 // pred_region
          _
        $region52: #{tpu_custom_call.1} parent=11 // pred_fallthru
          _
        // Predicated region
        $region53: #{tpu_custom_call.1} parent=11 // pred_check
          %p377 = pneg %p277
        $region54: #{tpu_custom_call.1} parent=11 // pred_check_branch
          %379 = sbr.rel (%p377) target = $region56
        $region55: #{tpu_custom_call.1} parent=11 // pred_region
          _
        $region56: #{tpu_custom_call.1} parent=11 // pred_fallthru
          _
        // Predicated region
        $region57: #{tpu_custom_call.1} parent=11 // pred_check
          %p380 = pneg %p298
        $region58: #{tpu_custom_call.1} parent=11 // pred_check_branch
          %382 = sbr.rel (%p380) target = $region60
        $region59: #{tpu_custom_call.1} parent=11 // pred_region
          _
        $region60: #{tpu_custom_call.1} parent=11 // pred_fallthru
          _
      $region12: #{tpu_custom_call.1} parent=5 // pred_fallthru
        _
      %p383 = scmp.lt.s32.totalorder %s20, 3
      // Predicated region
      $region61: #{tpu_custom_call.1} parent=5 // pred_check
        %p384 = pneg %p383
      $region62: #{tpu_custom_call.1} parent=5 // pred_check_branch
        %386 = sbr.rel (%p384) target = $region64
      $region63: #{tpu_custom_call.1} parent=5 // pred_region
        // Predicated region
        $region65: #{tpu_custom_call.1} parent=63 // pred_check
          %p387 = pneg %p61
        $region66: #{tpu_custom_call.1} parent=63 // pred_check_branch
          %389 = sbr.rel (%p387) target = $region68
        $region67: #{tpu_custom_call.1} parent=63 // pred_region
          %s390 = smul.u32 10, %s20
          %p391 = scmp.lt.s32.totalorder %s390, 29
          %s392 = scalar_select %p391, %s390, 29
          %s393 = smul.addr %s392, 8
          %s394 = scalar_lea.vmem %s1, %s393
          %s395 = smul.u32 10, %s20
        $region68: #{tpu_custom_call.1} parent=63 // pred_fallthru
          _
      $region64: #{tpu_custom_call.1} parent=5 // pred_fallthru
        _
      %p396 = scmp.le.s32.totalorder 1, %s20
      %p397 = scmp.lt.s32.totalorder %s20, 4
      %p398 = pnand %p396, %p397
      %p399 = pneg %p398
      // Predicated region
      $region69: #{tpu_custom_call.1} parent=5 // pred_check
        _
      $region70: #{tpu_custom_call.1} parent=5 // pred_check_branch
        %401 = sbr.rel (%p398) target = $region72
      $region71: #{tpu_custom_call.1} parent=5 // pred_region
        %s402 = ssub.s32 %s20, 1
        // Predicated region
        $region73: #{tpu_custom_call.1} parent=71 // pred_check
          %p403 = pneg %p41
        $region74: #{tpu_custom_call.1} parent=71 // pred_check_branch
          %405 = sbr.rel (%p403) target = $region76
        $region75: #{tpu_custom_call.1} parent=71 // pred_region
          %406 = dma.done [#allocation7], 16
        $region76: #{tpu_custom_call.1} parent=71 // pred_fallthru
          _
        %407 = sfence
        %p408 = pneg %p41
        %p409 = pneg %p38
        %s410 = smul.u32 10, %s25
        %p411 = scmp.lt.s32.totalorder %s410, 29
        %s412 = scalar_select %p411, %s410, 29
        %s413 = smul.addr %s412, 8
        %s414 = scalar_lea.vmem %s1, %s413
        %p415 = pneg %p67
        %p416 = pneg %p64
        %p417 = pneg %p88
        %p418 = pneg %p85
        %p419 = pneg %p109
        %p420 = pneg %p106
        %p421 = pneg %p130
        %p422 = pneg %p127
        %p423 = pneg %p151
        %p424 = pneg %p148
        %p425 = pneg %p172
        %p426 = pneg %p169
        %p427 = pneg %p193
        %p428 = pneg %p190
        %p429 = pneg %p214
        %p430 = pneg %p211
        %p431 = pneg %p235
        %p432 = pneg %p232
        %p433 = pneg %p256
        %p434 = pneg %p253
        %p435 = pneg %p277
        %p436 = pneg %p274
        %p437 = pneg %p298
        %p438 = pneg %p295
        %p439 = pneg %p324
        %p440 = pneg %p321
        %s441 = smul.u32 10, %s25
        %p442 = scmp.lt.s32.totalorder %s441, 29
        %s443 = scalar_select %p442, %s441, 29
        %s444 = smul.addr %s443, 8
        %s445 = scalar_lea.vmem %s13, %s444
        %s446 = smul.u32 10, %s25
        %p447 = scmp.lt.s32.totalorder %s446, 29
        %s448 = scalar_select %p447, %s446, 29
        %s449 = smul.addr %s448, 8
        %s450 = scalar_lea.vmem %s1, %s449
        %s451 = smul.u32 10, %s25
        %s452 = smul.u32 10, %s25
        %p453 = scmp.lt.s32.totalorder %s452, 29
        %s454 = scalar_select %p453, %s452, 29
        %s455 = smul.addr %s454, 8
        %s456 = scalar_lea.vmem %s13, %s455
        %s457 = smul.u32 10, %s25
        %p458 = scmp.eq.s32.totalorder %s25, 0
        // Predicated region
        $region77: #{tpu_custom_call.1} parent=71 // pred_check
          %p459 = pneg %p458
        $region78: #{tpu_custom_call.1} parent=71 // pred_check_branch
          %461 = sbr.rel (%p459) target = $region80
        $region79: #{tpu_custom_call.1} parent=71 // pred_region
          %vm462 = vcmask 326656
          %463 = vst.msk [vmem:[#allocation2] sm:$0xff] %vm462, 0.0
          %464 = vst.msk [vmem:[#allocation2 + $0x8] sm:$0xff] %vm462, 0.0
          %465 = vst.msk [vmem:[#allocation2 + $0x10] sm:$0xff] %vm462, 0.0
          %466 = vst.msk [vmem:[#allocation2 + $0x18] sm:$0xff] %vm462, 0.0
          %467 = vst.msk [vmem:[#allocation2 + $0x20] sm:$0xff] %vm462, 0.0
        $region80: #{tpu_custom_call.1} parent=71 // pred_fallthru
          _
        %v468 = vld [vmem:[%s450] sm:$0xff]
        %v469 = vld [vmem:[%s450 + $0x8] sm:$0xff]
        %v470 = vld [vmem:[%s450 + $0x10] sm:$0xff]
        %v471 = vld [vmem:[%s450 + $0x18] sm:$0xff]
        %v472 = vld [vmem:[%s450 + $0x20] sm:$0xff]
        %v473 = vld [vmem:[%s450 + $0x28] sm:$0xff]
        %v474 = vld [vmem:[%s450 + $0x30] sm:$0xff]
        %v475 = vld [vmem:[%s450 + $0x38] sm:$0xff]
        %v476 = vld [vmem:[%s450 + $0x40] sm:$0xff]
        %v477 = vld [vmem:[%s450 + $0x48] sm:$0xff]
        %v478 = vld [vmem:[%s2] sm:$0xff]
        %v479 = vld [vmem:[%s2 + $0x8] sm:$0xff]
        %v480 = vld [vmem:[%s2 + $0x10] sm:$0xff]
        %v481 = vld [vmem:[%s2 + $0x18] sm:$0xff]
        %v482 = vld [vmem:[%s2 + $0x20] sm:$0xff]
        %v483 = vld [vmem:[%s2 + $0x28] sm:$0xff]
        %v484 = vld [vmem:[%s2 + $0x30] sm:$0xff]
        %v485 = vld [vmem:[%s2 + $0x38] sm:$0xff]
        %v486 = vld [vmem:[%s2 + $0x40] sm:$0xff]
        %v487 = vld [vmem:[%s2 + $0x48] sm:$0xff]
        %v488 = vld [vmem:[%s2 + $0x50] sm:$0xff]
        %v489 = vld [vmem:[%s2 + $0x58] sm:$0xff]
        %v490 = vld [vmem:[%s2 + $0x60] sm:$0xff]
        %v491 = vld [vmem:[%s2 + $0x68] sm:$0xff]
        %v492 = vld [vmem:[%s2 + $0x70] sm:$0xff]
        %vm493 = vcmask 326656
        %v495 = vsel %vm493, %v468, 0
        %v498 = vsel %vm493, %v469, 0
        %v501 = vsel %vm493, %v470, 0
        %v504 = vsel %vm493, %v471, 0
        %v507 = vsel %vm493, %v472, 0
        %v510 = vsel %vm493, %v473, 0
        %v513 = vsel %vm493, %v474, 0
        %v516 = vsel %vm493, %v475, 0
        %v519 = vsel %vm493, %v476, 0
        %v522 = vsel %vm493, %v477, 0
        %524 = vmatprep.subr.mxu0 %v479
        %525 = vmatpush1.msra.mxu0 %v478
        %526 = vmatprep.subr.mxu0 %v482
        %527 = vmatpush1.msra.mxu0 %v481
        %528 = vmatprep.subr.mxu0 %v485
        %529 = vmatpush1.msra.mxu0 %v484
        %530 = vmatprep.subr.mxu0 %v488
        %531 = vmatpush1.msra.mxu0 %v487
        %532 = vmatprep.subr.mxu0 %v491
        %533 = vmatpush1.msra.mxu0 %v490
        %534 = vmatprep.subr.mxu0 0.0
        %535 = vmatpush1.msra.mxu0 0.0
        %536 = vmatprep.subr.mxu0 0.0
        %537 = vmatpush1.msra.mxu0 0.0
        %538 = vmatprep.subr.mxu0 0.0
        %539 = vmatpush1.msra.mxu0 0.0
        %540 = vmatprep.subr.mxu0 0.0
        %541 = vmatpush1.msra.mxu0 0.0
        %542 = vmatprep.subr.mxu0 0.0
        %543 = vmatpush1.msra.mxu0 0.0
        %544 = vmatprep.subr.mxu0 0.0
        %545 = vmatpush1.msra.mxu0 0.0
        %546 = vmatprep.subr.mxu0 0.0
        %547 = vmatpush1.msra.mxu0 0.0
        %548 = vmatprep.subr.mxu0 0.0
        %549 = vmatpush1.msra.mxu0 0.0
        %550 = vmatprep.subr.mxu0 0.0
        %551 = vmatpush1.msra.mxu0 0.0
        %552 = vmatprep.subr.mxu0 0.0
        %553 = vmatpush1.msra.mxu0 0.0
        %554 = vmatprep.subr.mxu0 0.0
        %555 = vmatpush1.msra.mxu0 0.0
        %556 = vmatprep.subr.mxu0 0.0
        %557 = vmatpush1.msra.mxu0 0.0
        %558 = vmatprep.subr.mxu0 0.0
        %559 = vmatpush1.msra.mxu0 0.0
        %560 = vmatprep.subr.mxu0 0.0
        %561 = vmatpush1.msra.mxu0 0.0
        %562 = vmatprep.subr.mxu0 0.0
        %563 = vmatpush1.msra.mxu0 0.0
        %564 = vmatprep.subr.mxu0 0.0
        %565 = vmatpush1.msra.mxu0 0.0
        %566 = vmatprep.subr.mxu0 0.0
        %567 = vmatpush1.msra.mxu0 0.0
        %568 = vmatprep.subr.mxu0 0.0
        %569 = vmatpush1.msra.mxu0 0.0
        %570 = vmatprep.subr.mxu0 0.0
        %571 = vmatpush1.msra.mxu0 0.0
        %572 = vmatprep.subr.mxu0 0.0
        %573 = vmatpush1.msra.mxu0 0.0
        %574 = vmatprep.subr.mxu0 0.0
        %575 = vmatpush1.msra.mxu0 0.0
        %576 = vmatprep.subr.mxu0 0.0
        %577 = vmatpush1.msra.mxu0 0.0
        %578 = vmatprep.subr.mxu0 0.0
        %579 = vmatpush1.msra.mxu0 0.0
        %580 = vmatprep.subr.mxu0 0.0
        %581 = vmatpush1.msra.mxu0 0.0
        %582 = vmatprep.subr.mxu0 0.0
        %583 = vmatpush1.msra.mxu0 0.0
        %584 = vmatprep.subr.mxu0 0.0
        %585 = vmatpush1.msra.mxu0 0.0
        %586 = vmatprep.subr.mxu0 0.0
        %587 = vmatpush1.msra.mxu0 0.0
        %588 = vmatprep.mubr.f32.mxu0 0.0
        %589 = vmatmul.mubr.f32.gmra.mrb[0].mxu0 %v495
        %v590 = vpop.f32.mrb[0].mxu0
        %v591 = vadd.f32 0.0, %v590
        %v592 = vpop.f32.mrb[0].mxu0
        %v593 = vadd.f32 0.0, %v592
        %594 = vmatprep.mubr.f32.mxu0 0.0
        %595 = vmatmul.mubr.f32.gmra.mrb[0].mxu0 %v498
        %v596 = vpop.f32.mrb[0].mxu0
        %v597 = vadd.f32 0.0, %v596
        %v598 = vpop.f32.mrb[0].mxu0
        %v599 = vadd.f32 0.0, %v598
        %600 = vmatprep.mubr.f32.mxu0 0.0
        %601 = vmatmul.mubr.f32.gmra.mrb[0].mxu0 %v501
        %v602 = vpop.f32.mrb[0].mxu0
        %v603 = vadd.f32 0.0, %v602
        %v604 = vpop.f32.mrb[0].mxu0
        %v605 = vadd.f32 0.0, %v604
        %606 = vmatprep.mubr.f32.mxu0 0.0
        %607 = vmatmul.mubr.f32.gmra.mrb[0].mxu0 %v504
        %v608 = vpop.f32.mrb[0].mxu0
        %v609 = vadd.f32 0.0, %v608
        %v610 = vpop.f32.mrb[0].mxu0
        %v611 = vadd.f32 0.0, %v610
        %612 = vmatprep.mubr.f32.mxu0 0.0
        %613 = vmatmul.mubr.f32.gmra.mrb[0].mxu0 %v507
        %v614 = vpop.f32.mrb[0].mxu0
        %v615 = vadd.f32 0.0, %v614
        %v616 = vpop.f32.mrb[0].mxu0
        %v617 = vadd.f32 0.0, %v616
        %618 = vmatprep.mubr.f32.mxu0 0.0
        %619 = vmatmul.mubr.f32.gmra.mrb[0].mxu0 %v510
        %v620 = vpop.f32.mrb[0].mxu0
        %v621 = vadd.f32 0.0, %v620
        %v622 = vpop.f32.mrb[0].mxu0
        %v623 = vadd.f32 0.0, %v622
        %624 = vmatprep.mubr.f32.mxu0 0.0
        %625 = vmatmul.mubr.f32.gmra.mrb[0].mxu0 %v513
        %v626 = vpop.f32.mrb[0].mxu0
        %v627 = vadd.f32 0.0, %v626
        %v628 = vpop.f32.mrb[0].mxu0
        %v629 = vadd.f32 0.0, %v628
        %630 = vmatprep.mubr.f32.mxu0 0.0
        %631 = vmatmul.mubr.f32.gmra.mrb[0].mxu0 %v516
        %v632 = vpop.f32.mrb[0].mxu0
        %v633 = vadd.f32 0.0, %v632
        %v634 = vpop.f32.mrb[0].mxu0
        %v635 = vadd.f32 0.0, %v634
        %636 = vmatprep.mubr.f32.mxu0 0.0
        %637 = vmatmul.mubr.f32.gmra.mrb[0].mxu0 %v519
        %v638 = vpop.f32.mrb[0].mxu0
        %v639 = vadd.f32 0.0, %v638
        %v640 = vpop.f32.mrb[0].mxu0
        %v641 = vadd.f32 0.0, %v640
        %642 = vmatprep.mubr.f32.mxu0 0.0
        %643 = vmatmul.mubr.f32.gmra.mrb[0].mxu0 %v522
        %v644 = vpop.f32.mrb[0].mxu0
        %v645 = vadd.f32 0.0, %v644
        %v646 = vpop.f32.mrb[0].mxu0
        %v647 = vadd.f32 0.0, %v646
        %648 = vdwg.mxu0
        %649 = vmatprep.subr.mxu0 0.0
        %650 = vmatpush1.msra.mxu0 %v480
        %651 = vmatprep.subr.mxu0 0.0
        %652 = vmatpush1.msra.mxu0 %v483
        %653 = vmatprep.subr.mxu0 0.0
        %654 = vmatpush1.msra.mxu0 %v486
        %655 = vmatprep.subr.mxu0 0.0
        %656 = vmatpush1.msra.mxu0 %v489
        %657 = vmatprep.subr.mxu0 0.0
        %658 = vmatpush1.msra.mxu0 %v492
        %659 = vmatprep.subr.mxu0 0.0
        %660 = vmatpush1.msra.mxu0 0.0
        %661 = vmatprep.subr.mxu0 0.0
        %662 = vmatpush1.msra.mxu0 0.0
        %663 = vmatprep.subr.mxu0 0.0
        %664 = vmatpush1.msra.mxu0 0.0
        %665 = vmatprep.subr.mxu0 0.0
        %666 = vmatpush1.msra.mxu0 0.0
        %667 = vmatprep.subr.mxu0 0.0
        %668 = vmatpush1.msra.mxu0 0.0
        %669 = vmatprep.subr.mxu0 0.0
        %670 = vmatpush1.msra.mxu0 0.0
        %671 = vmatprep.subr.mxu0 0.0
        %672 = vmatpush1.msra.mxu0 0.0
        %673 = vmatprep.subr.mxu0 0.0
        %674 = vmatpush1.msra.mxu0 0.0
        %675 = vmatprep.subr.mxu0 0.0
        %676 = vmatpush1.msra.mxu0 0.0
        %677 = vmatprep.subr.mxu0 0.0
        %678 = vmatpush1.msra.mxu0 0.0
        %679 = vmatprep.subr.mxu0 0.0
        %680 = vmatpush1.msra.mxu0 0.0
        %681 = vmatprep.subr.mxu0 0.0
        %682 = vmatpush1.msra.mxu0 0.0
        %683 = vmatprep.subr.mxu0 0.0
        %684 = vmatpush1.msra.mxu0 0.0
        %685 = vmatprep.subr.mxu0 0.0
        %686 = vmatpush1.msra.mxu0 0.0
        %687 = vmatprep.subr.mxu0 0.0
        %688 = vmatpush1.msra.mxu0 0.0
        %689 = vmatprep.subr.mxu0 0.0
        %690 = vmatpush1.msra.mxu0 0.0
        %691 = vmatprep.subr.mxu0 0.0
        %692 = vmatpush1.msra.mxu0 0.0
        %693 = vmatprep.subr.mxu0 0.0
        %694 = vmatpush1.msra.mxu0 0.0
        %695 = vmatprep.subr.mxu0 0.0
        %696 = vmatpush1.msra.mxu0 0.0
        %697 = vmatprep.subr.mxu0 0.0
        %698 = vmatpush1.msra.mxu0 0.0
        %699 = vmatprep.subr.mxu0 0.0
        %700 = vmatpush1.msra.mxu0 0.0
        %701 = vmatprep.subr.mxu0 0.0
        %702 = vmatpush1.msra.mxu0 0.0
        %703 = vmatprep.subr.mxu0 0.0
        %704 = vmatpush1.msra.mxu0 0.0
        %705 = vmatprep.subr.mxu0 0.0
        %706 = vmatpush1.msra.mxu0 0.0
        %707 = vmatprep.subr.mxu0 0.0
        %708 = vmatpush1.msra.mxu0 0.0
        %709 = vmatprep.subr.mxu0 0.0
        %710 = vmatpush1.msra.mxu0 0.0
        %711 = vmatprep.subr.mxu0 0.0
        %712 = vmatpush1.msra.mxu0 0.0
        %713 = vmatprep.mubr.f32.mxu0 0.0
        %714 = vmatmul.mubr.f32.gmra.mrb[0].mxu0 %v495
        %v715 = vpop.f32.mrb[0].mxu0
        %v716 = vadd.f32 0.0, %v715
        %v717 = vpop.f32.mrb[0].mxu0
        %718 = vmatprep.mubr.f32.mxu0 0.0
        %719 = vmatmul.mubr.f32.gmra.mrb[0].mxu0 %v498
        %v720 = vpop.f32.mrb[0].mxu0
        %v721 = vadd.f32 0.0, %v720
        %v722 = vpop.f32.mrb[0].mxu0
        %723 = vmatprep.mubr.f32.mxu0 0.0
        %724 = vmatmul.mubr.f32.gmra.mrb[0].mxu0 %v501
        %v725 = vpop.f32.mrb[0].mxu0
        %v726 = vadd.f32 0.0, %v725
        %v727 = vpop.f32.mrb[0].mxu0
        %728 = vmatprep.mubr.f32.mxu0 0.0
        %729 = vmatmul.mubr.f32.gmra.mrb[0].mxu0 %v504
        %v730 = vpop.f32.mrb[0].mxu0
        %v731 = vadd.f32 0.0, %v730
        %v732 = vpop.f32.mrb[0].mxu0
        %733 = vmatprep.mubr.f32.mxu0 0.0
        %734 = vmatmul.mubr.f32.gmra.mrb[0].mxu0 %v507
        %v735 = vpop.f32.mrb[0].mxu0
        %v736 = vadd.f32 0.0, %v735
        %v737 = vpop.f32.mrb[0].mxu0
        %738 = vmatprep.mubr.f32.mxu0 0.0
        %739 = vmatmul.mubr.f32.gmra.mrb[0].mxu0 %v510
        %v740 = vpop.f32.mrb[0].mxu0
        %v741 = vadd.f32 0.0, %v740
        %v742 = vpop.f32.mrb[0].mxu0
        %743 = vmatprep.mubr.f32.mxu0 0.0
        %744 = vmatmul.mubr.f32.gmra.mrb[0].mxu0 %v513
        %v745 = vpop.f32.mrb[0].mxu0
        %v746 = vadd.f32 0.0, %v745
        %v747 = vpop.f32.mrb[0].mxu0
        %748 = vmatprep.mubr.f32.mxu0 0.0
        %749 = vmatmul.mubr.f32.gmra.mrb[0].mxu0 %v516
        %v750 = vpop.f32.mrb[0].mxu0
        %v751 = vadd.f32 0.0, %v750
        %v752 = vpop.f32.mrb[0].mxu0
        %753 = vmatprep.mubr.f32.mxu0 0.0
        %754 = vmatmul.mubr.f32.gmra.mrb[0].mxu0 %v519
        %v755 = vpop.f32.mrb[0].mxu0
        %v756 = vadd.f32 0.0, %v755
        %v757 = vpop.f32.mrb[0].mxu0
        %758 = vmatprep.mubr.f32.mxu0 0.0
        %759 = vmatmul.mubr.f32.gmra.mrb[0].mxu0 %v522
        %v760 = vpop.f32.mrb[0].mxu0
        %v761 = vadd.f32 0.0, %v760
        %v762 = vpop.f32.mrb[0].mxu0
        %763 = vdwg.mxu0
        %v764 = vld [vmem:[%s6] sm:$0x1]
        %v765 = vmul.f32 %v764, 0.15811388
        %v767 = vlaneseq
        %v768 = vshrl.u32 %v767, 7
        %v769 = vsub.s32 0, %v768
        %v770 = vrot.slane %v765, %v769
        %v772 = vmul.f32 %v591, %v770
        %v773 = vmul.f32 %v597, %v770
        %v774 = vmul.f32 %v603, %v770
        %v775 = vmul.f32 %v609, %v770
        %v776 = vmul.f32 %v615, %v770
        %v777 = vmul.f32 %v621, %v770
        %v778 = vmul.f32 %v627, %v770
        %v779 = vmul.f32 %v633, %v770
        %v780 = vmul.f32 %v639, %v770
        %v781 = vmul.f32 %v645, %v770
        %v782 = vsel %vm493, %v772, -inf
        %783 = vmax.xlane.f32.xlu0 %v782
        %v784 = vpop.xlane.xlu0 %783
        %v785 = vsel %vm493, %v773, -inf
        %786 = vmax.xlane.f32.xlu0 %v785
        %v787 = vpop.xlane.xlu0 %786
        %v788 = vsel %vm493, %v774, -inf
        %789 = vmax.xlane.f32.xlu0 %v788
        %v790 = vpop.xlane.xlu0 %789
        %v791 = vsel %vm493, %v775, -inf
        %792 = vmax.xlane.f32.xlu0 %v791
        %v793 = vpop.xlane.xlu0 %792
        %v794 = vsel %vm493, %v776, -inf
        %795 = vmax.xlane.f32.xlu0 %v794
        %v796 = vpop.xlane.xlu0 %795
        %v797 = vsel %vm493, %v777, -inf
        %798 = vmax.xlane.f32.xlu0 %v797
        %v799 = vpop.xlane.xlu0 %798
        %v800 = vsel %vm493, %v778, -inf
        %801 = vmax.xlane.f32.xlu0 %v800
        %v802 = vpop.xlane.xlu0 %801
        %v803 = vsel %vm493, %v779, -inf
        %804 = vmax.xlane.f32.xlu0 %v803
        %v805 = vpop.xlane.xlu0 %804
        %v806 = vsel %vm493, %v780, -inf
        %807 = vmax.xlane.f32.xlu0 %v806
        %v808 = vpop.xlane.xlu0 %807
        %v809 = vsel %vm493, %v781, -inf
        %810 = vmax.xlane.f32.xlu0 %v809
        %v811 = vpop.xlane.xlu0 %810
        %v812 = vsub.f32 %v772, %v784
        %v813 = vsub.f32 %v773, %v787
        %v814 = vsub.f32 %v774, %v790
        %v815 = vsub.f32 %v775, %v793
        %v816 = vsub.f32 %v776, %v796
        %v817 = vsub.f32 %v777, %v799
        %v818 = vsub.f32 %v778, %v802
        %v819 = vsub.f32 %v779, %v805
        %v820 = vsub.f32 %v780, %v808
        %v821 = vsub.f32 %v781, %v811
        %v822 = vmul.f32 %v812, 1.442695
        %v823 = vpow.pop %v822
        %v824 = vmul.f32 %v813, 1.442695
        %v825 = vpow.pop %v824
        %v826 = vmul.f32 %v814, 1.442695
        %v827 = vpow.pop %v826
        %v828 = vmul.f32 %v815, 1.442695
        %v829 = vpow.pop %v828
        %v830 = vmul.f32 %v816, 1.442695
        %v831 = vpow.pop %v830
        %v832 = vmul.f32 %v817, 1.442695
        %v833 = vpow.pop %v832
        %v834 = vmul.f32 %v818, 1.442695
        %v835 = vpow.pop %v834
        %v836 = vmul.f32 %v819, 1.442695
        %v837 = vpow.pop %v836
        %v838 = vmul.f32 %v820, 1.442695
        %v839 = vpow.pop %v838
        %v840 = vmul.f32 %v821, 1.442695
        %v841 = vpow.pop %v840
        %v842 = vsel %vm493, %v823, 0.0
        %843 = vadd.xlane.f32.xlu0 %v842
        %v844 = vpop.xlane.xlu0 %843
        %v845 = vsel %vm493, %v825, 0.0
        %846 = vadd.xlane.f32.xlu0 %v845
        %v847 = vpop.xlane.xlu0 %846
        %v848 = vsel %vm493, %v827, 0.0
        %849 = vadd.xlane.f32.xlu0 %v848
        %v850 = vpop.xlane.xlu0 %849
        %v851 = vsel %vm493, %v829, 0.0
        %852 = vadd.xlane.f32.xlu0 %v851
        %v853 = vpop.xlane.xlu0 %852
        %v854 = vsel %vm493, %v831, 0.0
        %855 = vadd.xlane.f32.xlu0 %v854
        %v856 = vpop.xlane.xlu0 %855
        %v857 = vsel %vm493, %v833, 0.0
        %858 = vadd.xlane.f32.xlu0 %v857
        %v859 = vpop.xlane.xlu0 %858
        %v860 = vsel %vm493, %v835, 0.0
        %861 = vadd.xlane.f32.xlu0 %v860
        %v862 = vpop.xlane.xlu0 %861
        %v863 = vsel %vm493, %v837, 0.0
        %864 = vadd.xlane.f32.xlu0 %v863
        %v865 = vpop.xlane.xlu0 %864
        %v866 = vsel %vm493, %v839, 0.0
        %867 = vadd.xlane.f32.xlu0 %v866
        %v868 = vpop.xlane.xlu0 %867
        %v869 = vsel %vm493, %v841, 0.0
        %870 = vadd.xlane.f32.xlu0 %v869
        %v871 = vpop.xlane.xlu0 %870
        %v872 = vrcp.pop %v844
        %v873 = vrcp.pop %v847
        %v874 = vrcp.pop %v850
        %v875 = vrcp.pop %v853
        %v876 = vrcp.pop %v856
        %v877 = vrcp.pop %v859
        %v878 = vrcp.pop %v862
        %v879 = vrcp.pop %v865
        %v880 = vrcp.pop %v868
        %v881 = vrcp.pop %v871
        %v882 = vmul.f32 %v823, %v872
        %v883 = vmul.f32 %v825, %v873
        %v884 = vmul.f32 %v827, %v874
        %v885 = vmul.f32 %v829, %v875
        %v886 = vmul.f32 %v831, %v876
        %v887 = vmul.f32 %v833, %v877
        %v888 = vmul.f32 %v835, %v878
        %v889 = vmul.f32 %v837, %v879
        %v890 = vmul.f32 %v839, %v880
        %v891 = vmul.f32 %v841, %v881
        %v892 = vld [vmem:[%s10] sm:$0x3]
        %v893 = vmul.f32 %v882, %v591
        %v894 = vmul.f32 %v883, %v597
        %v895 = vmul.f32 %v884, %v603
        %v896 = vmul.f32 %v885, %v609
        %v897 = vmul.f32 %v886, %v615
        %v898 = vmul.f32 %v887, %v621
        %v899 = vmul.f32 %v888, %v627
        %v900 = vmul.f32 %v889, %v633
        %v901 = vmul.f32 %v890, %v639
        %v902 = vmul.f32 %v891, %v645
        %vm903 = vcmask 654336
        %v905 = vsel %vm903, %v892, 0
        %907 = vmatprep.subr.mxu0 0.0
        %908 = vmatpush1.msra.mxu0 %v893
        %909 = vmatprep.subr.mxu0 0.0
        %910 = vmatpush1.msra.mxu0 %v894
        %911 = vmatprep.subr.mxu0 0.0
        %912 = vmatpush1.msra.mxu0 %v895
        %913 = vmatprep.subr.mxu0 0.0
        %914 = vmatpush1.msra.mxu0 %v896
        %915 = vmatprep.subr.mxu0 0.0
        %916 = vmatpush1.msra.mxu0 %v897
        %917 = vmatprep.subr.mxu0 0.0
        %918 = vmatpush1.msra.mxu0 %v898
        %919 = vmatprep.subr.mxu0 0.0
        %920 = vmatpush1.msra.mxu0 %v899
        %921 = vmatprep.subr.mxu0 0.0
        %922 = vmatpush1.msra.mxu0 %v900
        %923 = vmatprep.subr.mxu0 0.0
        %924 = vmatpush1.msra.mxu0 %v901
        %925 = vmatprep.subr.mxu0 0.0
        %926 = vmatpush1.msra.mxu0 %v902
        %927 = vmatprep.subr.mxu0 0.0
        %928 = vmatpush1.msra.mxu0 0.0
        %929 = vmatprep.subr.mxu0 0.0
        %930 = vmatpush1.msra.mxu0 0.0
        %931 = vmatprep.subr.mxu0 0.0
        %932 = vmatpush1.msra.mxu0 0.0
        %933 = vmatprep.subr.mxu0 0.0
        %934 = vmatpush1.msra.mxu0 0.0
        %935 = vmatprep.subr.mxu0 0.0
        %936 = vmatpush1.msra.mxu0 0.0
        %937 = vmatprep.subr.mxu0 0.0
        %938 = vmatpush1.msra.mxu0 0.0
        %939 = vmatprep.subr.mxu0 0.0
        %940 = vmatpush1.msra.mxu0 0.0
        %941 = vmatprep.subr.mxu0 0.0
        %942 = vmatpush1.msra.mxu0 0.0
        %943 = vmatprep.subr.mxu0 0.0
        %944 = vmatpush1.msra.mxu0 0.0
        %945 = vmatprep.subr.mxu0 0.0
        %946 = vmatpush1.msra.mxu0 0.0
        %947 = vmatprep.subr.mxu0 0.0
        %948 = vmatpush1.msra.mxu0 0.0
        %949 = vmatprep.subr.mxu0 0.0
        %950 = vmatpush1.msra.mxu0 0.0
        %951 = vmatprep.subr.mxu0 0.0
        %952 = vmatpush1.msra.mxu0 0.0
        %953 = vmatprep.subr.mxu0 0.0
        %954 = vmatpush1.msra.mxu0 0.0
        %955 = vmatprep.subr.mxu0 0.0
        %956 = vmatpush1.msra.mxu0 0.0
        %957 = vmatprep.subr.mxu0 0.0
        %958 = vmatpush1.msra.mxu0 0.0
        %959 = vmatprep.subr.mxu0 0.0
        %960 = vmatpush1.msra.mxu0 0.0
        %961 = vmatprep.subr.mxu0 0.0
        %962 = vmatpush1.msra.mxu0 0.0
        %963 = vmatprep.subr.mxu0 0.0
        %964 = vmatpush1.msra.mxu0 0.0
        %965 = vmatprep.subr.mxu0 0.0
        %966 = vmatpush1.msra.mxu0 0.0
        %967 = vmatprep.subr.mxu0 0.0
        %968 = vmatpush1.msra.mxu0 0.0
        %969 = vmatprep.subr.mxu0 0.0
        %970 = vmatpush1.msra.mxu0 0.0
        %971 = vmatprep.mubr.f32.mxu0 0.0
        %972 = vmatmul.mubr.f32.gmra.mrb[0].mxu0 %v905
        %v973 = vpop.f32.mrb[0].mxu0
        %v974 = vadd.f32 0.0, %v973
        %v975 = vpop.f32.mrb[0].mxu0
        %976 = vdwg.mxu0
        %977 = vmatprep.subr.mxu0 0.0
        %978 = vmatpush1.msra.mxu0 %v593
        %979 = vmatprep.subr.mxu0 0.0
        %980 = vmatpush1.msra.mxu0 %v599
        %981 = vmatprep.subr.mxu0 0.0
        %982 = vmatpush1.msra.mxu0 %v605
        %983 = vmatprep.subr.mxu0 0.0
        %984 = vmatpush1.msra.mxu0 %v611
        %985 = vmatprep.subr.mxu0 0.0
        %986 = vmatpush1.msra.mxu0 %v617
        %987 = vmatprep.subr.mxu0 0.0
        %988 = vmatpush1.msra.mxu0 %v623
        %989 = vmatprep.subr.mxu0 0.0
        %990 = vmatpush1.msra.mxu0 %v629
        %991 = vmatprep.subr.mxu0 0.0
        %992 = vmatpush1.msra.mxu0 %v635
        %993 = vmatprep.subr.mxu0 0.0
        %994 = vmatpush1.msra.mxu0 %v641
        %995 = vmatprep.subr.mxu0 0.0
        %996 = vmatpush1.msra.mxu0 %v647
        %997 = vmatprep.subr.mxu0 0.0
        %998 = vmatpush1.msra.mxu0 0.0
        %999 = vmatprep.subr.mxu0 0.0
        %1000 = vmatpush1.msra.mxu0 0.0
        %1001 = vmatprep.subr.mxu0 0.0
        %1002 = vmatpush1.msra.mxu0 0.0
        %1003 = vmatprep.subr.mxu0 0.0
        %1004 = vmatpush1.msra.mxu0 0.0
        %1005 = vmatprep.subr.mxu0 0.0
        %1006 = vmatpush1.msra.mxu0 0.0
        %1007 = vmatprep.subr.mxu0 0.0
        %1008 = vmatpush1.msra.mxu0 0.0
        %1009 = vmatprep.subr.mxu0 0.0
        %1010 = vmatpush1.msra.mxu0 0.0
        %1011 = vmatprep.subr.mxu0 0.0
        %1012 = vmatpush1.msra.mxu0 0.0
        %1013 = vmatprep.subr.mxu0 0.0
        %1014 = vmatpush1.msra.mxu0 0.0
        %1015 = vmatprep.subr.mxu0 0.0
        %1016 = vmatpush1.msra.mxu0 0.0
        %1017 = vmatprep.subr.mxu0 0.0
        %1018 = vmatpush1.msra.mxu0 0.0
        %1019 = vmatprep.subr.mxu0 0.0
        %1020 = vmatpush1.msra.mxu0 0.0
        %1021 = vmatprep.subr.mxu0 0.0
        %1022 = vmatpush1.msra.mxu0 0.0
        %1023 = vmatprep.subr.mxu0 0.0
        %1024 = vmatpush1.msra.mxu0 0.0
        %1025 = vmatprep.subr.mxu0 0.0
        %1026 = vmatpush1.msra.mxu0 0.0
        %1027 = vmatprep.subr.mxu0 0.0
        %1028 = vmatpush1.msra.mxu0 0.0
        %1029 = vmatprep.subr.mxu0 0.0
        %1030 = vmatpush1.msra.mxu0 0.0
        %1031 = vmatprep.subr.mxu0 0.0
        %1032 = vmatpush1.msra.mxu0 0.0
        %1033 = vmatprep.subr.mxu0 0.0
        %1034 = vmatpush1.msra.mxu0 0.0
        %1035 = vmatprep.subr.mxu0 0.0
        %1036 = vmatpush1.msra.mxu0 0.0
        %1037 = vmatprep.subr.mxu0 0.0
        %1038 = vmatpush1.msra.mxu0 0.0
        %1039 = vmatprep.subr.mxu0 0.0
        %1040 = vmatpush1.msra.mxu0 0.0
        %1041 = vmatprep.mubr.f32.mxu0 0.0
        %1042 = vmatmul.mubr.f32.gmra.mrb[0].mxu0 %v905
        %v1043 = vpop.f32.mrb[0].mxu0
        %v1044 = vadd.f32 0.0, %v1043
        %v1045 = vpop.f32.mrb[0].mxu0
        %1046 = vdwg.mxu0
        %v1047 = vmul.f32 %v593, %v593
        %v1048 = vmul.f32 %v599, %v599
        %v1049 = vmul.f32 %v605, %v605
        %v1050 = vmul.f32 %v611, %v611
        %v1051 = vmul.f32 %v617, %v617
        %v1052 = vmul.f32 %v623, %v623
        %v1053 = vmul.f32 %v629, %v629
        %v1054 = vmul.f32 %v635, %v635
        %v1055 = vmul.f32 %v641, %v641
        %v1056 = vmul.f32 %v647, %v647
        %1057 = vmatprep.subr.mxu0 0.0
        %1058 = vmatpush1.msra.mxu0 %v1047
        %1059 = vmatprep.subr.mxu0 0.0
        %1060 = vmatpush1.msra.mxu0 %v1048
        %1061 = vmatprep.subr.mxu0 0.0
        %1062 = vmatpush1.msra.mxu0 %v1049
        %1063 = vmatprep.subr.mxu0 0.0
        %1064 = vmatpush1.msra.mxu0 %v1050
        %1065 = vmatprep.subr.mxu0 0.0
        %1066 = vmatpush1.msra.mxu0 %v1051
        %1067 = vmatprep.subr.mxu0 0.0
        %1068 = vmatpush1.msra.mxu0 %v1052
        %1069 = vmatprep.subr.mxu0 0.0
        %1070 = vmatpush1.msra.mxu0 %v1053
        %1071 = vmatprep.subr.mxu0 0.0
        %1072 = vmatpush1.msra.mxu0 %v1054
        %1073 = vmatprep.subr.mxu0 0.0
        %1074 = vmatpush1.msra.mxu0 %v1055
        %1075 = vmatprep.subr.mxu0 0.0
        %1076 = vmatpush1.msra.mxu0 %v1056
        %1077 = vmatprep.subr.mxu0 0.0
        %1078 = vmatpush1.msra.mxu0 0.0
        %1079 = vmatprep.subr.mxu0 0.0
        %1080 = vmatpush1.msra.mxu0 0.0
        %1081 = vmatprep.subr.mxu0 0.0
        %1082 = vmatpush1.msra.mxu0 0.0
        %1083 = vmatprep.subr.mxu0 0.0
        %1084 = vmatpush1.msra.mxu0 0.0
        %1085 = vmatprep.subr.mxu0 0.0
        %1086 = vmatpush1.msra.mxu0 0.0
        %1087 = vmatprep.subr.mxu0 0.0
        %1088 = vmatpush1.msra.mxu0 0.0
        %1089 = vmatprep.subr.mxu0 0.0
        %1090 = vmatpush1.msra.mxu0 0.0
        %1091 = vmatprep.subr.mxu0 0.0
        %1092 = vmatpush1.msra.mxu0 0.0
        %1093 = vmatprep.subr.mxu0 0.0
        %1094 = vmatpush1.msra.mxu0 0.0
        %1095 = vmatprep.subr.mxu0 0.0
        %1096 = vmatpush1.msra.mxu0 0.0
        %1097 = vmatprep.subr.mxu0 0.0
        %1098 = vmatpush1.msra.mxu0 0.0
        %1099 = vmatprep.subr.mxu0 0.0
        %1100 = vmatpush1.msra.mxu0 0.0
        %1101 = vmatprep.subr.mxu0 0.0
        %1102 = vmatpush1.msra.mxu0 0.0
        %1103 = vmatprep.subr.mxu0 0.0
        %1104 = vmatpush1.msra.mxu0 0.0
        %1105 = vmatprep.subr.mxu0 0.0
        %1106 = vmatpush1.msra.mxu0 0.0
        %1107 = vmatprep.subr.mxu0 0.0
        %1108 = vmatpush1.msra.mxu0 0.0
        %1109 = vmatprep.subr.mxu0 0.0
        %1110 = vmatpush1.msra.mxu0 0.0
        %1111 = vmatprep.subr.mxu0 0.0
        %1112 = vmatpush1.msra.mxu0 0.0
        %1113 = vmatprep.subr.mxu0 0.0
        %1114 = vmatpush1.msra.mxu0 0.0
        %1115 = vmatprep.subr.mxu0 0.0
        %1116 = vmatpush1.msra.mxu0 0.0
        %1117 = vmatprep.subr.mxu0 0.0
        %1118 = vmatpush1.msra.mxu0 0.0
        %1119 = vmatprep.subr.mxu0 0.0
        %1120 = vmatpush1.msra.mxu0 0.0
        %1121 = vmatprep.mubr.f32.mxu0 0.0
        %1122 = vmatmul.mubr.f32.gmra.mrb[0].mxu0 %v905
        %v1123 = vpop.f32.mrb[0].mxu0
        %v1124 = vadd.f32 0.0, %v1123
        %v1125 = vpop.f32.mrb[0].mxu0
        %1126 = vdwg.mxu0
        %v1127 = vld [vmem:[%s7] sm:$0x1]
        %v1128 = vmul.f32 %v1127, 0.15811388
        %v1129 = vmul.f32 %v974, %v1044
        %v1130 = vmul.f32 %v974, %v974
        %v1131 = vmul.f32 %v1130, %v1124
        %v1133 = vsel %vm493, %v593, 0
        %v1136 = vsel %vm493, %v599, 0
        %v1139 = vsel %vm493, %v605, 0
        %v1142 = vsel %vm493, %v611, 0
        %v1145 = vsel %vm493, %v617, 0
        %1147 = vmatprep.subr.mxu0 0.0
        %1148 = vmatpush1.msra.mxu0 %v716
        %1149 = vmatprep.subr.mxu0 0.0
        %1150 = vmatpush1.msra.mxu0 %v721
        %1151 = vmatprep.subr.mxu0 0.0
        %1152 = vmatpush1.msra.mxu0 %v726
        %1153 = vmatprep.subr.mxu0 0.0
        %1154 = vmatpush1.msra.mxu0 %v731
        %1155 = vmatprep.subr.mxu0 0.0
        %1156 = vmatpush1.msra.mxu0 %v736
        %1157 = vmatprep.subr.mxu0 0.0
        %1158 = vmatpush1.msra.mxu0 0.0
        %1159 = vmatprep.subr.mxu0 0.0
        %1160 = vmatpush1.msra.mxu0 0.0
        %1161 = vmatprep.subr.mxu0 0.0
        %1162 = vmatpush1.msra.mxu0 0.0
        %1163 = vmatprep.subr.mxu0 0.0
        %1164 = vmatpush1.msra.mxu0 0.0
        %1165 = vmatprep.subr.mxu0 0.0
        %1166 = vmatpush1.msra.mxu0 0.0
        %1167 = vmatprep.subr.mxu0 0.0
        %1168 = vmatpush1.msra.mxu0 0.0
        %1169 = vmatprep.subr.mxu0 0.0
        %1170 = vmatpush1.msra.mxu0 0.0
        %1171 = vmatprep.subr.mxu0 0.0
        %1172 = vmatpush1.msra.mxu0 0.0
        %1173 = vmatprep.subr.mxu0 0.0
        %1174 = vmatpush1.msra.mxu0 0.0
        %1175 = vmatprep.subr.mxu0 0.0
        %1176 = vmatpush1.msra.mxu0 0.0
        %1177 = vmatprep.subr.mxu0 0.0
        %1178 = vmatpush1.msra.mxu0 0.0
        %1179 = vmatprep.subr.mxu0 0.0
        %1180 = vmatpush1.msra.mxu0 0.0
        %1181 = vmatprep.subr.mxu0 0.0
        %1182 = vmatpush1.msra.mxu0 0.0
        %1183 = vmatprep.subr.mxu0 0.0
        %1184 = vmatpush1.msra.mxu0 0.0
        %1185 = vmatprep.subr.mxu0 0.0
        %1186 = vmatpush1.msra.mxu0 0.0
        %1187 = vmatprep.subr.mxu0 0.0
        %1188 = vmatpush1.msra.mxu0 0.0
        %1189 = vmatprep.subr.mxu0 0.0
        %1190 = vmatpush1.msra.mxu0 0.0
        %1191 = vmatprep.subr.mxu0 0.0
        %1192 = vmatpush1.msra.mxu0 0.0
        %1193 = vmatprep.subr.mxu0 0.0
        %1194 = vmatpush1.msra.mxu0 0.0
        %1195 = vmatprep.subr.mxu0 0.0
        %1196 = vmatpush1.msra.mxu0 0.0
        %1197 = vmatprep.subr.mxu0 0.0
        %1198 = vmatpush1.msra.mxu0 0.0
        %1199 = vmatprep.subr.mxu0 0.0
        %1200 = vmatpush1.msra.mxu0 0.0
        %1201 = vmatprep.subr.mxu0 0.0
        %1202 = vmatpush1.msra.mxu0 0.0
        %1203 = vmatprep.subr.mxu0 0.0
        %1204 = vmatpush1.msra.mxu0 0.0
        %1205 = vmatprep.subr.mxu0 0.0
        %1206 = vmatpush1.msra.mxu0 0.0
        %1207 = vmatprep.subr.mxu0 0.0
        %1208 = vmatpush1.msra.mxu0 0.0
        %1209 = vmatprep.subr.mxu0 0.0
        %1210 = vmatpush1.msra.mxu0 0.0
        %1211 = vmatprep.mubr.f32.mxu0 0.0
        %1212 = vmatmul.mubr.f32.gmra.mrb[0].mxu0 %v1133
        %v1213 = vpop.f32.mrb[0].mxu0
        %v1214 = vadd.f32 0.0, %v1213
        %v1215 = vpop.f32.mrb[0].mxu0
        %1216 = vmatprep.mubr.f32.mxu0 0.0
        %1217 = vmatmul.mubr.f32.gmra.mrb[0].mxu0 %v1136
        %v1218 = vpop.f32.mrb[0].mxu0
        %v1219 = vadd.f32 0.0, %v1218
        %v1220 = vpop.f32.mrb[0].mxu0
        %1221 = vmatprep.mubr.f32.mxu0 0.0
        %1222 = vmatmul.mubr.f32.gmra.mrb[0].mxu0 %v1139
        %v1223 = vpop.f32.mrb[0].mxu0
        %v1224 = vadd.f32 0.0, %v1223
        %v1225 = vpop.f32.mrb[0].mxu0
        %1226 = vmatprep.mubr.f32.mxu0 0.0
        %1227 = vmatmul.mubr.f32.gmra.mrb[0].mxu0 %v1142
        %v1228 = vpop.f32.mrb[0].mxu0
        %v1229 = vadd.f32 0.0, %v1228
        %v1230 = vpop.f32.mrb[0].mxu0
        %1231 = vmatprep.mubr.f32.mxu0 0.0
        %1232 = vmatmul.mubr.f32.gmra.mrb[0].mxu0 %v1145
        %v1233 = vpop.f32.mrb[0].mxu0
        %v1234 = vadd.f32 0.0, %v1233
        %v1235 = vpop.f32.mrb[0].mxu0
        %1236 = vdwg.mxu0
        %v1238 = vsel %vm493, %v623, 0
        %v1241 = vsel %vm493, %v629, 0
        %v1244 = vsel %vm493, %v635, 0
        %v1247 = vsel %vm493, %v641, 0
        %v1250 = vsel %vm493, %v647, 0
        %1252 = vmatprep.subr.mxu0 0.0
        %1253 = vmatpush1.msra.mxu0 %v741
        %1254 = vmatprep.subr.mxu0 0.0
        %1255 = vmatpush1.msra.mxu0 %v746
        %1256 = vmatprep.subr.mxu0 0.0
        %1257 = vmatpush1.msra.mxu0 %v751
        %1258 = vmatprep.subr.mxu0 0.0
        %1259 = vmatpush1.msra.mxu0 %v756
        %1260 = vmatprep.subr.mxu0 0.0
        %1261 = vmatpush1.msra.mxu0 %v761
        %1262 = vmatprep.subr.mxu0 0.0
        %1263 = vmatpush1.msra.mxu0 0.0
        %1264 = vmatprep.subr.mxu0 0.0
        %1265 = vmatpush1.msra.mxu0 0.0
        %1266 = vmatprep.subr.mxu0 0.0
        %1267 = vmatpush1.msra.mxu0 0.0
        %1268 = vmatprep.subr.mxu0 0.0
        %1269 = vmatpush1.msra.mxu0 0.0
        %1270 = vmatprep.subr.mxu0 0.0
        %1271 = vmatpush1.msra.mxu0 0.0
        %1272 = vmatprep.subr.mxu0 0.0
        %1273 = vmatpush1.msra.mxu0 0.0
        %1274 = vmatprep.subr.mxu0 0.0
        %1275 = vmatpush1.msra.mxu0 0.0
        %1276 = vmatprep.subr.mxu0 0.0
        %1277 = vmatpush1.msra.mxu0 0.0
        %1278 = vmatprep.subr.mxu0 0.0
        %1279 = vmatpush1.msra.mxu0 0.0
        %1280 = vmatprep.subr.mxu0 0.0
        %1281 = vmatpush1.msra.mxu0 0.0
        %1282 = vmatprep.subr.mxu0 0.0
        %1283 = vmatpush1.msra.mxu0 0.0
        %1284 = vmatprep.subr.mxu0 0.0
        %1285 = vmatpush1.msra.mxu0 0.0
        %1286 = vmatprep.subr.mxu0 0.0
        %1287 = vmatpush1.msra.mxu0 0.0
        %1288 = vmatprep.subr.mxu0 0.0
        %1289 = vmatpush1.msra.mxu0 0.0
        %1290 = vmatprep.subr.mxu0 0.0
        %1291 = vmatpush1.msra.mxu0 0.0
        %1292 = vmatprep.subr.mxu0 0.0
        %1293 = vmatpush1.msra.mxu0 0.0
        %1294 = vmatprep.subr.mxu0 0.0
        %1295 = vmatpush1.msra.mxu0 0.0
        %1296 = vmatprep.subr.mxu0 0.0
        %1297 = vmatpush1.msra.mxu0 0.0
        %1298 = vmatprep.subr.mxu0 0.0
        %1299 = vmatpush1.msra.mxu0 0.0
        %1300 = vmatprep.subr.mxu0 0.0
        %1301 = vmatpush1.msra.mxu0 0.0
        %1302 = vmatprep.subr.mxu0 0.0
        %1303 = vmatpush1.msra.mxu0 0.0
        %1304 = vmatprep.subr.mxu0 0.0
        %1305 = vmatpush1.msra.mxu0 0.0
        %1306 = vmatprep.subr.mxu0 0.0
        %1307 = vmatpush1.msra.mxu0 0.0
        %1308 = vmatprep.subr.mxu0 0.0
        %1309 = vmatpush1.msra.mxu0 0.0
        %1310 = vmatprep.subr.mxu0 0.0
        %1311 = vmatpush1.msra.mxu0 0.0
        %1312 = vmatprep.subr.mxu0 0.0
        %1313 = vmatpush1.msra.mxu0 0.0
        %1314 = vmatprep.subr.mxu0 0.0
        %1315 = vmatpush1.msra.mxu0 0.0
        %1316 = vmatprep.mubr.f32.mxu0 0.0
        %1317 = vmatmul.mubr.f32.gmra.mrb[0].mxu0 %v1238
        %v1318 = vpop.f32.mrb[0].mxu0
        %v1319 = vadd.f32 0.0, %v1318
        %v1320 = vpop.f32.mrb[0].mxu0
        %1321 = vmatprep.mubr.f32.mxu0 0.0
        %1322 = vmatmul.mubr.f32.gmra.mrb[0].mxu0 %v1241
        %v1323 = vpop.f32.mrb[0].mxu0
        %v1324 = vadd.f32 0.0, %v1323
        %v1325 = vpop.f32.mrb[0].mxu0
        %1326 = vmatprep.mubr.f32.mxu0 0.0
        %1327 = vmatmul.mubr.f32.gmra.mrb[0].mxu0 %v1244
        %v1328 = vpop.f32.mrb[0].mxu0
        %v1329 = vadd.f32 0.0, %v1328
        %v1330 = vpop.f32.mrb[0].mxu0
        %1331 = vmatprep.mubr.f32.mxu0 0.0
        %1332 = vmatmul.mubr.f32.gmra.mrb[0].mxu0 %v1247
        %v1333 = vpop.f32.mrb[0].mxu0
        %v1334 = vadd.f32 0.0, %v1333
        %v1335 = vpop.f32.mrb[0].mxu0
        %1336 = vmatprep.mubr.f32.mxu0 0.0
        %1337 = vmatmul.mubr.f32.gmra.mrb[0].mxu0 %v1250
        %v1338 = vpop.f32.mrb[0].mxu0
        %v1339 = vadd.f32 0.0, %v1338
        %v1340 = vpop.f32.mrb[0].mxu0
        %1341 = vdwg.mxu0
        %1342 = vst.msk [vmem:[#allocation3] sm:$0xff] %vm493, %v1214
        %1343 = vst.msk [vmem:[#allocation3 + $0x8] sm:$0xff] %vm493, %v1219
        %1344 = vst.msk [vmem:[#allocation3 + $0x10] sm:$0xff] %vm493, %v1224
        %1345 = vst.msk [vmem:[#allocation3 + $0x18] sm:$0xff] %vm493, %v1229
        %1346 = vst.msk [vmem:[#allocation3 + $0x20] sm:$0xff] %vm493, %v1234
        %1347 = vst.msk [vmem:[#allocation3 + $0x28] sm:$0xff] %vm493, %v1319
        %1348 = vst.msk [vmem:[#allocation3 + $0x30] sm:$0xff] %vm493, %v1324
        %1349 = vst.msk [vmem:[#allocation3 + $0x38] sm:$0xff] %vm493, %v1329
        %1350 = vst.msk [vmem:[#allocation3 + $0x40] sm:$0xff] %vm493, %v1334
        %1351 = vst.msk [vmem:[#allocation3 + $0x48] sm:$0xff] %vm493, %v1339
        %1352 = vst.msk [vmem:[#allocation4] sm:$0xff] %vm493, %v591
        %1353 = vst.msk [vmem:[#allocation4 + $0x8] sm:$0xff] %vm493, %v597
        %1354 = vst.msk [vmem:[#allocation4 + $0x10] sm:$0xff] %vm493, %v603
        %1355 = vst.msk [vmem:[#allocation4 + $0x18] sm:$0xff] %vm493, %v609
        %1356 = vst.msk [vmem:[#allocation4 + $0x20] sm:$0xff] %vm493, %v615
        %1357 = vst.msk [vmem:[#allocation4 + $0x28] sm:$0xff] %vm493, %v621
        %1358 = vst.msk [vmem:[#allocation4 + $0x30] sm:$0xff] %vm493, %v627
        %1359 = vst.msk [vmem:[#allocation4 + $0x38] sm:$0xff] %vm493, %v633
        %1360 = vst.msk [vmem:[#allocation4 + $0x40] sm:$0xff] %vm493, %v639
        %1361 = vst.msk [vmem:[#allocation4 + $0x48] sm:$0xff] %vm493, %v645
        %1362 = vst.msk [vmem:[#allocation5] sm:$0xff] %vm493, %v716
        %1363 = vst.msk [vmem:[#allocation5 + $0x8] sm:$0xff] %vm493, %v721
        %1364 = vst.msk [vmem:[#allocation5 + $0x10] sm:$0xff] %vm493, %v726
        %1365 = vst.msk [vmem:[#allocation5 + $0x18] sm:$0xff] %vm493, %v731
        %1366 = vst.msk [vmem:[#allocation5 + $0x20] sm:$0xff] %vm493, %v736
        %1367 = vst.msk [vmem:[#allocation5 + $0x28] sm:$0xff] %vm493, %v741
        %1368 = vst.msk [vmem:[#allocation5 + $0x30] sm:$0xff] %vm493, %v746
        %1369 = vst.msk [vmem:[#allocation5 + $0x38] sm:$0xff] %vm493, %v751
        %1370 = vst.msk [vmem:[#allocation5 + $0x40] sm:$0xff] %vm493, %v756
        %1371 = vst.msk [vmem:[#allocation5 + $0x48] sm:$0xff] %vm493, %v761
        %1372 = vxpose.xlu0.b32.start [1/16] %v974, 128
        %1373 = vxpose.xlu0.b32.cont [2/16] 0.0, 128
        %1374 = vxpose.xlu0.b32.cont [3/16] 0.0, 128
        %1375 = vxpose.xlu0.b32.cont [4/16] 0.0, 128
        %1376 = vxpose.xlu0.b32.cont [5/16] 0.0, 128
        %1377 = vxpose.xlu0.b32.cont [6/16] 0.0, 128
        %1378 = vxpose.xlu0.b32.cont [7/16] 0.0, 128
        %1379 = vxpose.xlu0.b32.cont [8/16] 0.0, 128
        %1380 = vxpose.xlu0.b32.cont [9/16] 0.0, 128
        %1381 = vxpose.xlu0.b32.cont [10/16] 0.0, 128
        %1382 = vxpose.xlu0.b32.cont [11/16] 0.0, 128
        %1383 = vxpose.xlu0.b32.cont [12/16] 0.0, 128
        %1384 = vxpose.xlu0.b32.cont [13/16] 0.0, 128
        %1385 = vxpose.xlu0.b32.cont [14/16] 0.0, 128
        %1386 = vxpose.xlu0.b32.cont [15/16] 0.0, 128
        %1387 = vxpose.xlu0.b32.end [16/16] 0.0, 128
        %v1388 = vpop.trf.xlu0
        %v1389 = vpop.trf.xlu0
        %v1390 = vpop.trf.xlu0
        %v1391 = vpop.trf.xlu0
        %v1392 = vpop.trf.xlu0
        %v1393 = vpop.trf.xlu0
        %v1394 = vpop.trf.xlu0
        %v1395 = vpop.trf.xlu0
        %v1396 = vpop.trf.xlu0
        %v1397 = vpop.trf.xlu0
        %v1398 = vpop.trf.xlu0
        %v1399 = vpop.trf.xlu0
        %v1400 = vpop.trf.xlu0
        %v1401 = vpop.trf.xlu0
        %v1402 = vpop.trf.xlu0
        %v1403 = vpop.trf.xlu0
        %v1404 = vlaneseq
        %v1405 = vand.u32 %v1404, 127
        %v1406 = vlaneseq
        %v1407 = vshrl.u32 %v1406, 7
        %v1408 = vld [vmem:[#allocation2] sm:$0xff]
        %v1409 = vld [vmem:[#allocation2 + $0x8] sm:$0xff]
        %v1410 = vld [vmem:[#allocation2 + $0x10] sm:$0xff]
        %v1411 = vld [vmem:[#allocation2 + $0x18] sm:$0xff]
        %v1412 = vld [vmem:[#allocation2 + $0x20] sm:$0xff]
        %v1413 = vld [vmem:[#allocation3] sm:$0xff]
        %v1414 = vld [vmem:[#allocation3 + $0x8] sm:$0xff]
        %v1415 = vld [vmem:[#allocation3 + $0x10] sm:$0xff]
        %v1416 = vld [vmem:[#allocation3 + $0x18] sm:$0xff]
        %v1417 = vld [vmem:[#allocation3 + $0x20] sm:$0xff]
        %v1418 = vmul.f32 %v1408, 0.28084624
        %v1419 = vmul.f32 %v1409, 0.28084624
        %v1420 = vmul.f32 %v1410, 0.28084624
        %v1421 = vmul.f32 %v1411, 0.28084624
        %v1422 = vmul.f32 %v1412, 0.28084624
        %v1423 = vadd.f32 %v1413, %v1418
        %v1424 = vadd.f32 %v1414, %v1419
        %v1425 = vadd.f32 %v1415, %v1420
        %v1426 = vadd.f32 %v1416, %v1421
        %v1427 = vadd.f32 %v1417, %v1422
        %vm1428 = vcmp.eq.s32.totalorder %v1405, 0
        %v1429 = vsel %vm1428, %v1388, 0.0
        %v1430 = vsel %vm1428, %v1389, 0.0
        %v1431 = vsel %vm1428, %v1390, 0.0
        %v1432 = vsel %vm1428, %v1391, 0.0
        %v1433 = vsel %vm1428, %v1392, 0.0
        %vm1434 = vcmask 15360
        %v1435 = vsel %vm1434, %v1429, 0.0
        %1436 = vadd.xlane.f32.xlu0 %v1435
        %v1437 = vpop.xlane.xlu0 %1436
        %v1438 = vsel %vm1434, %v1430, 0.0
        %1439 = vadd.xlane.f32.xlu0 %v1438
        %v1440 = vpop.xlane.xlu0 %1439
        %v1441 = vsel %vm1434, %v1431, 0.0
        %1442 = vadd.xlane.f32.xlu0 %v1441
        %v1443 = vpop.xlane.xlu0 %1442
        %v1444 = vsel %vm1434, %v1432, 0.0
        %1445 = vadd.xlane.f32.xlu0 %v1444
        %v1446 = vpop.xlane.xlu0 %1445
        %v1447 = vsel %vm1434, %v1433, 0.0
        %1448 = vadd.xlane.f32.xlu0 %v1447
        %v1449 = vpop.xlane.xlu0 %1448
        %v1450 = vmul.f32 %v1437, %v1423
        %v1451 = vmul.f32 %v1440, %v1424
        %v1452 = vmul.f32 %v1443, %v1425
        %v1453 = vmul.f32 %v1446, %v1426
        %v1454 = vmul.f32 %v1449, %v1427
        %v1455 = vsel %vm493, %v1450, 0.0
        %v1456 = vsel %vm493, %v1451, 0.0
        %v1457 = vadd.f32 %v1455, %v1456
        %v1458 = vsel %vm493, %v1452, 0.0
        %v1459 = vadd.f32 %v1457, %v1458
        %v1460 = vsel %vm493, %v1453, 0.0
        %v1461 = vadd.f32 %v1459, %v1460
        %v1462 = vsel %vm493, %v1454, 0.0
        %v1463 = vadd.f32 %v1461, %v1462
        %v1464 = vrot.slane %v1463, 4
        %v1465 = vadd.f32 %v1463, %v1464
        %v1466 = vrot.slane %v1465, 2
        %v1467 = vadd.f32 %v1465, %v1466
        %v1468 = vrot.slane %v1467, 1
        %v1469 = vadd.f32 %v1467, %v1468
        %s1470 = smul.u32 %s25, 2
        %s1471 = sld [smem:[#allocation6 + %s1470]]
        %vm1472 = vcmp.eq.s32.totalorder %v1407, 0
        %v1473 = vsel %vm1472, 1, 0
        %v1474 = vcvt.s32.f32 %v1473
        %v1475 = vstv %s1471
        %v1476 = vmul.f32 %v1469, %v1475
        %v1477 = vmul.f32 %v1474, %v1476
        %v1478 = vadd.f32 %v1477, 0.0
        %s1479 = scalar_lea.vmem [#allocation3], 40
        %v1480 = vld [vmem:[%s1479] sm:$0xff]
        %v1481 = vld [vmem:[%s1479 + $0x8] sm:$0xff]
        %v1482 = vld [vmem:[%s1479 + $0x10] sm:$0xff]
        %v1483 = vld [vmem:[%s1479 + $0x18] sm:$0xff]
        %v1484 = vld [vmem:[%s1479 + $0x20] sm:$0xff]
        %v1485 = vmul.f32 %v1423, 0.28084624
        %v1486 = vmul.f32 %v1424, 0.28084624
        %v1487 = vmul.f32 %v1425, 0.28084624
        %v1488 = vmul.f32 %v1426, 0.28084624
        %v1489 = vmul.f32 %v1427, 0.28084624
        %v1490 = vadd.f32 %v1480, %v1485
        %v1491 = vadd.f32 %v1481, %v1486
        %v1492 = vadd.f32 %v1482, %v1487
        %v1493 = vadd.f32 %v1483, %v1488
        %v1494 = vadd.f32 %v1484, %v1489
        %vm1495 = vcmp.eq.s32.totalorder %v1405, 1
        %v1496 = vsel %vm1495, %v1388, 0.0
        %v1497 = vsel %vm1495, %v1389, 0.0
        %v1498 = vsel %vm1495, %v1390, 0.0
        %v1499 = vsel %vm1495, %v1391, 0.0
        %v1500 = vsel %vm1495, %v1392, 0.0
        %v1501 = vsel %vm1434, %v1496, 0.0
        %1502 = vadd.xlane.f32.xlu0 %v1501
        %v1503 = vpop.xlane.xlu0 %1502
        %v1504 = vsel %vm1434, %v1497, 0.0
        %1505 = vadd.xlane.f32.xlu0 %v1504
        %v1506 = vpop.xlane.xlu0 %1505
        %v1507 = vsel %vm1434, %v1498, 0.0
        %1508 = vadd.xlane.f32.xlu0 %v1507
        %v1509 = vpop.xlane.xlu0 %1508
        %v1510 = vsel %vm1434, %v1499, 0.0
        %1511 = vadd.xlane.f32.xlu0 %v1510
        %v1512 = vpop.xlane.xlu0 %1511
        %v1513 = vsel %vm1434, %v1500, 0.0
        %1514 = vadd.xlane.f32.xlu0 %v1513
        %v1515 = vpop.xlane.xlu0 %1514
        %v1516 = vmul.f32 %v1503, %v1490
        %v1517 = vmul.f32 %v1506, %v1491
        %v1518 = vmul.f32 %v1509, %v1492
        %v1519 = vmul.f32 %v1512, %v1493
        %v1520 = vmul.f32 %v1515, %v1494
        %v1521 = vsel %vm493, %v1516, 0.0
        %v1522 = vsel %vm493, %v1517, 0.0
        %v1523 = vadd.f32 %v1521, %v1522
        %v1524 = vsel %vm493, %v1518, 0.0
        %v1525 = vadd.f32 %v1523, %v1524
        %v1526 = vsel %vm493, %v1519, 0.0
        %v1527 = vadd.f32 %v1525, %v1526
        %v1528 = vsel %vm493, %v1520, 0.0
        %v1529 = vadd.f32 %v1527, %v1528
        %v1530 = vrot.slane %v1529, 4
        %v1531 = vadd.f32 %v1529, %v1530
        %v1532 = vrot.slane %v1531, 2
        %v1533 = vadd.f32 %v1531, %v1532
        %v1534 = vrot.slane %v1533, 1
        %v1535 = vadd.f32 %v1533, %v1534
        %s1536 = sadd.s32 %s1470, 1
        %s1537 = sld [smem:[#allocation6 + %s1536]]
        %vm1538 = vcmp.eq.s32.totalorder %v1407, 1
        %v1539 = vsel %vm1538, 1, 0
        %v1540 = vcvt.s32.f32 %v1539
        %v1541 = vstv %s1537
        %v1542 = vmul.f32 %v1535, %v1541
        %v1543 = vmul.f32 %v1540, %v1542
        %v1544 = vadd.f32 %v1478, %v1543
        %1545 = vst.msk [vmem:[#allocation2] sm:$0xff] %vm493, %v1490
        %1546 = vst.msk [vmem:[#allocation2 + $0x8] sm:$0xff] %vm493, %v1491
        %1547 = vst.msk [vmem:[#allocation2 + $0x10] sm:$0xff] %vm493, %v1492
        %1548 = vst.msk [vmem:[#allocation2 + $0x18] sm:$0xff] %vm493, %v1493
        %1549 = vst.msk [vmem:[#allocation2 + $0x20] sm:$0xff] %vm493, %v1494
        %v1551 = vlaneseq
        %v1552 = vshrl.u32 %v1551, 7
        %v1553 = vsub.s32 0, %v1552
        %v1554 = vrot.slane %v1128, %v1553
        %v1556 = vmul.f32 %v1131, %v1554
        %v1557 = vmul.f32 %v1544, %v1129
        %v1558 = vadd.f32 %v1556, %v1557
        %v1559 = vld [vmem:[%s11] sm:$0xff]
        %v1560 = vld [vmem:[%s11 + $0x8] sm:$0xff]
        %v1561 = vld [vmem:[%s11 + $0x10] sm:$0xff]
        %v1562 = vld [vmem:[%s11 + $0x18] sm:$0xff]
        %v1563 = vld [vmem:[%s11 + $0x20] sm:$0xff]
        %v1564 = vld [vmem:[%s11 + $0x28] sm:$0xff]
        %v1565 = vld [vmem:[%s11 + $0x30] sm:$0xff]
        %v1566 = vld [vmem:[%s11 + $0x38] sm:$0xff]
        %v1567 = vld [vmem:[%s11 + $0x40] sm:$0xff]
        %v1568 = vld [vmem:[%s11 + $0x48] sm:$0xff]
        %v1570 = vsel %vm1434, %v1559, 0
        %v1573 = vsel %vm1434, %v1560, 0
        %v1576 = vsel %vm1434, %v1561, 0
        %v1579 = vsel %vm1434, %v1562, 0
        %v1582 = vsel %vm1434, %v1563, 0
        %v1585 = vsel %vm1434, %v1564, 0
        %v1588 = vsel %vm1434, %v1565, 0
        %v1591 = vsel %vm1434, %v1566, 0
        %v1594 = vsel %vm1434, %v1567, 0
        %v1597 = vsel %vm1434, %v1568, 0
        %vm1599 = vcmask 1041408
        %v1601 = vsel %vm1599, %v1558, 0
        %1603 = vmatprep.subr.mxu0 0.0
        %1604 = vmatpush1.msra.mxu0 %v1601
        %1605 = vmatprep.subr.mxu0 0.0
        %1606 = vmatpush1.msra.mxu0 0.0
        %1607 = vmatprep.subr.mxu0 0.0
        %1608 = vmatpush1.msra.mxu0 0.0
        %1609 = vmatprep.subr.mxu0 0.0
        %1610 = vmatpush1.msra.mxu0 0.0
        %1611 = vmatprep.subr.mxu0 0.0
        %1612 = vmatpush1.msra.mxu0 0.0
        %1613 = vmatprep.subr.mxu0 0.0
        %1614 = vmatpush1.msra.mxu0 0.0
        %1615 = vmatprep.subr.mxu0 0.0
        %1616 = vmatpush1.msra.mxu0 0.0
        %1617 = vmatprep.subr.mxu0 0.0
        %1618 = vmatpush1.msra.mxu0 0.0
        %1619 = vmatprep.subr.mxu0 0.0
        %1620 = vmatpush1.msra.mxu0 0.0
        %1621 = vmatprep.subr.mxu0 0.0
        %1622 = vmatpush1.msra.mxu0 0.0
        %1623 = vmatprep.subr.mxu0 0.0
        %1624 = vmatpush1.msra.mxu0 0.0
        %1625 = vmatprep.subr.mxu0 0.0
        %1626 = vmatpush1.msra.mxu0 0.0
        %1627 = vmatprep.subr.mxu0 0.0
        %1628 = vmatpush1.msra.mxu0 0.0
        %1629 = vmatprep.subr.mxu0 0.0
        %1630 = vmatpush1.msra.mxu0 0.0
        %1631 = vmatprep.subr.mxu0 0.0
        %1632 = vmatpush1.msra.mxu0 0.0
        %1633 = vmatprep.subr.mxu0 0.0
        %1634 = vmatpush1.msra.mxu0 0.0
        %1635 = vmatprep.subr.mxu0 0.0
        %1636 = vmatpush1.msra.mxu0 0.0
        %1637 = vmatprep.subr.mxu0 0.0
        %1638 = vmatpush1.msra.mxu0 0.0
        %1639 = vmatprep.subr.mxu0 0.0
        %1640 = vmatpush1.msra.mxu0 0.0
        %1641 = vmatprep.subr.mxu0 0.0
        %1642 = vmatpush1.msra.mxu0 0.0
        %1643 = vmatprep.subr.mxu0 0.0
        %1644 = vmatpush1.msra.mxu0 0.0
        %1645 = vmatprep.subr.mxu0 0.0
        %1646 = vmatpush1.msra.mxu0 0.0
        %1647 = vmatprep.subr.mxu0 0.0
        %1648 = vmatpush1.msra.mxu0 0.0
        %1649 = vmatprep.subr.mxu0 0.0
        %1650 = vmatpush1.msra.mxu0 0.0
        %1651 = vmatprep.subr.mxu0 0.0
        %1652 = vmatpush1.msra.mxu0 0.0
        %1653 = vmatprep.subr.mxu0 0.0
        %1654 = vmatpush1.msra.mxu0 0.0
        %1655 = vmatprep.subr.mxu0 0.0
        %1656 = vmatpush1.msra.mxu0 0.0
        %1657 = vmatprep.subr.mxu0 0.0
        %1658 = vmatpush1.msra.mxu0 0.0
        %1659 = vmatprep.subr.mxu0 0.0
        %1660 = vmatpush1.msra.mxu0 0.0
        %1661 = vmatprep.subr.mxu0 0.0
        %1662 = vmatpush1.msra.mxu0 0.0
        %1663 = vmatprep.subr.mxu0 0.0
        %1664 = vmatpush1.msra.mxu0 0.0
        %1665 = vmatprep.subr.mxu0 0.0
        %1666 = vmatpush1.msra.mxu0 0.0
        %1667 = vmatprep.mubr.f32.mxu0 0.0
        %1668 = vmatmul.mubr.f32.gmra.mrb[0].mxu0 %v1570
        %v1669 = vpop.f32.mrb[0].mxu0
        %v1670 = vadd.f32 0.0, %v1669
        %v1671 = vpop.f32.mrb[0].mxu0
        %1672 = vmatprep.mubr.f32.mxu0 0.0
        %1673 = vmatmul.mubr.f32.gmra.mrb[0].mxu0 %v1573
        %v1674 = vpop.f32.mrb[0].mxu0
        %v1675 = vadd.f32 0.0, %v1674
        %v1676 = vpop.f32.mrb[0].mxu0
        %1677 = vmatprep.mubr.f32.mxu0 0.0
        %1678 = vmatmul.mubr.f32.gmra.mrb[0].mxu0 %v1576
        %v1679 = vpop.f32.mrb[0].mxu0
        %v1680 = vadd.f32 0.0, %v1679
        %v1681 = vpop.f32.mrb[0].mxu0
        %1682 = vmatprep.mubr.f32.mxu0 0.0
        %1683 = vmatmul.mubr.f32.gmra.mrb[0].mxu0 %v1579
        %v1684 = vpop.f32.mrb[0].mxu0
        %v1685 = vadd.f32 0.0, %v1684
        %v1686 = vpop.f32.mrb[0].mxu0
        %1687 = vmatprep.mubr.f32.mxu0 0.0
        %1688 = vmatmul.mubr.f32.gmra.mrb[0].mxu0 %v1582
        %v1689 = vpop.f32.mrb[0].mxu0
        %v1690 = vadd.f32 0.0, %v1689
        %v1691 = vpop.f32.mrb[0].mxu0
        %1692 = vmatprep.mubr.f32.mxu0 0.0
        %1693 = vmatmul.mubr.f32.gmra.mrb[0].mxu0 %v1585
        %v1694 = vpop.f32.mrb[0].mxu0
        %v1695 = vadd.f32 0.0, %v1694
        %v1696 = vpop.f32.mrb[0].mxu0
        %1697 = vmatprep.mubr.f32.mxu0 0.0
        %1698 = vmatmul.mubr.f32.gmra.mrb[0].mxu0 %v1588
        %v1699 = vpop.f32.mrb[0].mxu0
        %v1700 = vadd.f32 0.0, %v1699
        %v1701 = vpop.f32.mrb[0].mxu0
        %1702 = vmatprep.mubr.f32.mxu0 0.0
        %1703 = vmatmul.mubr.f32.gmra.mrb[0].mxu0 %v1591
        %v1704 = vpop.f32.mrb[0].mxu0
        %v1705 = vadd.f32 0.0, %v1704
        %v1706 = vpop.f32.mrb[0].mxu0
        %1707 = vmatprep.mubr.f32.mxu0 0.0
        %1708 = vmatmul.mubr.f32.gmra.mrb[0].mxu0 %v1594
        %v1709 = vpop.f32.mrb[0].mxu0
        %v1710 = vadd.f32 0.0, %v1709
        %v1711 = vpop.f32.mrb[0].mxu0
        %1712 = vmatprep.mubr.f32.mxu0 0.0
        %1713 = vmatmul.mubr.f32.gmra.mrb[0].mxu0 %v1597
        %v1714 = vpop.f32.mrb[0].mxu0
        %v1715 = vadd.f32 0.0, %v1714
        %v1716 = vpop.f32.mrb[0].mxu0
        %1717 = vdwg.mxu0
        %v1718 = vld [vmem:[#allocation5] sm:$0xff]
        %v1719 = vld [vmem:[#allocation5 + $0x8] sm:$0xff]
        %v1720 = vld [vmem:[#allocation5 + $0x10] sm:$0xff]
        %v1721 = vld [vmem:[#allocation5 + $0x18] sm:$0xff]
        %v1722 = vld [vmem:[#allocation5 + $0x20] sm:$0xff]
        %v1723 = vld [vmem:[#allocation5 + $0x28] sm:$0xff]
        %v1724 = vld [vmem:[#allocation5 + $0x30] sm:$0xff]
        %v1725 = vld [vmem:[#allocation5 + $0x38] sm:$0xff]
        %v1726 = vld [vmem:[#allocation5 + $0x40] sm:$0xff]
        %v1727 = vld [vmem:[#allocation5 + $0x48] sm:$0xff]
        %v1728 = vmul.f32 %v1718, %v1670
        %v1729 = vmul.f32 %v1719, %v1675
        %v1730 = vmul.f32 %v1720, %v1680
        %v1731 = vmul.f32 %v1721, %v1685
        %v1732 = vmul.f32 %v1722, %v1690
        %v1733 = vmul.f32 %v1723, %v1695
        %v1734 = vmul.f32 %v1724, %v1700
        %v1735 = vmul.f32 %v1725, %v1705
        %v1736 = vmul.f32 %v1726, %v1710
        %v1737 = vmul.f32 %v1727, %v1715
        %v1738 = vld [vmem:[%s3] sm:$0xff]
        %v1739 = vld [vmem:[%s3 + $0x8] sm:$0xff]
        %v1740 = vld [vmem:[%s3 + $0x10] sm:$0xff]
        %v1741 = vld [vmem:[%s3 + $0x18] sm:$0xff]
        %v1742 = vld [vmem:[%s3 + $0x20] sm:$0xff]
        %v1743 = vld [vmem:[#allocation4] sm:$0xff]
        %v1744 = vld [vmem:[#allocation4 + $0x8] sm:$0xff]
        %v1745 = vld [vmem:[#allocation4 + $0x10] sm:$0xff]
        %v1746 = vld [vmem:[#allocation4 + $0x18] sm:$0xff]
        %v1747 = vld [vmem:[#allocation4 + $0x20] sm:$0xff]
        %v1748 = vld [vmem:[#allocation4 + $0x28] sm:$0xff]
        %v1749 = vld [vmem:[#allocation4 + $0x30] sm:$0xff]
        %v1750 = vld [vmem:[#allocation4 + $0x38] sm:$0xff]
        %v1751 = vld [vmem:[#allocation4 + $0x40] sm:$0xff]
        %v1752 = vld [vmem:[#allocation4 + $0x48] sm:$0xff]
        %v1754 = vsel %vm493, %v1728, 0
        %v1757 = vsel %vm493, %v1729, 0
        %v1760 = vsel %vm493, %v1730, 0
        %v1763 = vsel %vm493, %v1731, 0
        %v1766 = vsel %vm493, %v1732, 0
        %v1769 = vsel %vm493, %v1733, 0
        %v1772 = vsel %vm493, %v1734, 0
        %v1775 = vsel %vm493, %v1735, 0
        %v1778 = vsel %vm493, %v1736, 0
        %v1781 = vsel %vm493, %v1737, 0
        %1783 = vmatprep.subr.mxu0 0.0
        %1784 = vmatpush1.msra.mxu0 %v1738
        %1785 = vmatprep.subr.mxu0 0.0
        %1786 = vmatpush1.msra.mxu0 %v1739
        %1787 = vmatprep.subr.mxu0 0.0
        %1788 = vmatpush1.msra.mxu0 %v1740
        %1789 = vmatprep.subr.mxu0 0.0
        %1790 = vmatpush1.msra.mxu0 %v1741
        %1791 = vmatprep.subr.mxu0 0.0
        %1792 = vmatpush1.msra.mxu0 %v1742
        %1793 = vmatprep.subr.mxu0 0.0
        %1794 = vmatpush1.msra.mxu0 0.0
        %1795 = vmatprep.subr.mxu0 0.0
        %1796 = vmatpush1.msra.mxu0 0.0
        %1797 = vmatprep.subr.mxu0 0.0
        %1798 = vmatpush1.msra.mxu0 0.0
        %1799 = vmatprep.subr.mxu0 0.0
        %1800 = vmatpush1.msra.mxu0 0.0
        %1801 = vmatprep.subr.mxu0 0.0
        %1802 = vmatpush1.msra.mxu0 0.0
        %1803 = vmatprep.subr.mxu0 0.0
        %1804 = vmatpush1.msra.mxu0 0.0
        %1805 = vmatprep.subr.mxu0 0.0
        %1806 = vmatpush1.msra.mxu0 0.0
        %1807 = vmatprep.subr.mxu0 0.0
        %1808 = vmatpush1.msra.mxu0 0.0
        %1809 = vmatprep.subr.mxu0 0.0
        %1810 = vmatpush1.msra.mxu0 0.0
        %1811 = vmatprep.subr.mxu0 0.0
        %1812 = vmatpush1.msra.mxu0 0.0
        %1813 = vmatprep.subr.mxu0 0.0
        %1814 = vmatpush1.msra.mxu0 0.0
        %1815 = vmatprep.subr.mxu0 0.0
        %1816 = vmatpush1.msra.mxu0 0.0
        %1817 = vmatprep.subr.mxu0 0.0
        %1818 = vmatpush1.msra.mxu0 0.0
        %1819 = vmatprep.subr.mxu0 0.0
        %1820 = vmatpush1.msra.mxu0 0.0
        %1821 = vmatprep.subr.mxu0 0.0
        %1822 = vmatpush1.msra.mxu0 0.0
        %1823 = vmatprep.subr.mxu0 0.0
        %1824 = vmatpush1.msra.mxu0 0.0
        %1825 = vmatprep.subr.mxu0 0.0
        %1826 = vmatpush1.msra.mxu0 0.0
        %1827 = vmatprep.subr.mxu0 0.0
        %1828 = vmatpush1.msra.mxu0 0.0
        %1829 = vmatprep.subr.mxu0 0.0
        %1830 = vmatpush1.msra.mxu0 0.0
        %1831 = vmatprep.subr.mxu0 0.0
        %1832 = vmatpush1.msra.mxu0 0.0
        %1833 = vmatprep.subr.mxu0 0.0
        %1834 = vmatpush1.msra.mxu0 0.0
        %1835 = vmatprep.subr.mxu0 0.0
        %1836 = vmatpush1.msra.mxu0 0.0
        %1837 = vmatprep.subr.mxu0 0.0
        %1838 = vmatpush1.msra.mxu0 0.0
        %1839 = vmatprep.subr.mxu0 0.0
        %1840 = vmatpush1.msra.mxu0 0.0
        %1841 = vmatprep.subr.mxu0 0.0
        %1842 = vmatpush1.msra.mxu0 0.0
        %1843 = vmatprep.subr.mxu0 0.0
        %1844 = vmatpush1.msra.mxu0 0.0
        %1845 = vmatprep.subr.mxu0 0.0
        %1846 = vmatpush1.msra.mxu0 0.0
        %1847 = vmatprep.mubr.f32.mxu0 0.0
        %1848 = vmatmul.mubr.f32.gmra.mrb[0].mxu0 %v1754
        %v1849 = vpop.f32.mrb[0].mxu0
        %v1850 = vadd.f32 %v1743, %v1849
        %v1851 = vpop.f32.mrb[0].mxu0
        %1852 = vmatprep.mubr.f32.mxu0 0.0
        %1853 = vmatmul.mubr.f32.gmra.mrb[0].mxu0 %v1757
        %v1854 = vpop.f32.mrb[0].mxu0
        %v1855 = vadd.f32 %v1744, %v1854
        %v1856 = vpop.f32.mrb[0].mxu0
        %1857 = vmatprep.mubr.f32.mxu0 0.0
        %1858 = vmatmul.mubr.f32.gmra.mrb[0].mxu0 %v1760
        %v1859 = vpop.f32.mrb[0].mxu0
        %v1860 = vadd.f32 %v1745, %v1859
        %v1861 = vpop.f32.mrb[0].mxu0
        %1862 = vmatprep.mubr.f32.mxu0 0.0
        %1863 = vmatmul.mubr.f32.gmra.mrb[0].mxu0 %v1763
        %v1864 = vpop.f32.mrb[0].mxu0
        %v1865 = vadd.f32 %v1746, %v1864
        %v1866 = vpop.f32.mrb[0].mxu0
        %1867 = vmatprep.mubr.f32.mxu0 0.0
        %1868 = vmatmul.mubr.f32.gmra.mrb[0].mxu0 %v1766
        %v1869 = vpop.f32.mrb[0].mxu0
        %v1870 = vadd.f32 %v1747, %v1869
        %v1871 = vpop.f32.mrb[0].mxu0
        %1872 = vmatprep.mubr.f32.mxu0 0.0
        %1873 = vmatmul.mubr.f32.gmra.mrb[0].mxu0 %v1769
        %v1874 = vpop.f32.mrb[0].mxu0
        %v1875 = vadd.f32 %v1748, %v1874
        %v1876 = vpop.f32.mrb[0].mxu0
        %1877 = vmatprep.mubr.f32.mxu0 0.0
        %1878 = vmatmul.mubr.f32.gmra.mrb[0].mxu0 %v1772
        %v1879 = vpop.f32.mrb[0].mxu0
        %v1880 = vadd.f32 %v1749, %v1879
        %v1881 = vpop.f32.mrb[0].mxu0
        %1882 = vmatprep.mubr.f32.mxu0 0.0
        %1883 = vmatmul.mubr.f32.gmra.mrb[0].mxu0 %v1775
        %v1884 = vpop.f32.mrb[0].mxu0
        %v1885 = vadd.f32 %v1750, %v1884
        %v1886 = vpop.f32.mrb[0].mxu0
        %1887 = vmatprep.mubr.f32.mxu0 0.0
        %1888 = vmatmul.mubr.f32.gmra.mrb[0].mxu0 %v1778
        %v1889 = vpop.f32.mrb[0].mxu0
        %v1890 = vadd.f32 %v1751, %v1889
        %v1891 = vpop.f32.mrb[0].mxu0
        %1892 = vmatprep.mubr.f32.mxu0 0.0
        %1893 = vmatmul.mubr.f32.gmra.mrb[0].mxu0 %v1781
        %v1894 = vpop.f32.mrb[0].mxu0
        %v1895 = vadd.f32 %v1752, %v1894
        %v1896 = vpop.f32.mrb[0].mxu0
        %1897 = vdwg.mxu0
        %v1898 = vmax.f32 %v1850, 0.0
        %v1899 = vmax.f32 %v1855, 0.0
        %v1900 = vmax.f32 %v1860, 0.0
        %v1901 = vmax.f32 %v1865, 0.0
        %v1902 = vmax.f32 %v1870, 0.0
        %v1903 = vmax.f32 %v1875, 0.0
        %v1904 = vmax.f32 %v1880, 0.0
        %v1905 = vmax.f32 %v1885, 0.0
        %v1906 = vmax.f32 %v1890, 0.0
        %v1907 = vmax.f32 %v1895, 0.0
        %v1908 = vld [vmem:[%s4] sm:$0xff]
        %v1909 = vld [vmem:[%s4 + $0x8] sm:$0xff]
        %v1910 = vld [vmem:[%s4 + $0x10] sm:$0xff]
        %v1911 = vld [vmem:[%s4 + $0x18] sm:$0xff]
        %v1912 = vld [vmem:[%s4 + $0x20] sm:$0xff]
        %v1913 = vld [vmem:[%s5] sm:$0x1]
        %v1915 = vlaneseq
        %v1916 = vshrl.u32 %v1915, 7
        %v1917 = vsub.s32 0, %v1916
        %v1918 = vrot.slane %v1913, %v1917
        %v1921 = vsel %vm493, %v1898, 0
        %v1924 = vsel %vm493, %v1899, 0
        %v1927 = vsel %vm493, %v1900, 0
        %v1930 = vsel %vm493, %v1901, 0
        %v1933 = vsel %vm493, %v1902, 0
        %v1936 = vsel %vm493, %v1903, 0
        %v1939 = vsel %vm493, %v1904, 0
        %v1942 = vsel %vm493, %v1905, 0
        %v1945 = vsel %vm493, %v1906, 0
        %v1948 = vsel %vm493, %v1907, 0
        %1950 = vmatprep.subr.mxu0 0.0
        %1951 = vmatpush1.msra.mxu0 %v1908
        %1952 = vmatprep.subr.mxu0 0.0
        %1953 = vmatpush1.msra.mxu0 %v1909
        %1954 = vmatprep.subr.mxu0 0.0
        %1955 = vmatpush1.msra.mxu0 %v1910
        %1956 = vmatprep.subr.mxu0 0.0
        %1957 = vmatpush1.msra.mxu0 %v1911
        %1958 = vmatprep.subr.mxu0 0.0
        %1959 = vmatpush1.msra.mxu0 %v1912
        %1960 = vmatprep.subr.mxu0 0.0
        %1961 = vmatpush1.msra.mxu0 0.0
        %1962 = vmatprep.subr.mxu0 0.0
        %1963 = vmatpush1.msra.mxu0 0.0
        %1964 = vmatprep.subr.mxu0 0.0
        %1965 = vmatpush1.msra.mxu0 0.0
        %1966 = vmatprep.subr.mxu0 0.0
        %1967 = vmatpush1.msra.mxu0 0.0
        %1968 = vmatprep.subr.mxu0 0.0
        %1969 = vmatpush1.msra.mxu0 0.0
        %1970 = vmatprep.subr.mxu0 0.0
        %1971 = vmatpush1.msra.mxu0 0.0
        %1972 = vmatprep.subr.mxu0 0.0
        %1973 = vmatpush1.msra.mxu0 0.0
        %1974 = vmatprep.subr.mxu0 0.0
        %1975 = vmatpush1.msra.mxu0 0.0
        %1976 = vmatprep.subr.mxu0 0.0
        %1977 = vmatpush1.msra.mxu0 0.0
        %1978 = vmatprep.subr.mxu0 0.0
        %1979 = vmatpush1.msra.mxu0 0.0
        %1980 = vmatprep.subr.mxu0 0.0
        %1981 = vmatpush1.msra.mxu0 0.0
        %1982 = vmatprep.subr.mxu0 0.0
        %1983 = vmatpush1.msra.mxu0 0.0
        %1984 = vmatprep.subr.mxu0 0.0
        %1985 = vmatpush1.msra.mxu0 0.0
        %1986 = vmatprep.subr.mxu0 0.0
        %1987 = vmatpush1.msra.mxu0 0.0
        %1988 = vmatprep.subr.mxu0 0.0
        %1989 = vmatpush1.msra.mxu0 0.0
        %1990 = vmatprep.subr.mxu0 0.0
        %1991 = vmatpush1.msra.mxu0 0.0
        %1992 = vmatprep.subr.mxu0 0.0
        %1993 = vmatpush1.msra.mxu0 0.0
        %1994 = vmatprep.subr.mxu0 0.0
        %1995 = vmatpush1.msra.mxu0 0.0
        %1996 = vmatprep.subr.mxu0 0.0
        %1997 = vmatpush1.msra.mxu0 0.0
        %1998 = vmatprep.subr.mxu0 0.0
        %1999 = vmatpush1.msra.mxu0 0.0
        %2000 = vmatprep.subr.mxu0 0.0
        %2001 = vmatpush1.msra.mxu0 0.0
        %2002 = vmatprep.subr.mxu0 0.0
        %2003 = vmatpush1.msra.mxu0 0.0
        %2004 = vmatprep.subr.mxu0 0.0
        %2005 = vmatpush1.msra.mxu0 0.0
        %2006 = vmatprep.subr.mxu0 0.0
        %2007 = vmatpush1.msra.mxu0 0.0
        %2008 = vmatprep.subr.mxu0 0.0
        %2009 = vmatpush1.msra.mxu0 0.0
        %2010 = vmatprep.subr.mxu0 0.0
        %2011 = vmatpush1.msra.mxu0 0.0
        %2012 = vmatprep.subr.mxu0 0.0
        %2013 = vmatpush1.msra.mxu0 0.0
        %2014 = vmatprep.mubr.f32.mxu0 0.0
        %2015 = vmatmul.mubr.f32.gmra.mrb[0].mxu0 %v1921
        %v2016 = vpop.f32.mrb[0].mxu0
        %v2017 = vadd.f32 %v1918, %v2016
        %v2018 = vpop.f32.mrb[0].mxu0
        %2019 = vmatprep.mubr.f32.mxu0 0.0
        %2020 = vmatmul.mubr.f32.gmra.mrb[0].mxu0 %v1924
        %v2021 = vpop.f32.mrb[0].mxu0
        %v2022 = vadd.f32 %v1918, %v2021
        %v2023 = vpop.f32.mrb[0].mxu0
        %2024 = vmatprep.mubr.f32.mxu0 0.0
        %2025 = vmatmul.mubr.f32.gmra.mrb[0].mxu0 %v1927
        %v2026 = vpop.f32.mrb[0].mxu0
        %v2027 = vadd.f32 %v1918, %v2026
        %v2028 = vpop.f32.mrb[0].mxu0
        %2029 = vmatprep.mubr.f32.mxu0 0.0
        %2030 = vmatmul.mubr.f32.gmra.mrb[0].mxu0 %v1930
        %v2031 = vpop.f32.mrb[0].mxu0
        %v2032 = vadd.f32 %v1918, %v2031
        %v2033 = vpop.f32.mrb[0].mxu0
        %2034 = vmatprep.mubr.f32.mxu0 0.0
        %2035 = vmatmul.mubr.f32.gmra.mrb[0].mxu0 %v1933
        %v2036 = vpop.f32.mrb[0].mxu0
        %v2037 = vadd.f32 %v1918, %v2036
        %v2038 = vpop.f32.mrb[0].mxu0
        %2039 = vmatprep.mubr.f32.mxu0 0.0
        %2040 = vmatmul.mubr.f32.gmra.mrb[0].mxu0 %v1936
        %v2041 = vpop.f32.mrb[0].mxu0
        %v2042 = vadd.f32 %v1918, %v2041
        %v2043 = vpop.f32.mrb[0].mxu0
        %2044 = vmatprep.mubr.f32.mxu0 0.0
        %2045 = vmatmul.mubr.f32.gmra.mrb[0].mxu0 %v1939
        %v2046 = vpop.f32.mrb[0].mxu0
        %v2047 = vadd.f32 %v1918, %v2046
        %v2048 = vpop.f32.mrb[0].mxu0
        %2049 = vmatprep.mubr.f32.mxu0 0.0
        %2050 = vmatmul.mubr.f32.gmra.mrb[0].mxu0 %v1942
        %v2051 = vpop.f32.mrb[0].mxu0
        %v2052 = vadd.f32 %v1918, %v2051
        %v2053 = vpop.f32.mrb[0].mxu0
        %2054 = vmatprep.mubr.f32.mxu0 0.0
        %2055 = vmatmul.mubr.f32.gmra.mrb[0].mxu0 %v1945
        %v2056 = vpop.f32.mrb[0].mxu0
        %v2057 = vadd.f32 %v1918, %v2056
        %v2058 = vpop.f32.mrb[0].mxu0
        %2059 = vmatprep.mubr.f32.mxu0 0.0
        %2060 = vmatmul.mubr.f32.gmra.mrb[0].mxu0 %v1948
        %v2061 = vpop.f32.mrb[0].mxu0
        %v2062 = vadd.f32 %v1918, %v2061
        %v2063 = vpop.f32.mrb[0].mxu0
        %2064 = vdwg.mxu0
        %v2065 = vsel %vm493, %v2017, 0.0
        %2066 = vadd.xlane.f32.xlu0 %v2065
        %v2067 = vpop.xlane.xlu0 %2066
        %v2068 = vsel %vm493, %v2022, 0.0
        %2069 = vadd.xlane.f32.xlu0 %v2068
        %v2070 = vpop.xlane.xlu0 %2069
        %v2071 = vsel %vm493, %v2027, 0.0
        %2072 = vadd.xlane.f32.xlu0 %v2071
        %v2073 = vpop.xlane.xlu0 %2072
        %v2074 = vsel %vm493, %v2032, 0.0
        %2075 = vadd.xlane.f32.xlu0 %v2074
        %v2076 = vpop.xlane.xlu0 %2075
        %v2077 = vsel %vm493, %v2037, 0.0
        %2078 = vadd.xlane.f32.xlu0 %v2077
        %v2079 = vpop.xlane.xlu0 %2078
        %v2080 = vsel %vm493, %v2042, 0.0
        %2081 = vadd.xlane.f32.xlu0 %v2080
        %v2082 = vpop.xlane.xlu0 %2081
        %v2083 = vsel %vm493, %v2047, 0.0
        %2084 = vadd.xlane.f32.xlu0 %v2083
        %v2085 = vpop.xlane.xlu0 %2084
        %v2086 = vsel %vm493, %v2052, 0.0
        %2087 = vadd.xlane.f32.xlu0 %v2086
        %v2088 = vpop.xlane.xlu0 %2087
        %v2089 = vsel %vm493, %v2057, 0.0
        %2090 = vadd.xlane.f32.xlu0 %v2089
        %v2091 = vpop.xlane.xlu0 %2090
        %v2092 = vsel %vm493, %v2062, 0.0
        %2093 = vadd.xlane.f32.xlu0 %v2092
        %v2094 = vpop.xlane.xlu0 %2093
        %v2095 = vmul.f32 %v2017, %v2017
        %v2096 = vmul.f32 %v2022, %v2022
        %v2097 = vmul.f32 %v2027, %v2027
        %v2098 = vmul.f32 %v2032, %v2032
        %v2099 = vmul.f32 %v2037, %v2037
        %v2100 = vmul.f32 %v2042, %v2042
        %v2101 = vmul.f32 %v2047, %v2047
        %v2102 = vmul.f32 %v2052, %v2052
        %v2103 = vmul.f32 %v2057, %v2057
        %v2104 = vmul.f32 %v2062, %v2062
        %v2105 = vsel %vm493, %v2095, 0.0
        %2106 = vadd.xlane.f32.xlu0 %v2105
        %v2107 = vpop.xlane.xlu0 %2106
        %v2108 = vsel %vm493, %v2096, 0.0
        %2109 = vadd.xlane.f32.xlu0 %v2108
        %v2110 = vpop.xlane.xlu0 %2109
        %v2111 = vsel %vm493, %v2097, 0.0
        %2112 = vadd.xlane.f32.xlu0 %v2111
        %v2113 = vpop.xlane.xlu0 %2112
        %v2114 = vsel %vm493, %v2098, 0.0
        %2115 = vadd.xlane.f32.xlu0 %v2114
        %v2116 = vpop.xlane.xlu0 %2115
        %v2117 = vsel %vm493, %v2099, 0.0
        %2118 = vadd.xlane.f32.xlu0 %v2117
        %v2119 = vpop.xlane.xlu0 %2118
        %v2120 = vsel %vm493, %v2100, 0.0
        %2121 = vadd.xlane.f32.xlu0 %v2120
        %v2122 = vpop.xlane.xlu0 %2121
        %v2123 = vsel %vm493, %v2101, 0.0
        %2124 = vadd.xlane.f32.xlu0 %v2123
        %v2125 = vpop.xlane.xlu0 %2124
        %v2126 = vsel %vm493, %v2102, 0.0
        %2127 = vadd.xlane.f32.xlu0 %v2126
        %v2128 = vpop.xlane.xlu0 %2127
        %v2129 = vsel %vm493, %v2103, 0.0
        %2130 = vadd.xlane.f32.xlu0 %v2129
        %v2131 = vpop.xlane.xlu0 %2130
        %v2132 = vsel %vm493, %v2104, 0.0
        %2133 = vadd.xlane.f32.xlu0 %v2132
        %v2134 = vpop.xlane.xlu0 %2133
        %v2135 = vld [vmem:[%s12] sm:$0xff]
        %v2136 = vld [vmem:[%s12 + $0x8] sm:$0xff]
        %v2137 = vld [vmem:[%s12 + $0x10] sm:$0xff]
        %v2138 = vld [vmem:[%s12 + $0x18] sm:$0xff]
        %v2139 = vld [vmem:[%s12 + $0x20] sm:$0xff]
        %v2140 = vld [vmem:[%s12 + $0x28] sm:$0xff]
        %v2141 = vld [vmem:[%s12 + $0x30] sm:$0xff]
        %v2142 = vld [vmem:[%s12 + $0x38] sm:$0xff]
        %v2143 = vld [vmem:[%s12 + $0x40] sm:$0xff]
        %v2144 = vld [vmem:[%s12 + $0x48] sm:$0xff]
        %v2146 = vsel %vm903, %v2135, 0
        %v2149 = vsel %vm903, %v2136, 0
        %v2152 = vsel %vm903, %v2137, 0
        %v2155 = vsel %vm903, %v2138, 0
        %v2158 = vsel %vm903, %v2139, 0
        %v2161 = vsel %vm903, %v2140, 0
        %v2164 = vsel %vm903, %v2141, 0
        %v2167 = vsel %vm903, %v2142, 0
        %v2170 = vsel %vm903, %v2143, 0
        %v2173 = vsel %vm903, %v2144, 0
        %2175 = vmatprep.subr.mxu0 0.0
        %2176 = vmatpush1.msra.mxu0 %v2067
        %2177 = vmatprep.subr.mxu0 0.0
        %2178 = vmatpush1.msra.mxu0 %v2070
        %2179 = vmatprep.subr.mxu0 0.0
        %2180 = vmatpush1.msra.mxu0 %v2073
        %2181 = vmatprep.subr.mxu0 0.0
        %2182 = vmatpush1.msra.mxu0 %v2076
        %2183 = vmatprep.subr.mxu0 0.0
        %2184 = vmatpush1.msra.mxu0 %v2079
        %2185 = vmatprep.subr.mxu0 0.0
        %2186 = vmatpush1.msra.mxu0 %v2082
        %2187 = vmatprep.subr.mxu0 0.0
        %2188 = vmatpush1.msra.mxu0 %v2085
        %2189 = vmatprep.subr.mxu0 0.0
        %2190 = vmatpush1.msra.mxu0 %v2088
        %2191 = vmatprep.subr.mxu0 0.0
        %2192 = vmatpush1.msra.mxu0 %v2091
        %2193 = vmatprep.subr.mxu0 0.0
        %2194 = vmatpush1.msra.mxu0 %v2094
        %2195 = vmatprep.subr.mxu0 0.0
        %2196 = vmatpush1.msra.mxu0 0.0
        %2197 = vmatprep.subr.mxu0 0.0
        %2198 = vmatpush1.msra.mxu0 0.0
        %2199 = vmatprep.subr.mxu0 0.0
        %2200 = vmatpush1.msra.mxu0 0.0
        %2201 = vmatprep.subr.mxu0 0.0
        %2202 = vmatpush1.msra.mxu0 0.0
        %2203 = vmatprep.subr.mxu0 0.0
        %2204 = vmatpush1.msra.mxu0 0.0
        %2205 = vmatprep.subr.mxu0 0.0
        %2206 = vmatpush1.msra.mxu0 0.0
        %2207 = vmatprep.subr.mxu0 0.0
        %2208 = vmatpush1.msra.mxu0 0.0
        %2209 = vmatprep.subr.mxu0 0.0
        %2210 = vmatpush1.msra.mxu0 0.0
        %2211 = vmatprep.subr.mxu0 0.0
        %2212 = vmatpush1.msra.mxu0 0.0
        %2213 = vmatprep.subr.mxu0 0.0
        %2214 = vmatpush1.msra.mxu0 0.0
        %2215 = vmatprep.subr.mxu0 0.0
        %2216 = vmatpush1.msra.mxu0 0.0
        %2217 = vmatprep.subr.mxu0 0.0
        %2218 = vmatpush1.msra.mxu0 0.0
        %2219 = vmatprep.subr.mxu0 0.0
        %2220 = vmatpush1.msra.mxu0 0.0
        %2221 = vmatprep.subr.mxu0 0.0
        %2222 = vmatpush1.msra.mxu0 0.0
        %2223 = vmatprep.subr.mxu0 0.0
        %2224 = vmatpush1.msra.mxu0 0.0
        %2225 = vmatprep.subr.mxu0 0.0
        %2226 = vmatpush1.msra.mxu0 0.0
        %2227 = vmatprep.subr.mxu0 0.0
        %2228 = vmatpush1.msra.mxu0 0.0
        %2229 = vmatprep.subr.mxu0 0.0
        %2230 = vmatpush1.msra.mxu0 0.0
        %2231 = vmatprep.subr.mxu0 0.0
        %2232 = vmatpush1.msra.mxu0 0.0
        %2233 = vmatprep.subr.mxu0 0.0
        %2234 = vmatpush1.msra.mxu0 0.0
        %2235 = vmatprep.subr.mxu0 0.0
        %2236 = vmatpush1.msra.mxu0 0.0
        %2237 = vmatprep.subr.mxu0 0.0
        %2238 = vmatpush1.msra.mxu0 0.0
        %2239 = vmatprep.mubr.f32.mxu0 0.0
        %2240 = vmatmul.mubr.f32.gmra.mrb[0].mxu0 %v2146
        %v2241 = vpop.f32.mrb[0].mxu0
        %v2242 = vadd.f32 0.0, %v2241
        %v2243 = vpop.f32.mrb[0].mxu0
        %2244 = vmatprep.mubr.f32.mxu0 0.0
        %2245 = vmatmul.mubr.f32.gmra.mrb[0].mxu0 %v2149
        %v2246 = vpop.f32.mrb[0].mxu0
        %v2247 = vadd.f32 0.0, %v2246
        %v2248 = vpop.f32.mrb[0].mxu0
        %2249 = vmatprep.mubr.f32.mxu0 0.0
        %2250 = vmatmul.mubr.f32.gmra.mrb[0].mxu0 %v2152
        %v2251 = vpop.f32.mrb[0].mxu0
        %v2252 = vadd.f32 0.0, %v2251
        %v2253 = vpop.f32.mrb[0].mxu0
        %2254 = vmatprep.mubr.f32.mxu0 0.0
        %2255 = vmatmul.mubr.f32.gmra.mrb[0].mxu0 %v2155
        %v2256 = vpop.f32.mrb[0].mxu0
        %v2257 = vadd.f32 0.0, %v2256
        %v2258 = vpop.f32.mrb[0].mxu0
        %2259 = vmatprep.mubr.f32.mxu0 0.0
        %2260 = vmatmul.mubr.f32.gmra.mrb[0].mxu0 %v2158
        %v2261 = vpop.f32.mrb[0].mxu0
        %v2262 = vadd.f32 0.0, %v2261
        %v2263 = vpop.f32.mrb[0].mxu0
        %2264 = vmatprep.mubr.f32.mxu0 0.0
        %2265 = vmatmul.mubr.f32.gmra.mrb[0].mxu0 %v2161
        %v2266 = vpop.f32.mrb[0].mxu0
        %v2267 = vadd.f32 0.0, %v2266
        %v2268 = vpop.f32.mrb[0].mxu0
        %2269 = vmatprep.mubr.f32.mxu0 0.0
        %2270 = vmatmul.mubr.f32.gmra.mrb[0].mxu0 %v2164
        %v2271 = vpop.f32.mrb[0].mxu0
        %v2272 = vadd.f32 0.0, %v2271
        %v2273 = vpop.f32.mrb[0].mxu0
        %2274 = vmatprep.mubr.f32.mxu0 0.0
        %2275 = vmatmul.mubr.f32.gmra.mrb[0].mxu0 %v2167
        %v2276 = vpop.f32.mrb[0].mxu0
        %v2277 = vadd.f32 0.0, %v2276
        %v2278 = vpop.f32.mrb[0].mxu0
        %2279 = vmatprep.mubr.f32.mxu0 0.0
        %2280 = vmatmul.mubr.f32.gmra.mrb[0].mxu0 %v2170
        %v2281 = vpop.f32.mrb[0].mxu0
        %v2282 = vadd.f32 0.0, %v2281
        %v2283 = vpop.f32.mrb[0].mxu0
        %2284 = vmatprep.mubr.f32.mxu0 0.0
        %2285 = vmatmul.mubr.f32.gmra.mrb[0].mxu0 %v2173
        %v2286 = vpop.f32.mrb[0].mxu0
        %v2287 = vadd.f32 0.0, %v2286
        %v2288 = vpop.f32.mrb[0].mxu0
        %2289 = vdwg.mxu0
        %v2290 = vmul.f32 %v2242, 0.003125
        %v2291 = vmul.f32 %v2247, 0.003125
        %v2292 = vmul.f32 %v2252, 0.003125
        %v2293 = vmul.f32 %v2257, 0.003125
        %v2294 = vmul.f32 %v2262, 0.003125
        %v2295 = vmul.f32 %v2267, 0.003125
        %v2296 = vmul.f32 %v2272, 0.003125
        %v2297 = vmul.f32 %v2277, 0.003125
        %v2298 = vmul.f32 %v2282, 0.003125
        %v2299 = vmul.f32 %v2287, 0.003125
        %2300 = vmatprep.subr.mxu0 0.0
        %2301 = vmatpush1.msra.mxu0 %v2107
        %2302 = vmatprep.subr.mxu0 0.0
        %2303 = vmatpush1.msra.mxu0 %v2110
        %2304 = vmatprep.subr.mxu0 0.0
        %2305 = vmatpush1.msra.mxu0 %v2113
        %2306 = vmatprep.subr.mxu0 0.0
        %2307 = vmatpush1.msra.mxu0 %v2116
        %2308 = vmatprep.subr.mxu0 0.0
        %2309 = vmatpush1.msra.mxu0 %v2119
        %2310 = vmatprep.subr.mxu0 0.0
        %2311 = vmatpush1.msra.mxu0 %v2122
        %2312 = vmatprep.subr.mxu0 0.0
        %2313 = vmatpush1.msra.mxu0 %v2125
        %2314 = vmatprep.subr.mxu0 0.0
        %2315 = vmatpush1.msra.mxu0 %v2128
        %2316 = vmatprep.subr.mxu0 0.0
        %2317 = vmatpush1.msra.mxu0 %v2131
        %2318 = vmatprep.subr.mxu0 0.0
        %2319 = vmatpush1.msra.mxu0 %v2134
        %2320 = vmatprep.subr.mxu0 0.0
        %2321 = vmatpush1.msra.mxu0 0.0
        %2322 = vmatprep.subr.mxu0 0.0
        %2323 = vmatpush1.msra.mxu0 0.0
        %2324 = vmatprep.subr.mxu0 0.0
        %2325 = vmatpush1.msra.mxu0 0.0
        %2326 = vmatprep.subr.mxu0 0.0
        %2327 = vmatpush1.msra.mxu0 0.0
        %2328 = vmatprep.subr.mxu0 0.0
        %2329 = vmatpush1.msra.mxu0 0.0
        %2330 = vmatprep.subr.mxu0 0.0
        %2331 = vmatpush1.msra.mxu0 0.0
        %2332 = vmatprep.subr.mxu0 0.0
        %2333 = vmatpush1.msra.mxu0 0.0
        %2334 = vmatprep.subr.mxu0 0.0
        %2335 = vmatpush1.msra.mxu0 0.0
        %2336 = vmatprep.subr.mxu0 0.0
        %2337 = vmatpush1.msra.mxu0 0.0
        %2338 = vmatprep.subr.mxu0 0.0
        %2339 = vmatpush1.msra.mxu0 0.0
        %2340 = vmatprep.subr.mxu0 0.0
        %2341 = vmatpush1.msra.mxu0 0.0
        %2342 = vmatprep.subr.mxu0 0.0
        %2343 = vmatpush1.msra.mxu0 0.0
        %2344 = vmatprep.subr.mxu0 0.0
        %2345 = vmatpush1.msra.mxu0 0.0
        %2346 = vmatprep.subr.mxu0 0.0
        %2347 = vmatpush1.msra.mxu0 0.0
        %2348 = vmatprep.subr.mxu0 0.0
        %2349 = vmatpush1.msra.mxu0 0.0
        %2350 = vmatprep.subr.mxu0 0.0
        %2351 = vmatpush1.msra.mxu0 0.0
        %2352 = vmatprep.subr.mxu0 0.0
        %2353 = vmatpush1.msra.mxu0 0.0
        %2354 = vmatprep.subr.mxu0 0.0
        %2355 = vmatpush1.msra.mxu0 0.0
        %2356 = vmatprep.subr.mxu0 0.0
        %2357 = vmatpush1.msra.mxu0 0.0
        %2358 = vmatprep.subr.mxu0 0.0
        %2359 = vmatpush1.msra.mxu0 0.0
        %2360 = vmatprep.subr.mxu0 0.0
        %2361 = vmatpush1.msra.mxu0 0.0
        %2362 = vmatprep.subr.mxu0 0.0
        %2363 = vmatpush1.msra.mxu0 0.0
        %2364 = vmatprep.mubr.f32.mxu0 0.0
        %2365 = vmatmul.mubr.f32.gmra.mrb[0].mxu0 %v2146
        %v2366 = vpop.f32.mrb[0].mxu0
        %v2367 = vadd.f32 0.0, %v2366
        %v2368 = vpop.f32.mrb[0].mxu0
        %2369 = vmatprep.mubr.f32.mxu0 0.0
        %2370 = vmatmul.mubr.f32.gmra.mrb[0].mxu0 %v2149
        %v2371 = vpop.f32.mrb[0].mxu0
        %v2372 = vadd.f32 0.0, %v2371
        %v2373 = vpop.f32.mrb[0].mxu0
        %2374 = vmatprep.mubr.f32.mxu0 0.0
        %2375 = vmatmul.mubr.f32.gmra.mrb[0].mxu0 %v2152
        %v2376 = vpop.f32.mrb[0].mxu0
        %v2377 = vadd.f32 0.0, %v2376
        %v2378 = vpop.f32.mrb[0].mxu0
        %2379 = vmatprep.mubr.f32.mxu0 0.0
        %2380 = vmatmul.mubr.f32.gmra.mrb[0].mxu0 %v2155
        %v2381 = vpop.f32.mrb[0].mxu0
        %v2382 = vadd.f32 0.0, %v2381
        %v2383 = vpop.f32.mrb[0].mxu0
        %2384 = vmatprep.mubr.f32.mxu0 0.0
        %2385 = vmatmul.mubr.f32.gmra.mrb[0].mxu0 %v2158
        %v2386 = vpop.f32.mrb[0].mxu0
        %v2387 = vadd.f32 0.0, %v2386
        %v2388 = vpop.f32.mrb[0].mxu0
        %2389 = vmatprep.mubr.f32.mxu0 0.0
        %2390 = vmatmul.mubr.f32.gmra.mrb[0].mxu0 %v2161
        %v2391 = vpop.f32.mrb[0].mxu0
        %v2392 = vadd.f32 0.0, %v2391
        %v2393 = vpop.f32.mrb[0].mxu0
        %2394 = vmatprep.mubr.f32.mxu0 0.0
        %2395 = vmatmul.mubr.f32.gmra.mrb[0].mxu0 %v2164
        %v2396 = vpop.f32.mrb[0].mxu0
        %v2397 = vadd.f32 0.0, %v2396
        %v2398 = vpop.f32.mrb[0].mxu0
        %2399 = vmatprep.mubr.f32.mxu0 0.0
        %2400 = vmatmul.mubr.f32.gmra.mrb[0].mxu0 %v2167
        %v2401 = vpop.f32.mrb[0].mxu0
        %v2402 = vadd.f32 0.0, %v2401
        %v2403 = vpop.f32.mrb[0].mxu0
        %2404 = vmatprep.mubr.f32.mxu0 0.0
        %2405 = vmatmul.mubr.f32.gmra.mrb[0].mxu0 %v2170
        %v2406 = vpop.f32.mrb[0].mxu0
        %v2407 = vadd.f32 0.0, %v2406
        %v2408 = vpop.f32.mrb[0].mxu0
        %2409 = vmatprep.mubr.f32.mxu0 0.0
        %2410 = vmatmul.mubr.f32.gmra.mrb[0].mxu0 %v2173
        %v2411 = vpop.f32.mrb[0].mxu0
        %v2412 = vadd.f32 0.0, %v2411
        %v2413 = vpop.f32.mrb[0].mxu0
        %2414 = vdwg.mxu0
        %v2415 = vmul.f32 %v2367, 0.003125
        %v2416 = vmul.f32 %v2372, 0.003125
        %v2417 = vmul.f32 %v2377, 0.003125
        %v2418 = vmul.f32 %v2382, 0.003125
        %v2419 = vmul.f32 %v2387, 0.003125
        %v2420 = vmul.f32 %v2392, 0.003125
        %v2421 = vmul.f32 %v2397, 0.003125
        %v2422 = vmul.f32 %v2402, 0.003125
        %v2423 = vmul.f32 %v2407, 0.003125
        %v2424 = vmul.f32 %v2412, 0.003125
        %v2425 = vmul.f32 %v2290, %v2290
        %v2426 = vmul.f32 %v2291, %v2291
        %v2427 = vmul.f32 %v2292, %v2292
        %v2428 = vmul.f32 %v2293, %v2293
        %v2429 = vmul.f32 %v2294, %v2294
        %v2430 = vmul.f32 %v2295, %v2295
        %v2431 = vmul.f32 %v2296, %v2296
        %v2432 = vmul.f32 %v2297, %v2297
        %v2433 = vmul.f32 %v2298, %v2298
        %v2434 = vmul.f32 %v2299, %v2299
        %v2435 = vsub.f32 %v2415, %v2425
        %v2436 = vsub.f32 %v2416, %v2426
        %v2437 = vsub.f32 %v2417, %v2427
        %v2438 = vsub.f32 %v2418, %v2428
        %v2439 = vsub.f32 %v2419, %v2429
        %v2440 = vsub.f32 %v2420, %v2430
        %v2441 = vsub.f32 %v2421, %v2431
        %v2442 = vsub.f32 %v2422, %v2432
        %v2443 = vsub.f32 %v2423, %v2433
        %v2444 = vsub.f32 %v2424, %v2434
        %v2445 = vadd.f32 %v2435, 1e-05
        %v2446 = vadd.f32 %v2436, 1e-05
        %v2447 = vadd.f32 %v2437, 1e-05
        %v2448 = vadd.f32 %v2438, 1e-05
        %v2449 = vadd.f32 %v2439, 1e-05
        %v2450 = vadd.f32 %v2440, 1e-05
        %v2451 = vadd.f32 %v2441, 1e-05
        %v2452 = vadd.f32 %v2442, 1e-05
        %v2453 = vadd.f32 %v2443, 1e-05
        %v2454 = vadd.f32 %v2444, 1e-05
        %v2455 = vrsqrt.pop %v2445
        %v2456 = vrsqrt.pop %v2446
        %v2457 = vrsqrt.pop %v2447
        %v2458 = vrsqrt.pop %v2448
        %v2459 = vrsqrt.pop %v2449
        %v2460 = vrsqrt.pop %v2450
        %v2461 = vrsqrt.pop %v2451
        %v2462 = vrsqrt.pop %v2452
        %v2463 = vrsqrt.pop %v2453
        %v2464 = vrsqrt.pop %v2454
        %2466 = vset.pattern.permute.xlu0 0
        %2467 = vperm.xlu0 %2466, %v2290
        %v2468 = vpop.permute.xlu0 %2467
        %2471 = vset.pattern.permute.xlu0 0
        %2472 = vperm.xlu0 %2471, %v2291
        %v2473 = vpop.permute.xlu0 %2472
        %2476 = vset.pattern.permute.xlu0 0
        %2477 = vperm.xlu0 %2476, %v2292
        %v2478 = vpop.permute.xlu0 %2477
        %2481 = vset.pattern.permute.xlu0 0
        %2482 = vperm.xlu0 %2481, %v2293
        %v2483 = vpop.permute.xlu0 %2482
        %2486 = vset.pattern.permute.xlu0 0
        %2487 = vperm.xlu0 %2486, %v2294
        %v2488 = vpop.permute.xlu0 %2487
        %2491 = vset.pattern.permute.xlu0 0
        %2492 = vperm.xlu0 %2491, %v2295
        %v2493 = vpop.permute.xlu0 %2492
        %2496 = vset.pattern.permute.xlu0 0
        %2497 = vperm.xlu0 %2496, %v2296
        %v2498 = vpop.permute.xlu0 %2497
        %2501 = vset.pattern.permute.xlu0 0
        %2502 = vperm.xlu0 %2501, %v2297
        %v2503 = vpop.permute.xlu0 %2502
        %2506 = vset.pattern.permute.xlu0 0
        %2507 = vperm.xlu0 %2506, %v2298
        %v2508 = vpop.permute.xlu0 %2507
        %2511 = vset.pattern.permute.xlu0 0
        %2512 = vperm.xlu0 %2511, %v2299
        %v2513 = vpop.permute.xlu0 %2512
        %v2515 = vsub.f32 %v2017, %v2468
        %v2516 = vsub.f32 %v2022, %v2473
        %v2517 = vsub.f32 %v2027, %v2478
        %v2518 = vsub.f32 %v2032, %v2483
        %v2519 = vsub.f32 %v2037, %v2488
        %v2520 = vsub.f32 %v2042, %v2493
        %v2521 = vsub.f32 %v2047, %v2498
        %v2522 = vsub.f32 %v2052, %v2503
        %v2523 = vsub.f32 %v2057, %v2508
        %v2524 = vsub.f32 %v2062, %v2513
        %2526 = vset.pattern.permute.xlu0 0
        %2527 = vperm.xlu0 %2526, %v2455
        %v2528 = vpop.permute.xlu0 %2527
        %2531 = vset.pattern.permute.xlu0 0
        %2532 = vperm.xlu0 %2531, %v2456
        %v2533 = vpop.permute.xlu0 %2532
        %2536 = vset.pattern.permute.xlu0 0
        %2537 = vperm.xlu0 %2536, %v2457
        %v2538 = vpop.permute.xlu0 %2537
        %2541 = vset.pattern.permute.xlu0 0
        %2542 = vperm.xlu0 %2541, %v2458
        %v2543 = vpop.permute.xlu0 %2542
        %2546 = vset.pattern.permute.xlu0 0
        %2547 = vperm.xlu0 %2546, %v2459
        %v2548 = vpop.permute.xlu0 %2547
        %2551 = vset.pattern.permute.xlu0 0
        %2552 = vperm.xlu0 %2551, %v2460
        %v2553 = vpop.permute.xlu0 %2552
        %2556 = vset.pattern.permute.xlu0 0
        %2557 = vperm.xlu0 %2556, %v2461
        %v2558 = vpop.permute.xlu0 %2557
        %2561 = vset.pattern.permute.xlu0 0
        %2562 = vperm.xlu0 %2561, %v2462
        %v2563 = vpop.permute.xlu0 %2562
        %2566 = vset.pattern.permute.xlu0 0
        %2567 = vperm.xlu0 %2566, %v2463
        %v2568 = vpop.permute.xlu0 %2567
        %2571 = vset.pattern.permute.xlu0 0
        %2572 = vperm.xlu0 %2571, %v2464
        %v2573 = vpop.permute.xlu0 %2572
        %v2575 = vmul.f32 %v2515, %v2528
        %v2576 = vmul.f32 %v2516, %v2533
        %v2577 = vmul.f32 %v2517, %v2538
        %v2578 = vmul.f32 %v2518, %v2543
        %v2579 = vmul.f32 %v2519, %v2548
        %v2580 = vmul.f32 %v2520, %v2553
        %v2581 = vmul.f32 %v2521, %v2558
        %v2582 = vmul.f32 %v2522, %v2563
        %v2583 = vmul.f32 %v2523, %v2568
        %v2584 = vmul.f32 %v2524, %v2573
        %v2585 = vld [vmem:[%s8] sm:$0xff]
        %v2586 = vld [vmem:[%s8 + $0x8] sm:$0xff]
        %v2587 = vld [vmem:[%s8 + $0x10] sm:$0xff]
        %v2588 = vld [vmem:[%s8 + $0x18] sm:$0xff]
        %v2589 = vld [vmem:[%s8 + $0x20] sm:$0xff]
        %v2590 = vld [vmem:[%s8 + $0x28] sm:$0xff]
        %v2591 = vld [vmem:[%s8 + $0x30] sm:$0xff]
        %v2592 = vld [vmem:[%s8 + $0x38] sm:$0xff]
        %v2593 = vld [vmem:[%s8 + $0x40] sm:$0xff]
        %v2594 = vld [vmem:[%s8 + $0x48] sm:$0xff]
        %2596 = vset.pattern.permute.xlu0 0
        %2597 = vperm.xlu0 %2596, %v2585
        %v2598 = vpop.permute.xlu0 %2597
        %2601 = vset.pattern.permute.xlu0 0
        %2602 = vperm.xlu0 %2601, %v2586
        %v2603 = vpop.permute.xlu0 %2602
        %2606 = vset.pattern.permute.xlu0 0
        %2607 = vperm.xlu0 %2606, %v2587
        %v2608 = vpop.permute.xlu0 %2607
        %2611 = vset.pattern.permute.xlu0 0
        %2612 = vperm.xlu0 %2611, %v2588
        %v2613 = vpop.permute.xlu0 %2612
        %2616 = vset.pattern.permute.xlu0 0
        %2617 = vperm.xlu0 %2616, %v2589
        %v2618 = vpop.permute.xlu0 %2617
        %2621 = vset.pattern.permute.xlu0 0
        %2622 = vperm.xlu0 %2621, %v2590
        %v2623 = vpop.permute.xlu0 %2622
        %2626 = vset.pattern.permute.xlu0 0
        %2627 = vperm.xlu0 %2626, %v2591
        %v2628 = vpop.permute.xlu0 %2627
        %2631 = vset.pattern.permute.xlu0 0
        %2632 = vperm.xlu0 %2631, %v2592
        %v2633 = vpop.permute.xlu0 %2632
        %2636 = vset.pattern.permute.xlu0 0
        %2637 = vperm.xlu0 %2636, %v2593
        %v2638 = vpop.permute.xlu0 %2637
        %2641 = vset.pattern.permute.xlu0 0
        %2642 = vperm.xlu0 %2641, %v2594
        %v2643 = vpop.permute.xlu0 %2642
        %v2645 = vmul.f32 %v2575, %v2598
        %v2646 = vmul.f32 %v2576, %v2603
        %v2647 = vmul.f32 %v2577, %v2608
        %v2648 = vmul.f32 %v2578, %v2613
        %v2649 = vmul.f32 %v2579, %v2618
        %v2650 = vmul.f32 %v2580, %v2623
        %v2651 = vmul.f32 %v2581, %v2628
        %v2652 = vmul.f32 %v2582, %v2633
        %v2653 = vmul.f32 %v2583, %v2638
        %v2654 = vmul.f32 %v2584, %v2643
        %v2655 = vld [vmem:[%s9] sm:$0xff]
        %v2656 = vld [vmem:[%s9 + $0x8] sm:$0xff]
        %v2657 = vld [vmem:[%s9 + $0x10] sm:$0xff]
        %v2658 = vld [vmem:[%s9 + $0x18] sm:$0xff]
        %v2659 = vld [vmem:[%s9 + $0x20] sm:$0xff]
        %v2660 = vld [vmem:[%s9 + $0x28] sm:$0xff]
        %v2661 = vld [vmem:[%s9 + $0x30] sm:$0xff]
        %v2662 = vld [vmem:[%s9 + $0x38] sm:$0xff]
        %v2663 = vld [vmem:[%s9 + $0x40] sm:$0xff]
        %v2664 = vld [vmem:[%s9 + $0x48] sm:$0xff]
        %2666 = vset.pattern.permute.xlu0 0
        %2667 = vperm.xlu0 %2666, %v2655
        %v2668 = vpop.permute.xlu0 %2667
        %2671 = vset.pattern.permute.xlu0 0
        %2672 = vperm.xlu0 %2671, %v2656
        %v2673 = vpop.permute.xlu0 %2672
        %2676 = vset.pattern.permute.xlu0 0
        %2677 = vperm.xlu0 %2676, %v2657
        %v2678 = vpop.permute.xlu0 %2677
        %2681 = vset.pattern.permute.xlu0 0
        %2682 = vperm.xlu0 %2681, %v2658
        %v2683 = vpop.permute.xlu0 %2682
        %2686 = vset.pattern.permute.xlu0 0
        %2687 = vperm.xlu0 %2686, %v2659
        %v2688 = vpop.permute.xlu0 %2687
        %2691 = vset.pattern.permute.xlu0 0
        %2692 = vperm.xlu0 %2691, %v2660
        %v2693 = vpop.permute.xlu0 %2692
        %2696 = vset.pattern.permute.xlu0 0
        %2697 = vperm.xlu0 %2696, %v2661
        %v2698 = vpop.permute.xlu0 %2697
        %2701 = vset.pattern.permute.xlu0 0
        %2702 = vperm.xlu0 %2701, %v2662
        %v2703 = vpop.permute.xlu0 %2702
        %2706 = vset.pattern.permute.xlu0 0
        %2707 = vperm.xlu0 %2706, %v2663
        %v2708 = vpop.permute.xlu0 %2707
        %2711 = vset.pattern.permute.xlu0 0
        %2712 = vperm.xlu0 %2711, %v2664
        %v2713 = vpop.permute.xlu0 %2712
        %v2715 = vadd.f32 %v2645, %v2668
        %v2716 = vadd.f32 %v2646, %v2673
        %v2717 = vadd.f32 %v2647, %v2678
        %v2718 = vadd.f32 %v2648, %v2683
        %v2719 = vadd.f32 %v2649, %v2688
        %v2720 = vadd.f32 %v2650, %v2693
        %v2721 = vadd.f32 %v2651, %v2698
        %v2722 = vadd.f32 %v2652, %v2703
        %v2723 = vadd.f32 %v2653, %v2708
        %v2724 = vadd.f32 %v2654, %v2713
        %2725 = vst.msk [vmem:[%s456] sm:$0xff] %vm493, %v2715
        %2726 = vst.msk [vmem:[%s456 + $0x8] sm:$0xff] %vm493, %v2716
        %2727 = vst.msk [vmem:[%s456 + $0x10] sm:$0xff] %vm493, %v2717
        %2728 = vst.msk [vmem:[%s456 + $0x18] sm:$0xff] %vm493, %v2718
        %2729 = vst.msk [vmem:[%s456 + $0x20] sm:$0xff] %vm493, %v2719
        %2730 = vst.msk [vmem:[%s456 + $0x28] sm:$0xff] %vm493, %v2720
        %2731 = vst.msk [vmem:[%s456 + $0x30] sm:$0xff] %vm493, %v2721
        %2732 = vst.msk [vmem:[%s456 + $0x38] sm:$0xff] %vm493, %v2722
        %2733 = vst.msk [vmem:[%s456 + $0x40] sm:$0xff] %vm493, %v2723
        %2734 = vst.msk [vmem:[%s456 + $0x48] sm:$0xff] %vm493, %v2724
        %s2735 = smul.u32 10, %s25
        %p2736 = scmp.lt.s32.totalorder %s2735, 29
        %s2737 = scalar_select %p2736, %s2735, 29
        %s2738 = smul.addr %s2737, 8
        %s2739 = scalar_lea.vmem %s13, %s2738
        // Predicated region
        $region81: #{tpu_custom_call.1} parent=71 // pred_check
          %p2740 = pneg %p321
        $region82: #{tpu_custom_call.1} parent=71 // pred_check_branch
          %2742 = sbr.rel (%p2740) target = $region84
        $region83: #{tpu_custom_call.1} parent=71 // pred_region
          %s2743 = smul.u32 10, %s25
        $region84: #{tpu_custom_call.1} parent=71 // pred_fallthru
          _
      $region72: #{tpu_custom_call.1} parent=5 // pred_fallthru
        _
      %p2744 = scmp.le.s32.totalorder 2, %s20
      // Predicated region
      $region85: #{tpu_custom_call.1} parent=5 // pred_check
        %p2745 = pneg %p2744
      $region86: #{tpu_custom_call.1} parent=5 // pred_check_branch
        %2747 = sbr.rel (%p2745) target = $region88
      $region87: #{tpu_custom_call.1} parent=5 // pred_region
        %s2748 = ssub.s32 %s20, 2
        // Predicated region
        $region89: #{tpu_custom_call.1} parent=87 // pred_check
          %p2749 = pneg %p327
        $region90: #{tpu_custom_call.1} parent=87 // pred_check_branch
          %2751 = sbr.rel (%p2749) target = $region92
        $region91: #{tpu_custom_call.1} parent=87 // pred_region
          %s2752 = smul.u32 10, %s26
          %p2753 = scmp.lt.s32.totalorder %s2752, 29
          %s2754 = scalar_select %p2753, %s2752, 29
          %s2755 = smul.addr %s2754, 8
          %s2756 = scalar_lea.vmem %s13, %s2755
        $region92: #{tpu_custom_call.1} parent=87 // pred_fallthru
          _
      $region88: #{tpu_custom_call.1} parent=5 // pred_fallthru
        _
    $region6: #{tpu_custom_call.1} parent=1 // loop_footer
      %s24 = sadd.s32 1, %s20
    $region7: #{tpu_custom_call.1} parent=1 // loop_footer_branch
      %19 = sbr.rel target = $region3
    $region8: #{tpu_custom_call.1} parent=1 // loop_exit
      _
    %2757 = vsyncpa [#allocation7], 1
    %s2758 = scalar_lea.sflag [#allocation7], 1
    %2759 = vsyncpa %s2758, 1

</llo_original>
